<compile_context>
chip_gen: v7x
topology: tpu7x:2x2x1
jax: 0.10.0
libtpu: 0.0.40
codegen_flags: <defaults>
</compile_context>

<pallas_src>
import math

import jax
import jax.numpy as jnp
from jax.experimental import pallas as pl
from jax.experimental.pallas import tpu as pltpu


def _round_up(x, m):
    return ((x + m - 1) // m) * m


def _vmem_capacity_bytes():
    try:
        return int(pltpu.get_tpu_info().vmem_capacity_bytes)
    except Exception:
        return 64 * 2**20  # conservative (v7x-sized) fallback


def _pick_tile_tokens(hw, w, cin, cout_pad, in_item, out_item, n_batch,
                      vmem_cap, packed):
    """Largest whole-row token tile (multiple of lcm(W, 8), dividing H*W) whose
    per-step footprint fits ~45% of this chip's VMEM; when N == 1 the image is
    split into >= 2 tiles so both v7x TensorCores get grid steps."""
    unit = (w * 8) // math.gcd(w, 8)
    if hw % unit != 0:
        return hw                                     # whole image per step
    per_tok = (2 * cin * in_item                      # double-buffered body
               + 2 * cout_pad * out_item              # double-buffered output
               + cin * in_item                        # slab scratch
               + (9 * cin * in_item if packed else 0)  # packed LHS temp
               + cout_pad * 4)                        # f32 accumulator
    fixed = (2 * 9 * cin * cout_pad * in_item         # weights (double-buffered)
             + 2 * cout_pad * 4                       # bias
             + 2 * 2 * w * cin * in_item              # row halos (double-buffered)
             + (2 * w + 2) * cin * in_item)           # slab halo part
    budget = int(0.45 * vmem_cap)
    cap = max(unit, (budget - fixed) // max(per_tok, 1))
    if n_batch == 1:
        cap = min(cap, max(unit, hw // 2))            # >= 2 tiles for megacore
    best = None
    t = unit
    while t <= hw and t <= cap:
        if hw % t == 0:
            best = t
        t += unit
    return best if best is not None else unit


def concat_table_forward(x_nchw, w3, b3, w1, b1, *,
                         tile_tokens=None,
                         compute_dtype=jnp.bfloat16,
                         out_dtype=None):
    """ConcatTable(conv3x3(pad=1), conv1x1) forward.

    x_nchw: (N, Cin, H, W); w3: (Cout1, Cin, 3, 3); w1: (Cout2, Cin, 1, 1).
    Returns [out1_nchw, out2_nchw] exactly like the PyTorch module.
    """
    N, Cin, H, W = x_nchw.shape
    Cout1 = w3.shape[0]
    Cout2 = w1.shape[0]
    HW = H * W
    out_dtype = x_nchw.dtype if out_dtype is None else out_dtype
    in_item = jnp.dtype(compute_dtype).itemsize
    out_item = jnp.dtype(out_dtype).itemsize

    cout_tot = Cout1 + Cout2
    cout_pad = max(128, _round_up(cout_tot, 128))      # lane-dense fused width
    cout1_pad = max(128, _round_up(Cout1, 128))        # off-centre tap width

    use_packed = Cin <= 128
    vmem_cap = _vmem_capacity_bytes()

    if tile_tokens is None:
        tile = _pick_tile_tokens(HW, W, Cin, cout_pad, in_item, out_item, N,
                                 vmem_cap, use_packed)
    else:
        tile = tile_tokens
    assert HW % tile == 0 and tile % W == 0, (tile, HW, W)
    assert tile % 8 == 0 or tile == HW, tile
    num_tiles = HW // tile
    rows_per_tile = tile // W
    slab_len = tile + 2 * W + 2          # corner + row above + body + row below + corner

    # ---------------- host-side layout (O(|x|), no per-tile stacking) --------
    x_nhwc = jnp.transpose(x_nchw, (0, 2, 3, 1)).astype(compute_dtype)  # (N,H,W,C)
    x_tok = x_nhwc.reshape(N, HW, Cin)                                  # body tokens
    zrow = jnp.zeros((N, 1, W, Cin), compute_dtype)
    # Halo row above / below each row tile (zeros at the image border).
    top_rows = jnp.concatenate([zrow, x_nhwc], axis=1)[:, 0:H:rows_per_tile]
    bot_rows = jnp.concatenate([x_nhwc, zrow], axis=1)[:, rows_per_tile::rows_per_tile]
    # top_rows / bot_rows: (N, num_tiles, W, Cin)

    # Fused weights: 3x3 branch in output columns [:Cout1]; 1x1 branch in the
    # centre tap's (kh=kw=1 -> tap 4) columns [Cout1:cout_tot].
    w3_taps = jnp.transpose(w3, (2, 3, 1, 0)).reshape(9, Cin, Cout1)
    w1_mat = jnp.transpose(w1[:, :, 0, 0], (1, 0))                      # (Cin, Cout2)
    w_comb = jnp.zeros((9, Cin, cout_pad), jnp.float32)
    w_comb = w_comb.at[:, :, :Cout1].set(w3_taps.astype(jnp.float32))
    w_comb = w_comb.at[4, :, Cout1:cout_tot].set(w1_mat.astype(jnp.float32))
    w_comb = w_comb.astype(compute_dtype)

    b_comb = jnp.zeros((1, cout_pad), jnp.float32)
    b_comb = b_comb.at[0, :Cout1].set(b3.astype(jnp.float32))
    b_comb = b_comb.at[0, Cout1:cout_tot].set(b1.astype(jnp.float32))

    # --------------------------------- kernel --------------------------------
    def make_kernel(packed):
        def kernel(x_ref, top_ref, bot_ref, w_ref, b_ref, o_ref, slab_ref):
            # Assemble the halo'd token slab:
            #   [corner, row above (W), body (tile), row below (W), corner]
            # Corner tokens only feed fully-masked taps; zero them for hygiene.
            zero_tok = jnp.zeros((1, Cin), compute_dtype)
            slab_ref[pl.ds(0, 1), :] = zero_tok
            slab_ref[pl.ds(1, W), :] = top_ref[...]
            slab_ref[pl.ds(1 + W, tile), :] = x_ref[...]
            slab_ref[pl.ds(1 + W + tile, W), :] = bot_ref[...]
            slab_ref[pl.ds(slab_len - 1, 1), :] = zero_tok

            # Left/right image-border masks, hoisted once and applied to the
            # small (tile, Cin) matmul INPUT (not the f32 result).
            col = jax.lax.broadcasted_iota(jnp.int32, (tile, 1), 0) % W
            mask_l = jnp.broadcast_to(col != 0, (tile, Cin))
            mask_r = jnp.broadcast_to(col != W - 1, (tile, Cin))

            def tap_view(dh, dw):
                v = slab_ref[pl.ds(dh * W + dw, tile), :]
                if dw == 0:
                    v = jnp.where(mask_l, v, 0)
                elif dw == 2:
                    v = jnp.where(mask_r, v, 0)
                return v.astype(compute_dtype)

            if packed:
                # Small-Cin path: taps packed along K -> one MXU matmul, K=9*Cin.
                lhs = jnp.concatenate(
                    [tap_view(dh, dw) for dh in range(3) for dw in range(3)],
                    axis=1)                                     # (tile, 9*Cin)
                acc = jnp.dot(lhs, w_ref[...],
                              preferred_element_type=jnp.float32)
                o_ref[...] = (acc + b_ref[...]).astype(o_ref.dtype)
            else:
                # Large-Cin path: 9-tap accumulation; off-centre taps only
                # multiply the (128-padded) 3x3 output columns.
                acc3 = jnp.zeros((tile, cout1_pad), jnp.float32)
                acc_c = None
                for dh in range(3):
                    for dw in range(3):
                        v = tap_view(dh, dw)
                        if (dh, dw) == (1, 1):
                            acc_c = jnp.dot(v, w_ref[4],
                                            preferred_element_type=jnp.float32)
                        else:
                            acc3 = acc3 + jnp.dot(
                                v, w_ref[3 * dh + dw][:, :cout1_pad],
                                preferred_element_type=jnp.float32)
                bias = b_ref[...]
                if cout1_pad < cout_pad:
                    o_ref[:, :cout1_pad] = (
                        acc_c[:, :cout1_pad] + acc3 + bias[:, :cout1_pad]
                    ).astype(o_ref.dtype)
                    o_ref[:, cout1_pad:] = (
                        acc_c[:, cout1_pad:] + bias[:, cout1_pad:]
                    ).astype(o_ref.dtype)
                else:
                    o_ref[...] = (acc_c + acc3 + bias).astype(o_ref.dtype)

        return kernel

    # ---------------------------- pallas_call builder -------------------------
    def run(packed):
        if packed:
            w_in = w_comb.reshape(9 * Cin, cout_pad)
            w_spec = pl.BlockSpec((9 * Cin, cout_pad), lambda n, i: (0, 0))
        else:
            w_in = w_comb
            w_spec = pl.BlockSpec((9, Cin, cout_pad), lambda n, i: (0, 0, 0))

        flops = 2 * N * HW * Cin * (9 * cout_pad if packed
                                    else (8 * cout1_pad + cout_pad))
        bytes_accessed = (x_tok.size * in_item
                          + (top_rows.size + bot_rows.size) * in_item
                          + w_in.size * in_item + b_comb.size * 4
                          + N * HW * cout_pad * out_item)

        per_step = (2 * tile * Cin * in_item            # body (double-buffered)
                    + 2 * 2 * W * Cin * in_item         # row halos
                    + 2 * w_in.size * in_item           # weights
                    + 2 * cout_pad * 4                  # bias
                    + 2 * tile * cout_pad * out_item    # output (double-buffered)
                    + slab_len * Cin * in_item          # slab scratch
                    + (tile * 9 * Cin * in_item if packed else 0)  # packed LHS
                    + tile * cout_pad * 4)              # f32 accumulator
        vmem_limit = int(min(int(0.9 * vmem_cap),
                             max(8 * 2**20, 2 * per_step)))

        return pl.pallas_call(
            make_kernel(packed),
            out_shape=jax.ShapeDtypeStruct((N, HW, cout_pad), out_dtype),
            grid_spec=pltpu.PrefetchScalarGridSpec(
                num_scalar_prefetch=0,
                grid=(N, num_tiles),
                in_specs=[
                    pl.BlockSpec((None, tile, Cin), lambda n, i: (n, i, 0)),
                    pl.BlockSpec((None, None, W, Cin), lambda n, i: (n, i, 0, 0)),
                    pl.BlockSpec((None, None, W, Cin), lambda n, i: (n, i, 0, 0)),
                    w_spec,
                    pl.BlockSpec((1, cout_pad), lambda n, i: (0, 0)),
                ],
                out_specs=pl.BlockSpec((None, tile, cout_pad),
                                       lambda n, i: (n, i, 0)),
                scratch_shapes=[pltpu.VMEM((slab_len, Cin), compute_dtype)],
            ),
            compiler_params=pltpu.CompilerParams(
                dimension_semantics=("parallel", "parallel"),
                vmem_limit_bytes=vmem_limit),
            cost_estimate=pl.CostEstimate(
                flops=flops, transcendentals=0, bytes_accessed=bytes_accessed),
        )(x_tok, top_rows, bot_rows, w_in, b_comb)

    if use_packed:
        try:
            out_pad = run(packed=True)
            jax.block_until_ready(out_pad)
        except Exception:
            # Lowering-compat fallback: the 9-tap loop path is numerically
            # identical, just less MXU-efficient for small Cin.
            out_pad = run(packed=False)
    else:
        out_pad = run(packed=False)

    # Split the fused lane-dense slab back into the two branch outputs (NCHW).
    out_nhwc = out_pad.reshape(N, H, W, cout_pad)
    out1 = jnp.transpose(out_nhwc[..., :Cout1], (0, 3, 1, 2)).astype(out_dtype)
    out2 = jnp.transpose(out_nhwc[..., Cout1:cout_tot], (0, 3, 1, 2)).astype(out_dtype)
    return [out1, out2]


if __name__ == "__main__":
    key = jax.random.PRNGKey(0)
    kx, kw3, kb3, kw1, kb1 = jax.random.split(key, 5)

    N, Cin, H, W = 2, 4, 16, 16
    Cout1, Cout2 = 8, 8

    x = jax.random.normal(kx, (N, Cin, H, W), jnp.float32)
    # Deterministic synthetic parameters (PyTorch Conv2d weight layout OIHW).
    w3 = jax.random.normal(kw3, (Cout1, Cin, 3, 3), jnp.float32) * 0.1
    b3 = jax.random.normal(kb3, (Cout1,), jnp.float32) * 0.1
    w1 = jax.random.normal(kw1, (Cout2, Cin, 1, 1), jnp.float32) * 0.1
    b1 = jax.random.normal(kb1, (Cout2,), jnp.float32) * 0.1

    # tile_tokens=128 -> 2 row-tiles per image: exercises the cross-tile halo.
    out1, out2 = concat_table_forward(x, w3, b3, w1, b1, tile_tokens=128)
    jax.block_until_ready(out1)
    jax.block_until_ready(out2)

    # Reference: XLA convs at full f32 precision on the same bf16-quantized
    # activations/weights the kernel consumes (bf16 products are exact in f32).
    xq = x.astype(jnp.bfloat16).astype(jnp.float32)
    w3q = w3.astype(jnp.bfloat16).astype(jnp.float32)
    w1q = w1.astype(jnp.bfloat16).astype(jnp.float32)
    ref1 = jax.lax.conv_general_dilated(
        xq, w3q, (1, 1), ((1, 1), (1, 1)),
        dimension_numbers=("NCHW", "OIHW", "NCHW"),
        precision=jax.lax.Precision.HIGHEST) + b3[None, :, None, None]
    ref2 = jax.lax.conv_general_dilated(
        xq, w1q, (1, 1), "VALID",
        dimension_numbers=("NCHW", "OIHW", "NCHW"),
        precision=jax.lax.Precision.HIGHEST) + b1[None, :, None, None]

    assert out1.shape == ref1.shape and out2.shape == ref2.shape
    assert jnp.allclose(out1, ref1, rtol=2e-3, atol=2e-3), \
        float(jnp.max(jnp.abs(out1 - ref1)))
    assert jnp.allclose(out2, ref2, rtol=2e-3, atol=2e-3), \
        float(jnp.max(jnp.abs(out2 - ref2)))

    print("KERNEL_OK")
</pallas_src>

<mosaic_0001>
module attributes {stable_mosaic.version = 11 : i64} {
  func.func @kernel(%arg0: i32, %arg1: i32, %arg2: memref<1x128x4xbf16, #tpu.memory_space<vmem>>, %arg3: memref<1x1x16x4xbf16, #tpu.memory_space<vmem>>, %arg4: memref<1x1x16x4xbf16, #tpu.memory_space<vmem>>, %arg5: memref<36x128xbf16, #tpu.memory_space<vmem>>, %arg6: memref<1x128xf32, #tpu.memory_space<vmem>>, %arg7: memref<1x128x128xf32, #tpu.memory_space<vmem>>, %arg8: memref<162x4xbf16, #tpu.memory_space<vmem>>) attributes {dimension_semantics = [#tpu.dimension_semantics<parallel>, #tpu.dimension_semantics<parallel>], iteration_bounds = array<i64: 2, 2>, scalar_prefetch = 0 : i64, scratch_operands = 1 : i64, tpu.core_type = #tpu.core_type<tc>, window_params = [{transform_indices = @transform_0, window_bounds = array<i64: 1, 128, 4>}, {transform_indices = @transform_1, window_bounds = array<i64: 1, 1, 16, 4>}, {transform_indices = @transform_2, window_bounds = array<i64: 1, 1, 16, 4>}, {pipeline_mode = #tpu.pipeline_mode<synchronous>, transform_indices = @transform_3, window_bounds = array<i64: 36, 128>}, {pipeline_mode = #tpu.pipeline_mode<synchronous>, transform_indices = @transform_4, window_bounds = array<i64: 1, 128>}, {transform_indices = @transform_5, window_bounds = array<i64: 1, 128, 128>}]} {
    %cst = arith.constant 0.000000e+00 : bf16
    %0 = vector.broadcast %cst : bf16 to vector<1x4xbf16>
    %c0 = arith.constant 0 : index
    %c0_0 = arith.constant 0 : index
    %1 = vector.load %arg8[%c0, %c0_0] : memref<162x4xbf16, #tpu.memory_space<vmem>>, vector<1x4xbf16>
    tpu.vector_store %arg8[%c0, %c0_0], %0 {strides = array<i32>} : memref<162x4xbf16, #tpu.memory_space<vmem>>, vector<1x4xbf16>,
    %c0_1 = arith.constant 0 : index
    %c0_2 = arith.constant 0 : index
    %c0_3 = arith.constant 0 : index
    %c0_4 = arith.constant 0 : index
    %2 = vector.load %arg3[%c0_1, %c0_2, %c0_3, %c0_4] : memref<1x1x16x4xbf16, #tpu.memory_space<vmem>>, vector<1x1x16x4xbf16>
    %3 = vector.shape_cast %2 : vector<1x1x16x4xbf16> to vector<16x4xbf16>
    %c1 = arith.constant 1 : index
    %c0_5 = arith.constant 0 : index
    %4 = vector.load %arg8[%c1, %c0_5] : memref<162x4xbf16, #tpu.memory_space<vmem>>, vector<16x4xbf16>
    tpu.vector_store %arg8[%c1, %c0_5], %3 {strides = array<i32>} : memref<162x4xbf16, #tpu.memory_space<vmem>>, vector<16x4xbf16>,
    %c0_6 = arith.constant 0 : index
    %c0_7 = arith.constant 0 : index
    %c0_8 = arith.constant 0 : index
    %5 = vector.load %arg2[%c0_6, %c0_7, %c0_8] : memref<1x128x4xbf16, #tpu.memory_space<vmem>>, vector<1x128x4xbf16>
    %6 = vector.shape_cast %5 : vector<1x128x4xbf16> to vector<128x4xbf16>
    %c17 = arith.constant 17 : index
    %c0_9 = arith.constant 0 : index
    %7 = vector.load %arg8[%c17, %c0_9] : memref<162x4xbf16, #tpu.memory_space<vmem>>, vector<128x4xbf16>
    tpu.vector_store %arg8[%c17, %c0_9], %6 {strides = array<i32>} : memref<162x4xbf16, #tpu.memory_space<vmem>>, vector<128x4xbf16>,
    %c0_10 = arith.constant 0 : index
    %c0_11 = arith.constant 0 : index
    %c0_12 = arith.constant 0 : index
    %c0_13 = arith.constant 0 : index
    %8 = vector.load %arg4[%c0_10, %c0_11, %c0_12, %c0_13] : memref<1x1x16x4xbf16, #tpu.memory_space<vmem>>, vector<1x1x16x4xbf16>
    %9 = vector.shape_cast %8 : vector<1x1x16x4xbf16> to vector<16x4xbf16>
    %c145 = arith.constant 145 : index
    %c0_14 = arith.constant 0 : index
    %10 = vector.load %arg8[%c145, %c0_14] : memref<162x4xbf16, #tpu.memory_space<vmem>>, vector<16x4xbf16>
    tpu.vector_store %arg8[%c145, %c0_14], %9 {strides = array<i32>} : memref<162x4xbf16, #tpu.memory_space<vmem>>, vector<16x4xbf16>,
    %c161 = arith.constant 161 : index
    %c0_15 = arith.constant 0 : index
    %11 = vector.load %arg8[%c161, %c0_15] : memref<162x4xbf16, #tpu.memory_space<vmem>>, vector<1x4xbf16>
    tpu.vector_store %arg8[%c161, %c0_15], %0 {strides = array<i32>} : memref<162x4xbf16, #tpu.memory_space<vmem>>, vector<1x4xbf16>,
    %12 = tpu.iota {dimensions = array<i32: 0>} : vector<128x1xi32>
    %c16_i32 = arith.constant 16 : i32
    %c0_i32 = arith.constant 0 : i32
    %13 = arith.cmpi eq, %c16_i32, %c0_i32 : i32
    %c1_i32 = arith.constant 1 : i32
    %14 = arith.select %13, %c1_i32, %c16_i32 : i32
    %15 = vector.broadcast %14 : i32 to vector<128x1xi32>
    %16 = arith.remsi %12, %15 : vector<128x1xi32>
    %c0_i32_16 = arith.constant 0 : i32
    %17 = vector.broadcast %c0_i32_16 : i32 to vector<128x1xi32>
    %18 = arith.cmpi ne, %16, %17 : vector<128x1xi32>
    %c0_i32_17 = arith.constant 0 : i32
    %19 = vector.broadcast %c0_i32_17 : i32 to vector<128x1xi32>
    %20 = arith.cmpi slt, %16, %19 : vector<128x1xi32>
    %c0_i32_18 = arith.constant 0 : i32
    %21 = arith.cmpi slt, %14, %c0_i32_18 : i32
    %22 = vector.broadcast %21 : i1 to vector<128x1xi1>
    %23 = vector.broadcast %22 : vector<128x1xi1> to vector<128x1xi1>
    %24 = arith.xori %20, %23 : vector<128x1xi1>
    %25 = arith.andi %24, %18 : vector<128x1xi1>
    %26 = vector.broadcast %14 : i32 to vector<128x1xi32>
    %27 = arith.addi %16, %26 : vector<128x1xi32>
    %28 = arith.select %25, %27, %16 : vector<128x1xi1>, vector<128x1xi32>
    %c0_i32_19 = arith.constant 0 : i32
    %29 = vector.broadcast %c0_i32_19 : i32 to vector<128x1xi32>
    %30 = arith.cmpi ne, %28, %29 : vector<128x1xi32>
    %31 = vector.shape_cast %30 : vector<128x1xi1> to vector<128x1xi1>
    %32 = vector.broadcast %31 : vector<128x1xi1> to vector<128x4xi1>
    %c15_i32 = arith.constant 15 : i32
    %33 = vector.broadcast %c15_i32 : i32 to vector<128x1xi32>
    %34 = arith.cmpi ne, %28, %33 : vector<128x1xi32>
    %35 = vector.shape_cast %34 : vector<128x1xi1> to vector<128x1xi1>
    %36 = vector.broadcast %35 : vector<128x1xi1> to vector<128x4xi1>
    %c0_20 = arith.constant 0 : index
    %c0_21 = arith.constant 0 : index
    %37 = vector.load %arg8[%c0_20, %c0_21] : memref<162x4xbf16, #tpu.memory_space<vmem>>, vector<128x4xbf16>
    %c0_i32_22 = arith.constant 0 : i32
    %38 = arith.sitofp %c0_i32_22 : i32 to bf16
    %39 = vector.broadcast %38 : bf16 to vector<128x4xbf16>
    %40 = arith.select %32, %37, %39 : vector<128x4xi1>, vector<128x4xbf16>
    %c1_23 = arith.constant 1 : index
    %c0_24 = arith.constant 0 : index
    %41 = vector.load %arg8[%c1_23, %c0_24] : memref<162x4xbf16, #tpu.memory_space<vmem>>, vector<128x4xbf16>
    %c2 = arith.constant 2 : index
    %c0_25 = arith.constant 0 : index
    %42 = vector.load %arg8[%c2, %c0_25] : memref<162x4xbf16, #tpu.memory_space<vmem>>, vector<128x4xbf16>
    %c0_i32_26 = arith.constant 0 : i32
    %43 = arith.sitofp %c0_i32_26 : i32 to bf16
    %44 = vector.broadcast %43 : bf16 to vector<128x4xbf16>
    %45 = arith.select %36, %42, %44 : vector<128x4xi1>, vector<128x4xbf16>
    %c16 = arith.constant 16 : index
    %c0_27 = arith.constant 0 : index
    %46 = vector.load %arg8[%c16, %c0_27] : memref<162x4xbf16, #tpu.memory_space<vmem>>, vector<128x4xbf16>
    %c0_i32_28 = arith.constant 0 : i32
    %47 = arith.sitofp %c0_i32_28 : i32 to bf16
    %48 = vector.broadcast %47 : bf16 to vector<128x4xbf16>
    %49 = arith.select %32, %46, %48 : vector<128x4xi1>, vector<128x4xbf16>
    %c17_29 = arith.constant 17 : index
    %c0_30 = arith.constant 0 : index
    %50 = vector.load %arg8[%c17_29, %c0_30] : memref<162x4xbf16, #tpu.memory_space<vmem>>, vector<128x4xbf16>
    %c18 = arith.constant 18 : index
    %c0_31 = arith.constant 0 : index
    %51 = vector.load %arg8[%c18, %c0_31] : memref<162x4xbf16, #tpu.memory_space<vmem>>, vector<128x4xbf16>
    %c0_i32_32 = arith.constant 0 : i32
    %52 = arith.sitofp %c0_i32_32 : i32 to bf16
    %53 = vector.broadcast %52 : bf16 to vector<128x4xbf16>
    %54 = arith.select %36, %51, %53 : vector<128x4xi1>, vector<128x4xbf16>
    %c32 = arith.constant 32 : index
    %c0_33 = arith.constant 0 : index
    %55 = vector.load %arg8[%c32, %c0_33] : memref<162x4xbf16, #tpu.memory_space<vmem>>, vector<128x4xbf16>
    %c0_i32_34 = arith.constant 0 : i32
    %56 = arith.sitofp %c0_i32_34 : i32 to bf16
    %57 = vector.broadcast %56 : bf16 to vector<128x4xbf16>
    %58 = arith.select %32, %55, %57 : vector<128x4xi1>, vector<128x4xbf16>
    %c33 = arith.constant 33 : index
    %c0_35 = arith.constant 0 : index
    %59 = vector.load %arg8[%c33, %c0_35] : memref<162x4xbf16, #tpu.memory_space<vmem>>, vector<128x4xbf16>
    %c34 = arith.constant 34 : index
    %c0_36 = arith.constant 0 : index
    %60 = vector.load %arg8[%c34, %c0_36] : memref<162x4xbf16, #tpu.memory_space<vmem>>, vector<128x4xbf16>
    %c0_i32_37 = arith.constant 0 : i32
    %61 = arith.sitofp %c0_i32_37 : i32 to bf16
    %62 = vector.broadcast %61 : bf16 to vector<128x4xbf16>
    %63 = arith.select %36, %60, %62 : vector<128x4xi1>, vector<128x4xbf16>
    %64 = tpu.concatenate %40, %41, %45, %49, %50, %54, %58, %59, %63 in 1 : vector<128x4xbf16>, vector<128x4xbf16>, vector<128x4xbf16>, vector<128x4xbf16>, vector<128x4xbf16>, vector<128x4xbf16>, vector<128x4xbf16>, vector<128x4xbf16>, vector<128x4xbf16> -> vector<128x36xbf16>
    %c0_38 = arith.constant 0 : index
    %c0_39 = arith.constant 0 : index
    %65 = vector.load %arg5[%c0_38, %c0_39] : memref<36x128xbf16, #tpu.memory_space<vmem>>, vector<36x128xbf16>
    %cst_40 = arith.constant dense<0.000000e+00> : vector<128x128xf32>
    %66 = tpu.matmul %64, %65, %cst_40 {dimension_numbers = #tpu.dot_dimension_numbers<[1], [0], [0], [1], [0, 0, 1, 1], [], []>} : vector<128x36xbf16>, vector<36x128xbf16>, vector<128x128xf32> -> vector<128x128xf32>
    %c0_41 = arith.constant 0 : index
    %c0_42 = arith.constant 0 : index
    %67 = vector.load %arg6[%c0_41, %c0_42] : memref<1x128xf32, #tpu.memory_space<vmem>>, vector<1x128xf32>
    %68 = vector.broadcast %67 : vector<1x128xf32> to vector<128x128xf32>
    %69 = arith.addf %66, %68 : vector<128x128xf32>
    %c0_43 = arith.constant 0 : index
    %c0_44 = arith.constant 0 : index
    %c0_45 = arith.constant 0 : index
    %70 = vector.load %arg7[%c0_43, %c0_44, %c0_45] : memref<1x128x128xf32, #tpu.memory_space<vmem>>, vector<1x128x128xf32>
    %71 = vector.shape_cast %70 : vector<1x128x128xf32> to vector<128x128xf32>
    %72 = vector.shape_cast %69 : vector<128x128xf32> to vector<1x128x128xf32>
    tpu.vector_store %arg7[%c0_43, %c0_44, %c0_45], %72 {strides = array<i32>} : memref<1x128x128xf32, #tpu.memory_space<vmem>>, vector<1x128x128xf32>,
    return
  }
  func.func @transform_0(%arg0: i32, %arg1: i32) -> (i32, i32, i32) {
    %c0_i32 = arith.constant 0 : i32
    %c0_i32_0 = arith.constant 0 : i32
    return %arg0, %arg1, %c0_i32 : i32, i32, i32
  }
  func.func @transform_1(%arg0: i32, %arg1: i32) -> (i32, i32, i32, i32) {
    %c0_i32 = arith.constant 0 : i32
    %c0_i32_0 = arith.constant 0 : i32
    %c0_i32_1 = arith.constant 0 : i32
    return %arg0, %arg1, %c0_i32, %c0_i32_0 : i32, i32, i32, i32
  }
  func.func @transform_2(%arg0: i32, %arg1: i32) -> (i32, i32, i32, i32) {
    %c0_i32 = arith.constant 0 : i32
    %c0_i32_0 = arith.constant 0 : i32
    %c0_i32_1 = arith.constant 0 : i32
    return %arg0, %arg1, %c0_i32, %c0_i32_0 : i32, i32, i32, i32
  }
  func.func @transform_3(%arg0: i32, %arg1: i32) -> (i32, i32) {
    %c0_i32 = arith.constant 0 : i32
    %c0_i32_0 = arith.constant 0 : i32
    %c0_i32_1 = arith.constant 0 : i32
    return %c0_i32, %c0_i32_0 : i32, i32
  }
  func.func @transform_4(%arg0: i32, %arg1: i32) -> (i32, i32) {
    %c0_i32 = arith.constant 0 : i32
    %c0_i32_0 = arith.constant 0 : i32
    %c0_i32_1 = arith.constant 0 : i32
    return %c0_i32, %c0_i32_0 : i32, i32
  }
  func.func @transform_5(%arg0: i32, %arg1: i32) -> (i32, i32, i32) {
    %c0_i32 = arith.constant 0 : i32
    %c0_i32_0 = arith.constant 0 : i32
    return %arg0, %arg1, %c0_i32 : i32, i32, i32
  }
}

module attributes {stable_mosaic.version = 11 : i64} {
  func.func @kernel(%arg0: i32, %arg1: i32, %arg2: memref<1x128x4xbf16, #tpu.memory_space<vmem>>, %arg3: memref<1x1x16x4xbf16, #tpu.memory_space<vmem>>, %arg4: memref<1x1x16x4xbf16, #tpu.memory_space<vmem>>, %arg5: memref<9x4x128xbf16, #tpu.memory_space<vmem>>, %arg6: memref<1x128xf32, #tpu.memory_space<vmem>>, %arg7: memref<1x128x128xf32, #tpu.memory_space<vmem>>, %arg8: memref<162x4xbf16, #tpu.memory_space<vmem>>) attributes {dimension_semantics = [#tpu.dimension_semantics<parallel>, #tpu.dimension_semantics<parallel>], iteration_bounds = array<i64: 2, 2>, scalar_prefetch = 0 : i64, scratch_operands = 1 : i64, tpu.core_type = #tpu.core_type<tc>, window_params = [{transform_indices = @transform_0, window_bounds = array<i64: 1, 128, 4>}, {transform_indices = @transform_1, window_bounds = array<i64: 1, 1, 16, 4>}, {transform_indices = @transform_2, window_bounds = array<i64: 1, 1, 16, 4>}, {pipeline_mode = #tpu.pipeline_mode<synchronous>, transform_indices = @transform_3, window_bounds = array<i64: 9, 4, 128>}, {pipeline_mode = #tpu.pipeline_mode<synchronous>, transform_indices = @transform_4, window_bounds = array<i64: 1, 128>}, {transform_indices = @transform_5, window_bounds = array<i64: 1, 128, 128>}]} {
    %cst = arith.constant 0.000000e+00 : bf16
    %0 = vector.broadcast %cst : bf16 to vector<1x4xbf16>
    %c0 = arith.constant 0 : index
    %c0_0 = arith.constant 0 : index
    %1 = vector.load %arg8[%c0, %c0_0] : memref<162x4xbf16, #tpu.memory_space<vmem>>, vector<1x4xbf16>
    tpu.vector_store %arg8[%c0, %c0_0], %0 {strides = array<i32>} : memref<162x4xbf16, #tpu.memory_space<vmem>>, vector<1x4xbf16>,
    %c0_1 = arith.constant 0 : index
    %c0_2 = arith.constant 0 : index
    %c0_3 = arith.constant 0 : index
    %c0_4 = arith.constant 0 : index
    %2 = vector.load %arg3[%c0_1, %c0_2, %c0_3, %c0_4] : memref<1x1x16x4xbf16, #tpu.memory_space<vmem>>, vector<1x1x16x4xbf16>
    %3 = vector.shape_cast %2 : vector<1x1x16x4xbf16> to vector<16x4xbf16>
    %c1 = arith.constant 1 : index
    %c0_5 = arith.constant 0 : index
    %4 = vector.load %arg8[%c1, %c0_5] : memref<162x4xbf16, #tpu.memory_space<vmem>>, vector<16x4xbf16>
    tpu.vector_store %arg8[%c1, %c0_5], %3 {strides = array<i32>} : memref<162x4xbf16, #tpu.memory_space<vmem>>, vector<16x4xbf16>,
    %c0_6 = arith.constant 0 : index
    %c0_7 = arith.constant 0 : index
    %c0_8 = arith.constant 0 : index
    %5 = vector.load %arg2[%c0_6, %c0_7, %c0_8] : memref<1x128x4xbf16, #tpu.memory_space<vmem>>, vector<1x128x4xbf16>
    %6 = vector.shape_cast %5 : vector<1x128x4xbf16> to vector<128x4xbf16>
    %c17 = arith.constant 17 : index
    %c0_9 = arith.constant 0 : index
    %7 = vector.load %arg8[%c17, %c0_9] : memref<162x4xbf16, #tpu.memory_space<vmem>>, vector<128x4xbf16>
    tpu.vector_store %arg8[%c17, %c0_9], %6 {strides = array<i32>} : memref<162x4xbf16, #tpu.memory_space<vmem>>, vector<128x4xbf16>,
    %c0_10 = arith.constant 0 : index
    %c0_11 = arith.constant 0 : index
    %c0_12 = arith.constant 0 : index
    %c0_13 = arith.constant 0 : index
    %8 = vector.load %arg4[%c0_10, %c0_11, %c0_12, %c0_13] : memref<1x1x16x4xbf16, #tpu.memory_space<vmem>>, vector<1x1x16x4xbf16>
    %9 = vector.shape_cast %8 : vector<1x1x16x4xbf16> to vector<16x4xbf16>
    %c145 = arith.constant 145 : index
    %c0_14 = arith.constant 0 : index
    %10 = vector.load %arg8[%c145, %c0_14] : memref<162x4xbf16, #tpu.memory_space<vmem>>, vector<16x4xbf16>
    tpu.vector_store %arg8[%c145, %c0_14], %9 {strides = array<i32>} : memref<162x4xbf16, #tpu.memory_space<vmem>>, vector<16x4xbf16>,
    %c161 = arith.constant 161 : index
    %c0_15 = arith.constant 0 : index
    %11 = vector.load %arg8[%c161, %c0_15] : memref<162x4xbf16, #tpu.memory_space<vmem>>, vector<1x4xbf16>
    tpu.vector_store %arg8[%c161, %c0_15], %0 {strides = array<i32>} : memref<162x4xbf16, #tpu.memory_space<vmem>>, vector<1x4xbf16>,
    %12 = tpu.iota {dimensions = array<i32: 0>} : vector<128x1xi32>
    %c16_i32 = arith.constant 16 : i32
    %c0_i32 = arith.constant 0 : i32
    %13 = arith.cmpi eq, %c16_i32, %c0_i32 : i32
    %c1_i32 = arith.constant 1 : i32
    %14 = arith.select %13, %c1_i32, %c16_i32 : i32
    %15 = vector.broadcast %14 : i32 to vector<128x1xi32>
    %16 = arith.remsi %12, %15 : vector<128x1xi32>
    %c0_i32_16 = arith.constant 0 : i32
    %17 = vector.broadcast %c0_i32_16 : i32 to vector<128x1xi32>
    %18 = arith.cmpi ne, %16, %17 : vector<128x1xi32>
    %c0_i32_17 = arith.constant 0 : i32
    %19 = vector.broadcast %c0_i32_17 : i32 to vector<128x1xi32>
    %20 = arith.cmpi slt, %16, %19 : vector<128x1xi32>
    %c0_i32_18 = arith.constant 0 : i32
    %21 = arith.cmpi slt, %14, %c0_i32_18 : i32
    %22 = vector.broadcast %21 : i1 to vector<128x1xi1>
    %23 = vector.broadcast %22 : vector<128x1xi1> to vector<128x1xi1>
    %24 = arith.xori %20, %23 : vector<128x1xi1>
    %25 = arith.andi %24, %18 : vector<128x1xi1>
    %26 = vector.broadcast %14 : i32 to vector<128x1xi32>
    %27 = arith.addi %16, %26 : vector<128x1xi32>
    %28 = arith.select %25, %27, %16 : vector<128x1xi1>, vector<128x1xi32>
    %c0_i32_19 = arith.constant 0 : i32
    %29 = vector.broadcast %c0_i32_19 : i32 to vector<128x1xi32>
    %30 = arith.cmpi ne, %28, %29 : vector<128x1xi32>
    %31 = vector.shape_cast %30 : vector<128x1xi1> to vector<128x1xi1>
    %32 = vector.broadcast %31 : vector<128x1xi1> to vector<128x4xi1>
    %c15_i32 = arith.constant 15 : i32
    %33 = vector.broadcast %c15_i32 : i32 to vector<128x1xi32>
    %34 = arith.cmpi ne, %28, %33 : vector<128x1xi32>
    %35 = vector.shape_cast %34 : vector<128x1xi1> to vector<128x1xi1>
    %36 = vector.broadcast %35 : vector<128x1xi1> to vector<128x4xi1>
    %cst_20 = arith.constant 0.000000e+00 : f32
    %37 = vector.broadcast %cst_20 : f32 to vector<128x128xf32>
    %c0_21 = arith.constant 0 : index
    %c0_22 = arith.constant 0 : index
    %38 = vector.load %arg8[%c0_21, %c0_22] : memref<162x4xbf16, #tpu.memory_space<vmem>>, vector<128x4xbf16>
    %c0_i32_23 = arith.constant 0 : i32
    %39 = arith.sitofp %c0_i32_23 : i32 to bf16
    %40 = vector.broadcast %39 : bf16 to vector<128x4xbf16>
    %41 = arith.select %32, %38, %40 : vector<128x4xi1>, vector<128x4xbf16>
    %c0_24 = arith.constant 0 : index
    %c0_25 = arith.constant 0 : index
    %c0_26 = arith.constant 0 : index
    %42 = vector.load %arg5[%c0_24, %c0_25, %c0_26] : memref<9x4x128xbf16, #tpu.memory_space<vmem>>, vector<1x4x128xbf16>
    %43 = vector.shape_cast %42 : vector<1x4x128xbf16> to vector<4x128xbf16>
    %cst_27 = arith.constant dense<0.000000e+00> : vector<128x128xf32>
    %44 = tpu.matmul %41, %43, %cst_27 {dimension_numbers = #tpu.dot_dimension_numbers<[1], [0], [0], [1], [0, 0, 1, 1], [], []>} : vector<128x4xbf16>, vector<4x128xbf16>, vector<128x128xf32> -> vector<128x128xf32>
    %45 = arith.addf %37, %44 : vector<128x128xf32>
    %c1_28 = arith.constant 1 : index
    %c0_29 = arith.constant 0 : index
    %46 = vector.load %arg8[%c1_28, %c0_29] : memref<162x4xbf16, #tpu.memory_space<vmem>>, vector<128x4xbf16>
    %c1_30 = arith.constant 1 : index
    %c0_31 = arith.constant 0 : index
    %c0_32 = arith.constant 0 : index
    %47 = vector.load %arg5[%c1_30, %c0_31, %c0_32] : memref<9x4x128xbf16, #tpu.memory_space<vmem>>, vector<1x4x128xbf16>
    %48 = vector.shape_cast %47 : vector<1x4x128xbf16> to vector<4x128xbf16>
    %cst_33 = arith.constant dense<0.000000e+00> : vector<128x128xf32>
    %49 = tpu.matmul %46, %48, %cst_33 {dimension_numbers = #tpu.dot_dimension_numbers<[1], [0], [0], [1], [0, 0, 1, 1], [], []>} : vector<128x4xbf16>, vector<4x128xbf16>, vector<128x128xf32> -> vector<128x128xf32>
    %50 = arith.addf %45, %49 : vector<128x128xf32>
    %c2 = arith.constant 2 : index
    %c0_34 = arith.constant 0 : index
    %51 = vector.load %arg8[%c2, %c0_34] : memref<162x4xbf16, #tpu.memory_space<vmem>>, vector<128x4xbf16>
    %c0_i32_35 = arith.constant 0 : i32
    %52 = arith.sitofp %c0_i32_35 : i32 to bf16
    %53 = vector.broadcast %52 : bf16 to vector<128x4xbf16>
    %54 = arith.select %36, %51, %53 : vector<128x4xi1>, vector<128x4xbf16>
    %c2_36 = arith.constant 2 : index
    %c0_37 = arith.constant 0 : index
    %c0_38 = arith.constant 0 : index
    %55 = vector.load %arg5[%c2_36, %c0_37, %c0_38] : memref<9x4x128xbf16, #tpu.memory_space<vmem>>, vector<1x4x128xbf16>
    %56 = vector.shape_cast %55 : vector<1x4x128xbf16> to vector<4x128xbf16>
    %cst_39 = arith.constant dense<0.000000e+00> : vector<128x128xf32>
    %57 = tpu.matmul %54, %56, %cst_39 {dimension_numbers = #tpu.dot_dimension_numbers<[1], [0], [0], [1], [0, 0, 1, 1], [], []>} : vector<128x4xbf16>, vector<4x128xbf16>, vector<128x128xf32> -> vector<128x128xf32>
    %58 = arith.addf %50, %57 : vector<128x128xf32>
    %c16 = arith.constant 16 : index
    %c0_40 = arith.constant 0 : index
    %59 = vector.load %arg8[%c16, %c0_40] : memref<162x4xbf16, #tpu.memory_space<vmem>>, vector<128x4xbf16>
    %c0_i32_41 = arith.constant 0 : i32
    %60 = arith.sitofp %c0_i32_41 : i32 to bf16
    %61 = vector.broadcast %60 : bf16 to vector<128x4xbf16>
    %62 = arith.select %32, %59, %61 : vector<128x4xi1>, vector<128x4xbf16>
    %c3 = arith.constant 3 : index
    %c0_42 = arith.constant 0 : index
    %c0_43 = arith.constant 0 : index
    %63 = vector.load %arg5[%c3, %c0_42, %c0_43] : memref<9x4x128xbf16, #tpu.memory_space<vmem>>, vector<1x4x128xbf16>
    %64 = vector.shape_cast %63 : vector<1x4x128xbf16> to vector<4x128xbf16>
    %cst_44 = arith.constant dense<0.000000e+00> : vector<128x128xf32>
    %65 = tpu.matmul %62, %64, %cst_44 {dimension_numbers = #tpu.dot_dimension_numbers<[1], [0], [0], [1], [0, 0, 1, 1], [], []>} : vector<128x4xbf16>, vector<4x128xbf16>, vector<128x128xf32> -> vector<128x128xf32>
    %66 = arith.addf %58, %65 : vector<128x128xf32>
    %c17_45 = arith.constant 17 : index
    %c0_46 = arith.constant 0 : index
    %67 = vector.load %arg8[%c17_45, %c0_46] : memref<162x4xbf16, #tpu.memory_space<vmem>>, vector<128x4xbf16>
    %c4 = arith.constant 4 : index
    %c0_47 = arith.constant 0 : index
    %c0_48 = arith.constant 0 : index
    %68 = vector.load %arg5[%c4, %c0_47, %c0_48] : memref<9x4x128xbf16, #tpu.memory_space<vmem>>, vector<1x4x128xbf16>
    %69 = vector.shape_cast %68 : vector<1x4x128xbf16> to vector<4x128xbf16>
    %cst_49 = arith.constant dense<0.000000e+00> : vector<128x128xf32>
    %70 = tpu.matmul %67, %69, %cst_49 {dimension_numbers = #tpu.dot_dimension_numbers<[1], [0], [0], [1], [0, 0, 1, 1], [], []>} : vector<128x4xbf16>, vector<4x128xbf16>, vector<128x128xf32> -> vector<128x128xf32>
    %c18 = arith.constant 18 : index
    %c0_50 = arith.constant 0 : index
    %71 = vector.load %arg8[%c18, %c0_50] : memref<162x4xbf16, #tpu.memory_space<vmem>>, vector<128x4xbf16>
    %c0_i32_51 = arith.constant 0 : i32
    %72 = arith.sitofp %c0_i32_51 : i32 to bf16
    %73 = vector.broadcast %72 : bf16 to vector<128x4xbf16>
    %74 = arith.select %36, %71, %73 : vector<128x4xi1>, vector<128x4xbf16>
    %c5 = arith.constant 5 : index
    %c0_52 = arith.constant 0 : index
    %c0_53 = arith.constant 0 : index
    %75 = vector.load %arg5[%c5, %c0_52, %c0_53] : memref<9x4x128xbf16, #tpu.memory_space<vmem>>, vector<1x4x128xbf16>
    %76 = vector.shape_cast %75 : vector<1x4x128xbf16> to vector<4x128xbf16>
    %cst_54 = arith.constant dense<0.000000e+00> : vector<128x128xf32>
    %77 = tpu.matmul %74, %76, %cst_54 {dimension_numbers = #tpu.dot_dimension_numbers<[1], [0], [0], [1], [0, 0, 1, 1], [], []>} : vector<128x4xbf16>, vector<4x128xbf16>, vector<128x128xf32> -> vector<128x128xf32>
    %78 = arith.addf %66, %77 : vector<128x128xf32>
    %c32 = arith.constant 32 : index
    %c0_55 = arith.constant 0 : index
    %79 = vector.load %arg8[%c32, %c0_55] : memref<162x4xbf16, #tpu.memory_space<vmem>>, vector<128x4xbf16>
    %c0_i32_56 = arith.constant 0 : i32
    %80 = arith.sitofp %c0_i32_56 : i32 to bf16
    %81 = vector.broadcast %80 : bf16 to vector<128x4xbf16>
    %82 = arith.select %32, %79, %81 : vector<128x4xi1>, vector<128x4xbf16>
    %c6 = arith.constant 6 : index
    %c0_57 = arith.constant 0 : index
    %c0_58 = arith.constant 0 : index
    %83 = vector.load %arg5[%c6, %c0_57, %c0_58] : memref<9x4x128xbf16, #tpu.memory_space<vmem>>, vector<1x4x128xbf16>
    %84 = vector.shape_cast %83 : vector<1x4x128xbf16> to vector<4x128xbf16>
    %cst_59 = arith.constant dense<0.000000e+00> : vector<128x128xf32>
    %85 = tpu.matmul %82, %84, %cst_59 {dimension_numbers = #tpu.dot_dimension_numbers<[1], [0], [0], [1], [0, 0, 1, 1], [], []>} : vector<128x4xbf16>, vector<4x128xbf16>, vector<128x128xf32> -> vector<128x128xf32>
    %86 = arith.addf %78, %85 : vector<128x128xf32>
    %c33 = arith.constant 33 : index
    %c0_60 = arith.constant 0 : index
    %87 = vector.load %arg8[%c33, %c0_60] : memref<162x4xbf16, #tpu.memory_space<vmem>>, vector<128x4xbf16>
    %c7 = arith.constant 7 : index
    %c0_61 = arith.constant 0 : index
    %c0_62 = arith.constant 0 : index
    %88 = vector.load %arg5[%c7, %c0_61, %c0_62] : memref<9x4x128xbf16, #tpu.memory_space<vmem>>, vector<1x4x128xbf16>
    %89 = vector.shape_cast %88 : vector<1x4x128xbf16> to vector<4x128xbf16>
    %cst_63 = arith.constant dense<0.000000e+00> : vector<128x128xf32>
    %90 = tpu.matmul %87, %89, %cst_63 {dimension_numbers = #tpu.dot_dimension_numbers<[1], [0], [0], [1], [0, 0, 1, 1], [], []>} : vector<128x4xbf16>, vector<4x128xbf16>, vector<128x128xf32> -> vector<128x128xf32>
    %91 = arith.addf %86, %90 : vector<128x128xf32>
    %c34 = arith.constant 34 : index
    %c0_64 = arith.constant 0 : index
    %92 = vector.load %arg8[%c34, %c0_64] : memref<162x4xbf16, #tpu.memory_space<vmem>>, vector<128x4xbf16>
    %c0_i32_65 = arith.constant 0 : i32
    %93 = arith.sitofp %c0_i32_65 : i32 to bf16
    %94 = vector.broadcast %93 : bf16 to vector<128x4xbf16>
    %95 = arith.select %36, %92, %94 : vector<128x4xi1>, vector<128x4xbf16>
    %c8 = arith.constant 8 : index
    %c0_66 = arith.constant 0 : index
    %c0_67 = arith.constant 0 : index
    %96 = vector.load %arg5[%c8, %c0_66, %c0_67] : memref<9x4x128xbf16, #tpu.memory_space<vmem>>, vector<1x4x128xbf16>
    %97 = vector.shape_cast %96 : vector<1x4x128xbf16> to vector<4x128xbf16>
    %cst_68 = arith.constant dense<0.000000e+00> : vector<128x128xf32>
    %98 = tpu.matmul %95, %97, %cst_68 {dimension_numbers = #tpu.dot_dimension_numbers<[1], [0], [0], [1], [0, 0, 1, 1], [], []>} : vector<128x4xbf16>, vector<4x128xbf16>, vector<128x128xf32> -> vector<128x128xf32>
    %99 = arith.addf %91, %98 : vector<128x128xf32>
    %c0_69 = arith.constant 0 : index
    %c0_70 = arith.constant 0 : index
    %100 = vector.load %arg6[%c0_69, %c0_70] : memref<1x128xf32, #tpu.memory_space<vmem>>, vector<1x128xf32>
    %101 = arith.addf %70, %99 : vector<128x128xf32>
    %102 = vector.broadcast %100 : vector<1x128xf32> to vector<128x128xf32>
    %103 = arith.addf %101, %102 : vector<128x128xf32>
    %c0_71 = arith.constant 0 : index
    %c0_72 = arith.constant 0 : index
    %c0_73 = arith.constant 0 : index
    %104 = vector.load %arg7[%c0_71, %c0_72, %c0_73] : memref<1x128x128xf32, #tpu.memory_space<vmem>>, vector<1x128x128xf32>
    %105 = vector.shape_cast %104 : vector<1x128x128xf32> to vector<128x128xf32>
    %106 = vector.shape_cast %103 : vector<128x128xf32> to vector<1x128x128xf32>
    tpu.vector_store %arg7[%c0_71, %c0_72, %c0_73], %106 {strides = array<i32>} : memref<1x128x128xf32, #tpu.memory_space<vmem>>, vector<1x128x128xf32>,
    return
  }
  func.func @transform_0(%arg0: i32, %arg1: i32) -> (i32, i32, i32) {
    %c0_i32 = arith.constant 0 : i32
    %c0_i32_0 = arith.constant 0 : i32
    return %arg0, %arg1, %c0_i32 : i32, i32, i32
  }
  func.func @transform_1(%arg0: i32, %arg1: i32) -> (i32, i32, i32, i32) {
    %c0_i32 = arith.constant 0 : i32
    %c0_i32_0 = arith.constant 0 : i32
    %c0_i32_1 = arith.constant 0 : i32
    return %arg0, %arg1, %c0_i32, %c0_i32_0 : i32, i32, i32, i32
  }
  func.func @transform_2(%arg0: i32, %arg1: i32) -> (i32, i32, i32, i32) {
    %c0_i32 = arith.constant 0 : i32
    %c0_i32_0 = arith.constant 0 : i32
    %c0_i32_1 = arith.constant 0 : i32
    return %arg0, %arg1, %c0_i32, %c0_i32_0 : i32, i32, i32, i32
  }
  func.func @transform_3(%arg0: i32, %arg1: i32) -> (i32, i32, i32) {
    %c0_i32 = arith.constant 0 : i32
    %c0_i32_0 = arith.constant 0 : i32
    %c0_i32_1 = arith.constant 0 : i32
    %c0_i32_2 = arith.constant 0 : i32
    return %c0_i32, %c0_i32_0, %c0_i32_1 : i32, i32, i32
  }
  func.func @transform_4(%arg0: i32, %arg1: i32) -> (i32, i32) {
    %c0_i32 = arith.constant 0 : i32
    %c0_i32_0 = arith.constant 0 : i32
    %c0_i32_1 = arith.constant 0 : i32
    return %c0_i32, %c0_i32_0 : i32, i32
  }
  func.func @transform_5(%arg0: i32, %arg1: i32) -> (i32, i32, i32) {
    %c0_i32 = arith.constant 0 : i32
    %c0_i32_0 = arith.constant 0 : i32
    return %arg0, %arg1, %c0_i32 : i32, i32, i32
  }
}

</mosaic_0001>

<llo_original>
// kernel: tpu_custom_call.1
$region0: #{tpu_custom_call.1}
  #allocation0 [shape = 'u32[]', space=smem, size = 0x4, offset = 0x4, fixed_abs, tag = 'smem constant byte address 0x4 - core index']
  #allocation1 [shape = 'u32[144,128]{1,0:T(1,128)}', space=vmem, size = 0x12000, scoped, tag = 'internal scratch']
  #allocation2 [shape = 'bf16[162,4]{1,0:T(8,128)(2,1)}', space=vmem, size = 0xa800, scoped, tag = 'scratch operand']
  %s0 = inlined_call_operand.vmem [shape: bf16[2,256,4], index: 0, kind: input, shape index: {}]
  %s1 = inlined_call_operand.vmem [shape: bf16[2,2,16,4], index: 1, kind: input, shape index: {}]
  %s2 = inlined_call_operand.vmem [shape: bf16[2,2,16,4], index: 2, kind: input, shape index: {}]
  %s3 = inlined_call_operand.vmem [shape: bf16[36,128], index: 3, kind: input, shape index: {}]
  %s4 = inlined_call_operand.vmem [shape: f32[1,128], index: 4, kind: input, shape index: {}]
  %s5 = inlined_call_operand.hbm [shape: f32[2,256,128], index: 5, kind: output, shape index: {}]
  %s6 = sld [smem:[#allocation0]]
  $region53: #{tpu_custom_call.1} parent=0
    _
  %s8 = ssub.s32 1, %s6
  %s9 = scalar_select 0, %s8, %s6
  $region1: #{tpu_custom_call.1} parent=0
    #allocation3 [shape = 'u8[131072]{0}', space=vmem, size = 0x20000, scoped, tag = 'output window, operand 0']
    #allocation4 [shape = 's32[2]{0}', space=sflag, size = 0x8, scoped, tag = 'scoped memory for tpu_custom_call.1']
    %10 = vsyncpa [#allocation4], 0
    %s11 = scalar_lea.sflag [#allocation4], 1
    %12 = vsyncpa %s11, 0
    loop: start=0, step=1, limit=6
    $region2: #{tpu_custom_call.1} parent=1 // loop_pre_header
      _
    $region3: #{tpu_custom_call.1} parent=1 // loop_header
      %s14 = sphi 0, %s18
      %p15 = scmp.ge.s32.totalorder %s14, 6
      %s21 = sphi 0, %s33
      %s22 = sphi 0, %s29
      %s23 = sphi 0, %s21
      %s24 = sphi 0, %s22
      %s25 = sphi 0, %s23
      %s26 = sphi 0, %s24
      %s38 = sphi 0, %s40
      %s41 = sphi 0, %s38
      %s42 = sphi 0, %s41
      %s58 = sphi 0, %s42
      %s66 = sphi 0, %s68
      %s69 = sphi 0, %s66
      %s70 = sphi 0, %s69
      %s86 = sphi 0, %s70
      %s94 = sphi 0, %s96
      %s97 = sphi 0, %s94
      %s98 = sphi 0, %s97
      %s114 = sphi 0, %s98
      %s118 = sphi 0, %s118
      %s120 = sphi 0, %s118
      %s121 = sphi 0, %s120
      %s135 = sphi 0, %s121
      %s139 = sphi 0, %s139
      %s141 = sphi 0, %s139
      %s142 = sphi 0, %s141
      %s156 = sphi 0, %s142
      %s164 = sphi 0, %s166
      %s167 = sphi 0, %s164
      %s168 = sphi 0, %s167
      %s184 = sphi 0, %s168
    $region4: #{tpu_custom_call.1} parent=1 // loop_header_branch
      %17 = sbr.rel (%p15) target = $region8
    $region5: #{tpu_custom_call.1} parent=1 // loop_body
      %s19 = ssub.s32 %s14, 1
      %s20 = ssub.s32 %s14, 2
      %s27 = sadd.s32 1, %s22
      %p28 = scmp.ge.s32.totalorder %s27, 2
      %s29 = scalar_select %p28, 0, %s27
      %s30 = sadd.s32 1, %s21
      %s31 = scalar_select %p28, %s30, %s21
      %p32 = scmp.ge.s32.totalorder %s31, 2
      %s33 = scalar_select %p32, 0, %s31
      %s34 = ssub.s32 %s21, %s33
      %s35 = ssub.s32 %s22, %s29
      %s36 = sor.u32 %s34, %s35
      %p37 = scmp.eq.s32.totalorder %s36, 0
      %s39 = sadd.s32 %s38, 1
      %s40 = scalar_select %p37, %s38, %s39
      %p43 = pneg %p37
      %p44 = scmp.eq.s32.totalorder %s14, 3
      %p45 = por %p43, %p44
      %p46 = scmp.ne.s32.totalorder %s38, %s41
      %p47 = scmp.eq.s32.totalorder %s14, 0
      %p48 = por %p46, %p47
      %p49 = scmp.ne.s32.totalorder %s38, %s41
      %p50 = scmp.eq.s32.totalorder %s19, 3
      %p51 = por %p49, %p50
      %p52 = scmp.ne.s32.totalorder %s41, %s42
      %p53 = scmp.eq.s32.totalorder %s19, 0
      %p54 = por %p52, %p53
      %p55 = scmp.ne.s32.totalorder %s41, %s42
      %p56 = scmp.eq.s32.totalorder %s20, 3
      %p57 = por %p55, %p56
      %p59 = scmp.ne.s32.totalorder %s42, %s58
      %p60 = scmp.eq.s32.totalorder %s20, 0
      %p61 = por %p59, %p60
      %s62 = ssub.s32 %s21, %s33
      %s63 = ssub.s32 %s22, %s29
      %s64 = sor.u32 %s62, %s63
      %p65 = scmp.eq.s32.totalorder %s64, 0
      %s67 = sadd.s32 %s66, 1
      %s68 = scalar_select %p65, %s66, %s67
      %p71 = pneg %p65
      %p72 = scmp.eq.s32.totalorder %s14, 3
      %p73 = por %p71, %p72
      %p74 = scmp.ne.s32.totalorder %s66, %s69
      %p75 = scmp.eq.s32.totalorder %s14, 0
      %p76 = por %p74, %p75
      %p77 = scmp.ne.s32.totalorder %s66, %s69
      %p78 = scmp.eq.s32.totalorder %s19, 3
      %p79 = por %p77, %p78
      %p80 = scmp.ne.s32.totalorder %s69, %s70
      %p81 = scmp.eq.s32.totalorder %s19, 0
      %p82 = por %p80, %p81
      %p83 = scmp.ne.s32.totalorder %s69, %s70
      %p84 = scmp.eq.s32.totalorder %s20, 3
      %p85 = por %p83, %p84
      %p87 = scmp.ne.s32.totalorder %s70, %s86
      %p88 = scmp.eq.s32.totalorder %s20, 0
      %p89 = por %p87, %p88
      %s90 = ssub.s32 %s21, %s33
      %s91 = ssub.s32 %s22, %s29
      %s92 = sor.u32 %s90, %s91
      %p93 = scmp.eq.s32.totalorder %s92, 0
      %s95 = sadd.s32 %s94, 1
      %s96 = scalar_select %p93, %s94, %s95
      %p99 = pneg %p93
      %p100 = scmp.eq.s32.totalorder %s14, 3
      %p101 = por %p99, %p100
      %p102 = scmp.ne.s32.totalorder %s94, %s97
      %p103 = scmp.eq.s32.totalorder %s14, 0
      %p104 = por %p102, %p103
      %p105 = scmp.ne.s32.totalorder %s94, %s97
      %p106 = scmp.eq.s32.totalorder %s19, 3
      %p107 = por %p105, %p106
      %p108 = scmp.ne.s32.totalorder %s97, %s98
      %p109 = scmp.eq.s32.totalorder %s19, 0
      %p110 = por %p108, %p109
      %p111 = scmp.ne.s32.totalorder %s97, %s98
      %p112 = scmp.eq.s32.totalorder %s20, 3
      %p113 = por %p111, %p112
      %p115 = scmp.ne.s32.totalorder %s98, %s114
      %p116 = scmp.eq.s32.totalorder %s20, 0
      %p117 = por %p115, %p116
      %s119 = sadd.s32 %s118, 1
      %p122 = scmp.eq.s32.totalorder %s14, 3
      %p123 = scmp.ne.s32.totalorder %s118, %s120
      %p124 = scmp.eq.s32.totalorder %s14, 0
      %p125 = por %p123, %p124
      %p126 = scmp.ne.s32.totalorder %s118, %s120
      %p127 = scmp.eq.s32.totalorder %s19, 3
      %p128 = por %p126, %p127
      %p129 = scmp.ne.s32.totalorder %s120, %s121
      %p130 = scmp.eq.s32.totalorder %s19, 0
      %p131 = por %p129, %p130
      %p132 = scmp.ne.s32.totalorder %s120, %s121
      %p133 = scmp.eq.s32.totalorder %s20, 3
      %p134 = por %p132, %p133
      %p136 = scmp.ne.s32.totalorder %s121, %s135
      %p137 = scmp.eq.s32.totalorder %s20, 0
      %p138 = por %p136, %p137
      %s140 = sadd.s32 %s139, 1
      %p143 = scmp.eq.s32.totalorder %s14, 3
      %p144 = scmp.ne.s32.totalorder %s139, %s141
      %p145 = scmp.eq.s32.totalorder %s14, 0
      %p146 = por %p144, %p145
      %p147 = scmp.ne.s32.totalorder %s139, %s141
      %p148 = scmp.eq.s32.totalorder %s19, 3
      %p149 = por %p147, %p148
      %p150 = scmp.ne.s32.totalorder %s141, %s142
      %p151 = scmp.eq.s32.totalorder %s19, 0
      %p152 = por %p150, %p151
      %p153 = scmp.ne.s32.totalorder %s141, %s142
      %p154 = scmp.eq.s32.totalorder %s20, 3
      %p155 = por %p153, %p154
      %p157 = scmp.ne.s32.totalorder %s142, %s156
      %p158 = scmp.eq.s32.totalorder %s20, 0
      %p159 = por %p157, %p158
      %s160 = ssub.s32 %s21, %s33
      %s161 = ssub.s32 %s22, %s29
      %s162 = sor.u32 %s160, %s161
      %p163 = scmp.eq.s32.totalorder %s162, 0
      %s165 = sadd.s32 %s164, 1
      %s166 = scalar_select %p163, %s164, %s165
      %p169 = pneg %p163
      %p170 = scmp.eq.s32.totalorder %s14, 3
      %p171 = por %p169, %p170
      %p172 = scmp.ne.s32.totalorder %s164, %s167
      %p173 = scmp.eq.s32.totalorder %s14, 0
      %p174 = por %p172, %p173
      %p175 = scmp.ne.s32.totalorder %s164, %s167
      %p176 = scmp.eq.s32.totalorder %s19, 3
      %p177 = por %p175, %p176
      %p178 = scmp.ne.s32.totalorder %s167, %s168
      %p179 = scmp.eq.s32.totalorder %s19, 0
      %p180 = por %p178, %p179
      %p181 = scmp.ne.s32.totalorder %s167, %s168
      %p182 = scmp.eq.s32.totalorder %s20, 3
      %p183 = por %p181, %p182
      %p185 = scmp.ne.s32.totalorder %s168, %s184
      %p186 = scmp.eq.s32.totalorder %s20, 0
      %p187 = por %p185, %p186
      %p188 = scmp.le.s32.totalorder 1, %s14
      %p189 = scmp.lt.s32.totalorder %s14, 5
      %p190 = pnand %p188, %p189
      %p191 = pneg %p190
      // Predicated region
      $region9: #{tpu_custom_call.1} parent=5 // pred_check
        _
      $region10: #{tpu_custom_call.1} parent=5 // pred_check_branch
        %193 = sbr.rel (%p190) target = $region12
      $region11: #{tpu_custom_call.1} parent=5 // pred_region
        %s194 = ssub.s32 %s14, 1
        // Predicated region
        $region13: #{tpu_custom_call.1} parent=11 // pred_check
          %p195 = pneg %p131
        $region14: #{tpu_custom_call.1} parent=11 // pred_check_branch
          %197 = sbr.rel (%p195) target = $region16
        $region15: #{tpu_custom_call.1} parent=11 // pred_region
          _
        $region16: #{tpu_custom_call.1} parent=11 // pred_fallthru
          _
        // Predicated region
        $region17: #{tpu_custom_call.1} parent=11 // pred_check
          %p198 = pneg %p152
        $region18: #{tpu_custom_call.1} parent=11 // pred_check_branch
          %200 = sbr.rel (%p198) target = $region20
        $region19: #{tpu_custom_call.1} parent=11 // pred_region
          _
        $region20: #{tpu_custom_call.1} parent=11 // pred_fallthru
          _
      $region12: #{tpu_custom_call.1} parent=5 // pred_fallthru
        _
      %p201 = scmp.lt.s32.totalorder %s14, 4
      // Predicated region
      $region21: #{tpu_custom_call.1} parent=5 // pred_check
        %p202 = pneg %p201
      $region22: #{tpu_custom_call.1} parent=5 // pred_check_branch
        %204 = sbr.rel (%p202) target = $region24
      $region23: #{tpu_custom_call.1} parent=5 // pred_region
        // Predicated region
        $region25: #{tpu_custom_call.1} parent=23 // pred_check
          %p205 = pneg %p48
        $region26: #{tpu_custom_call.1} parent=23 // pred_check_branch
          %207 = sbr.rel (%p205) target = $region28
        $region27: #{tpu_custom_call.1} parent=23 // pred_region
          %s208 = smul.u32 16, %s22
          %p209 = scmp.lt.s32.totalorder %s21, 1
          %s210 = scalar_select %p209, %s21, 1
          %p211 = scmp.lt.s32.totalorder %s208, 31
          %s212 = scalar_select %p211, %s208, 31
          %s213 = smul.addr %s210, 32
          %s214 = sadd.s32 %s212, %s213
          %s215 = smul.addr %s214, 4
          %s216 = scalar_lea.vmem %s0, %s215
          %s217 = smul.u32 16, %s22
        $region28: #{tpu_custom_call.1} parent=23 // pred_fallthru
          _
        // Predicated region
        $region29: #{tpu_custom_call.1} parent=23 // pred_check
          %p218 = pneg %p76
        $region30: #{tpu_custom_call.1} parent=23 // pred_check_branch
          %220 = sbr.rel (%p218) target = $region32
        $region31: #{tpu_custom_call.1} parent=23 // pred_region
          %p221 = scmp.lt.s32.totalorder %s21, 1
          %s222 = scalar_select %p221, %s21, 1
          %p223 = scmp.lt.s32.totalorder %s22, 1
          %s224 = scalar_select %p223, %s22, 1
          %s225 = smul.addr %s224, 2
          %s226 = smul.addr %s222, 4
          %s227 = sadd.s32 %s225, %s226
          %s228 = smul.addr %s227, 4
          %s229 = scalar_lea.vmem %s1, %s228
        $region32: #{tpu_custom_call.1} parent=23 // pred_fallthru
          _
        // Predicated region
        $region33: #{tpu_custom_call.1} parent=23 // pred_check
          %p230 = pneg %p104
        $region34: #{tpu_custom_call.1} parent=23 // pred_check_branch
          %232 = sbr.rel (%p230) target = $region36
        $region35: #{tpu_custom_call.1} parent=23 // pred_region
          %p233 = scmp.lt.s32.totalorder %s21, 1
          %s234 = scalar_select %p233, %s21, 1
          %p235 = scmp.lt.s32.totalorder %s22, 1
          %s236 = scalar_select %p235, %s22, 1
          %s237 = smul.addr %s236, 2
          %s238 = smul.addr %s234, 4
          %s239 = sadd.s32 %s237, %s238
          %s240 = smul.addr %s239, 4
          %s241 = scalar_lea.vmem %s2, %s240
        $region36: #{tpu_custom_call.1} parent=23 // pred_fallthru
          _
      $region24: #{tpu_custom_call.1} parent=5 // pred_fallthru
        _
      %p242 = scmp.le.s32.totalorder 1, %s14
      %p243 = scmp.lt.s32.totalorder %s14, 5
      %p244 = pnand %p242, %p243
      %p245 = pneg %p244
      // Predicated region
      $region37: #{tpu_custom_call.1} parent=5 // pred_check
        _
      $region38: #{tpu_custom_call.1} parent=5 // pred_check_branch
        %247 = sbr.rel (%p244) target = $region40
      $region39: #{tpu_custom_call.1} parent=5 // pred_region
        %s248 = ssub.s32 %s14, 1
        %s249 = smul.u32 16, %s24
        %p250 = scmp.lt.s32.totalorder %s23, 1
        %s251 = scalar_select %p250, %s23, 1
        %p252 = scmp.lt.s32.totalorder %s249, 31
        %s253 = scalar_select %p252, %s249, 31
        %s254 = smul.addr %s251, 32
        %s255 = sadd.s32 %s253, %s254
        %s256 = smul.addr %s255, 4
        %s257 = scalar_lea.vmem %s0, %s256
        %p258 = pneg %p54
        %p259 = pneg %p51
        %p260 = scmp.lt.s32.totalorder %s23, 1
        %s261 = scalar_select %p260, %s23, 1
        %p262 = scmp.lt.s32.totalorder %s24, 1
        %s263 = scalar_select %p262, %s24, 1
        %s264 = smul.addr %s263, 2
        %s265 = smul.addr %s261, 4
        %s266 = sadd.s32 %s264, %s265
        %s267 = smul.addr %s266, 4
        %s268 = scalar_lea.vmem %s1, %s267
        %p269 = pneg %p82
        %p270 = pneg %p79
        %p271 = scmp.lt.s32.totalorder %s23, 1
        %s272 = scalar_select %p271, %s23, 1
        %p273 = scmp.lt.s32.totalorder %s24, 1
        %s274 = scalar_select %p273, %s24, 1
        %s275 = smul.addr %s274, 2
        %s276 = smul.addr %s272, 4
        %s277 = sadd.s32 %s275, %s276
        %s278 = smul.addr %s277, 4
        %s279 = scalar_lea.vmem %s2, %s278
        %p280 = pneg %p110
        %p281 = pneg %p107
        %p282 = pneg %p131
        %p283 = pneg %p128
        %p284 = pneg %p152
        %p285 = pneg %p149
        %p286 = pneg %p180
        %p287 = pneg %p177
        %s288 = sand.u32 %s167, 1
        %s289 = scalar_lea.sflag [#allocation4], %s288
        %s290 = sand.u32 %s167, 1
        %s291 = smul.addr %s290, 128
        %s292 = scalar_lea.vmem [#allocation3], %s291
        %s293 = smul.u32 16, %s24
        %p294 = scmp.lt.s32.totalorder %s23, 1
        %s295 = scalar_select %p294, %s23, 1
        %p296 = scmp.lt.s32.totalorder %s293, 31
        %s297 = scalar_select %p296, %s293, 31
        %s298 = smul.addr %s295, 32
        %s299 = sadd.s32 %s297, %s298
        %s300 = smul.addr %s299, 4
        %s301 = scalar_lea.vmem %s0, %s300
        %s302 = smul.u32 16, %s24
        %p303 = scmp.lt.s32.totalorder %s23, 1
        %s304 = scalar_select %p303, %s23, 1
        %p305 = scmp.lt.s32.totalorder %s24, 1
        %s306 = scalar_select %p305, %s24, 1
        %s307 = smul.addr %s306, 2
        %s308 = smul.addr %s304, 4
        %s309 = sadd.s32 %s307, %s308
        %s310 = smul.addr %s309, 4
        %s311 = scalar_lea.vmem %s1, %s310
        %p312 = scmp.lt.s32.totalorder %s23, 1
        %s313 = scalar_select %p312, %s23, 1
        %p314 = scmp.lt.s32.totalorder %s24, 1
        %s315 = scalar_select %p314, %s24, 1
        %s316 = smul.addr %s315, 2
        %s317 = smul.addr %s313, 4
        %s318 = sadd.s32 %s316, %s317
        %s319 = smul.addr %s318, 4
        %s320 = scalar_lea.vmem %s2, %s319
        %s321 = smul.u32 16, %s24
        %vm325 = vcmask 24576
        %vm326 = vsmask.f32 256
        %vm327 = vmand %vm325, %vm326
        %v328 = vld [vmem:[#allocation2] sm:$0x1]
        %v329 = vsel %vm327, 0, %v328
        %330 = vst [vmem:[#allocation2] sm:$0x1] %v329
        %v331 = vld [vmem:[%s311] sm:$0xf]
        %v332 = vld [vmem:[%s311 + $0x4] sm:$0xf]
        %vm333 = vsmask.f32 4368
        %vm334 = vmor %vm326, %vm333
        %v336 = vshrl.u32 %v331, 16
        %v338 = vrot.slane %v336, 7
        %v339 = vshll.u32 %v331, 16
        %v341 = vor.u32 %v338, %v339
        %v342 = vrot.slane %v338, 4
        %v344 = vshrl.u32 %v332, 16
        %v346 = vrot.slane %v344, 7
        %v347 = vshll.u32 %v332, 16
        %v349 = vor.u32 %v346, %v347
        %v350 = vsel %vm334, %v342, %v349
        %v351 = vrot.slane %v346, 4
        %vm355 = vcmask 27648
        %vm356 = vsmask.f32 7938
        %vm357 = vmand %vm355, %vm356
        %v358 = vld [vmem:[#allocation2] sm:$0xf]
        %v359 = vsel %vm357, %v341, %v358
        %360 = vst [vmem:[#allocation2] sm:$0xf] %v359
        %vm361 = vcmask 27648
        %362 = vst.msk [vmem:[#allocation2 + $0x4] sm:$0xf] %vm361, %v350
        %v363 = vld [vmem:[#allocation2 + $0x8] sm:$0x1]
        %v364 = vsel %vm327, %v351, %v363
        %365 = vst [vmem:[#allocation2 + $0x8] sm:$0x1] %v364
        %v366 = vld [vmem:[%s301] sm:$0xf]
        %v367 = vld [vmem:[%s301 + $0x4] sm:$0xf]
        %v368 = vld [vmem:[%s301 + $0x8] sm:$0xf]
        %v369 = vld [vmem:[%s301 + $0xc] sm:$0xf]
        %v370 = vld [vmem:[%s301 + $0x10] sm:$0xf]
        %v371 = vld [vmem:[%s301 + $0x14] sm:$0xf]
        %v372 = vld [vmem:[%s301 + $0x18] sm:$0xf]
        %v373 = vld [vmem:[%s301 + $0x1c] sm:$0xf]
        %v374 = vld [vmem:[%s301 + $0x20] sm:$0xf]
        %v375 = vld [vmem:[%s301 + $0x24] sm:$0xf]
        %v376 = vld [vmem:[%s301 + $0x28] sm:$0xf]
        %v377 = vld [vmem:[%s301 + $0x2c] sm:$0xf]
        %v378 = vld [vmem:[%s301 + $0x30] sm:$0xf]
        %v379 = vld [vmem:[%s301 + $0x34] sm:$0xf]
        %v380 = vld [vmem:[%s301 + $0x38] sm:$0xf]
        %v381 = vld [vmem:[%s301 + $0x3c] sm:$0xf]
        %v383 = vshrl.u32 %v366, 16
        %v385 = vrot.slane %v383, 7
        %v386 = vshll.u32 %v366, 16
        %v388 = vor.u32 %v385, %v386
        %v389 = vrot.slane %v385, 4
        %v391 = vshrl.u32 %v367, 16
        %v393 = vrot.slane %v391, 7
        %v394 = vshll.u32 %v367, 16
        %v396 = vor.u32 %v393, %v394
        %v397 = vsel %vm334, %v389, %v396
        %v398 = vrot.slane %v393, 4
        %v400 = vshrl.u32 %v368, 16
        %v402 = vrot.slane %v400, 7
        %v403 = vshll.u32 %v368, 16
        %v405 = vor.u32 %v402, %v403
        %v406 = vsel %vm334, %v398, %v405
        %v407 = vrot.slane %v402, 4
        %v409 = vshrl.u32 %v369, 16
        %v411 = vrot.slane %v409, 7
        %v412 = vshll.u32 %v369, 16
        %v414 = vor.u32 %v411, %v412
        %v415 = vsel %vm334, %v407, %v414
        %v416 = vrot.slane %v411, 4
        %v418 = vshrl.u32 %v370, 16
        %v420 = vrot.slane %v418, 7
        %v421 = vshll.u32 %v370, 16
        %v423 = vor.u32 %v420, %v421
        %v424 = vsel %vm334, %v416, %v423
        %v425 = vrot.slane %v420, 4
        %v427 = vshrl.u32 %v371, 16
        %v429 = vrot.slane %v427, 7
        %v430 = vshll.u32 %v371, 16
        %v432 = vor.u32 %v429, %v430
        %v433 = vsel %vm334, %v425, %v432
        %v434 = vrot.slane %v429, 4
        %v436 = vshrl.u32 %v372, 16
        %v438 = vrot.slane %v436, 7
        %v439 = vshll.u32 %v372, 16
        %v441 = vor.u32 %v438, %v439
        %v442 = vsel %vm334, %v434, %v441
        %v443 = vrot.slane %v438, 4
        %v445 = vshrl.u32 %v373, 16
        %v447 = vrot.slane %v445, 7
        %v448 = vshll.u32 %v373, 16
        %v450 = vor.u32 %v447, %v448
        %v451 = vsel %vm334, %v443, %v450
        %v452 = vrot.slane %v447, 4
        %v454 = vshrl.u32 %v374, 16
        %v456 = vrot.slane %v454, 7
        %v457 = vshll.u32 %v374, 16
        %v459 = vor.u32 %v456, %v457
        %v460 = vsel %vm334, %v452, %v459
        %v461 = vrot.slane %v456, 4
        %v463 = vshrl.u32 %v375, 16
        %v465 = vrot.slane %v463, 7
        %v466 = vshll.u32 %v375, 16
        %v468 = vor.u32 %v465, %v466
        %v469 = vsel %vm334, %v461, %v468
        %v470 = vrot.slane %v465, 4
        %v472 = vshrl.u32 %v376, 16
        %v474 = vrot.slane %v472, 7
        %v475 = vshll.u32 %v376, 16
        %v477 = vor.u32 %v474, %v475
        %v478 = vsel %vm334, %v470, %v477
        %v479 = vrot.slane %v474, 4
        %v481 = vshrl.u32 %v377, 16
        %v483 = vrot.slane %v481, 7
        %v484 = vshll.u32 %v377, 16
        %v486 = vor.u32 %v483, %v484
        %v487 = vsel %vm334, %v479, %v486
        %v488 = vrot.slane %v483, 4
        %v490 = vshrl.u32 %v378, 16
        %v492 = vrot.slane %v490, 7
        %v493 = vshll.u32 %v378, 16
        %v495 = vor.u32 %v492, %v493
        %v496 = vsel %vm334, %v488, %v495
        %v497 = vrot.slane %v492, 4
        %v499 = vshrl.u32 %v379, 16
        %v501 = vrot.slane %v499, 7
        %v502 = vshll.u32 %v379, 16
        %v504 = vor.u32 %v501, %v502
        %v505 = vsel %vm334, %v497, %v504
        %v506 = vrot.slane %v501, 4
        %v508 = vshrl.u32 %v380, 16
        %v510 = vrot.slane %v508, 7
        %v511 = vshll.u32 %v380, 16
        %v513 = vor.u32 %v510, %v511
        %v514 = vsel %vm334, %v506, %v513
        %v515 = vrot.slane %v510, 4
        %v517 = vshrl.u32 %v381, 16
        %v519 = vrot.slane %v517, 7
        %v520 = vshll.u32 %v381, 16
        %v522 = vor.u32 %v519, %v520
        %v523 = vsel %vm334, %v515, %v522
        %v524 = vrot.slane %v519, 4
        %v542 = vld [vmem:[#allocation2 + $0x8] sm:$0xf]
        %v543 = vsel %vm357, %v388, %v542
        %544 = vst [vmem:[#allocation2 + $0x8] sm:$0xf] %v543
        %545 = vst.msk [vmem:[#allocation2 + $0xc] sm:$0xf] %vm361, %v397
        %546 = vst.msk [vmem:[#allocation2 + $0x10] sm:$0xf] %vm361, %v406
        %547 = vst.msk [vmem:[#allocation2 + $0x14] sm:$0xf] %vm361, %v415
        %548 = vst.msk [vmem:[#allocation2 + $0x18] sm:$0xf] %vm361, %v424
        %549 = vst.msk [vmem:[#allocation2 + $0x1c] sm:$0xf] %vm361, %v433
        %550 = vst.msk [vmem:[#allocation2 + $0x20] sm:$0xf] %vm361, %v442
        %551 = vst.msk [vmem:[#allocation2 + $0x24] sm:$0xf] %vm361, %v451
        %552 = vst.msk [vmem:[#allocation2 + $0x28] sm:$0xf] %vm361, %v460
        %553 = vst.msk [vmem:[#allocation2 + $0x2c] sm:$0xf] %vm361, %v469
        %554 = vst.msk [vmem:[#allocation2 + $0x30] sm:$0xf] %vm361, %v478
        %555 = vst.msk [vmem:[#allocation2 + $0x34] sm:$0xf] %vm361, %v487
        %556 = vst.msk [vmem:[#allocation2 + $0x38] sm:$0xf] %vm361, %v496
        %557 = vst.msk [vmem:[#allocation2 + $0x3c] sm:$0xf] %vm361, %v505
        %558 = vst.msk [vmem:[#allocation2 + $0x40] sm:$0xf] %vm361, %v514
        %559 = vst.msk [vmem:[#allocation2 + $0x44] sm:$0xf] %vm361, %v523
        %v560 = vld [vmem:[#allocation2 + $0x48] sm:$0x1]
        %v561 = vsel %vm327, %v524, %v560
        %562 = vst [vmem:[#allocation2 + $0x48] sm:$0x1] %v561
        %v563 = vld [vmem:[%s320] sm:$0xf]
        %v564 = vld [vmem:[%s320 + $0x4] sm:$0xf]
        %v566 = vshrl.u32 %v563, 16
        %v568 = vrot.slane %v566, 7
        %v569 = vshll.u32 %v563, 16
        %v571 = vor.u32 %v568, %v569
        %v572 = vrot.slane %v568, 4
        %v574 = vshrl.u32 %v564, 16
        %v576 = vrot.slane %v574, 7
        %v577 = vshll.u32 %v564, 16
        %v579 = vor.u32 %v576, %v577
        %v580 = vsel %vm334, %v572, %v579
        %v581 = vrot.slane %v576, 4
        %v585 = vld [vmem:[#allocation2 + $0x48] sm:$0xf]
        %v586 = vsel %vm357, %v571, %v585
        %587 = vst [vmem:[#allocation2 + $0x48] sm:$0xf] %v586
        %588 = vst.msk [vmem:[#allocation2 + $0x4c] sm:$0xf] %vm361, %v580
        %v589 = vld [vmem:[#allocation2 + $0x50] sm:$0x1]
        %v590 = vsel %vm327, %v581, %v589
        %591 = vst [vmem:[#allocation2 + $0x50] sm:$0x1] %v590
        %vm592 = vmand %vm325, %vm356
        %v593 = vld [vmem:[#allocation2 + $0x50] sm:$0x1]
        %v594 = vsel %vm592, 0, %v593
        %595 = vst [vmem:[#allocation2 + $0x50] sm:$0x1] %v594
        %v596 = vlaneseq
        %v597 = vshrl.u32 %v596, 7
        %v598 = vadd.s32 %v597, 8
        %v599 = vadd.s32 %v597, 16
        %v600 = vadd.s32 %v597, 24
        %v601 = vadd.s32 %v597, 32
        %v602 = vadd.s32 %v597, 40
        %v603 = vadd.s32 %v597, 48
        %v604 = vadd.s32 %v597, 56
        %v605 = vadd.s32 %v597, 64
        %v606 = vadd.s32 %v597, 72
        %v607 = vadd.s32 %v597, 80
        %v608 = vadd.s32 %v597, 88
        %v609 = vadd.s32 %v597, 96
        %v610 = vadd.s32 %v597, 104
        %v611 = vadd.s32 %v597, 112
        %v612 = vadd.s32 %v597, 120
        %vm613 = vcmp.lt.s32.totalorder %v597, 0
        %v614 = vsub.s32 0, %v597
        %v615 = vsel %vm613, %v614, %v597
        %v616 = vshrl.u32 %v615, 4
        %v617 = vand.u32 %v615, 15
        %v618 = vsub.s32 0, %v617
        %v619 = vsel %vm613, %v618, %v617
        %vm620 = vcmp.lt.s32.totalorder %v598, 0
        %v621 = vsub.s32 0, %v598
        %v622 = vsel %vm620, %v621, %v598
        %v623 = vshrl.u32 %v622, 4
        %v624 = vand.u32 %v622, 15
        %v625 = vsub.s32 0, %v624
        %v626 = vsel %vm620, %v625, %v624
        %vm627 = vcmp.lt.s32.totalorder %v599, 0
        %v628 = vsub.s32 0, %v599
        %v629 = vsel %vm627, %v628, %v599
        %v630 = vshrl.u32 %v629, 4
        %v631 = vand.u32 %v629, 15
        %v632 = vsub.s32 0, %v631
        %v633 = vsel %vm627, %v632, %v631
        %vm634 = vcmp.lt.s32.totalorder %v600, 0
        %v635 = vsub.s32 0, %v600
        %v636 = vsel %vm634, %v635, %v600
        %v637 = vshrl.u32 %v636, 4
        %v638 = vand.u32 %v636, 15
        %v639 = vsub.s32 0, %v638
        %v640 = vsel %vm634, %v639, %v638
        %vm641 = vcmp.lt.s32.totalorder %v601, 0
        %v642 = vsub.s32 0, %v601
        %v643 = vsel %vm641, %v642, %v601
        %v644 = vshrl.u32 %v643, 4
        %v645 = vand.u32 %v643, 15
        %v646 = vsub.s32 0, %v645
        %v647 = vsel %vm641, %v646, %v645
        %vm648 = vcmp.lt.s32.totalorder %v602, 0
        %v649 = vsub.s32 0, %v602
        %v650 = vsel %vm648, %v649, %v602
        %v651 = vshrl.u32 %v650, 4
        %v652 = vand.u32 %v650, 15
        %v653 = vsub.s32 0, %v652
        %v654 = vsel %vm648, %v653, %v652
        %vm655 = vcmp.lt.s32.totalorder %v603, 0
        %v656 = vsub.s32 0, %v603
        %v657 = vsel %vm655, %v656, %v603
        %v658 = vshrl.u32 %v657, 4
        %v659 = vand.u32 %v657, 15
        %v660 = vsub.s32 0, %v659
        %v661 = vsel %vm655, %v660, %v659
        %vm662 = vcmp.lt.s32.totalorder %v604, 0
        %v663 = vsub.s32 0, %v604
        %v664 = vsel %vm662, %v663, %v604
        %v665 = vshrl.u32 %v664, 4
        %v666 = vand.u32 %v664, 15
        %v667 = vsub.s32 0, %v666
        %v668 = vsel %vm662, %v667, %v666
        %vm669 = vcmp.lt.s32.totalorder %v605, 0
        %v670 = vsub.s32 0, %v605
        %v671 = vsel %vm669, %v670, %v605
        %v672 = vshrl.u32 %v671, 4
        %v673 = vand.u32 %v671, 15
        %v674 = vsub.s32 0, %v673
        %v675 = vsel %vm669, %v674, %v673
        %vm676 = vcmp.lt.s32.totalorder %v606, 0
        %v677 = vsub.s32 0, %v606
        %v678 = vsel %vm676, %v677, %v606
        %v679 = vshrl.u32 %v678, 4
        %v680 = vand.u32 %v678, 15
        %v681 = vsub.s32 0, %v680
        %v682 = vsel %vm676, %v681, %v680
        %vm683 = vcmp.lt.s32.totalorder %v607, 0
        %v684 = vsub.s32 0, %v607
        %v685 = vsel %vm683, %v684, %v607
        %v686 = vshrl.u32 %v685, 4
        %v687 = vand.u32 %v685, 15
        %v688 = vsub.s32 0, %v687
        %v689 = vsel %vm683, %v688, %v687
        %vm690 = vcmp.lt.s32.totalorder %v608, 0
        %v691 = vsub.s32 0, %v608
        %v692 = vsel %vm690, %v691, %v608
        %v693 = vshrl.u32 %v692, 4
        %v694 = vand.u32 %v692, 15
        %v695 = vsub.s32 0, %v694
        %v696 = vsel %vm690, %v695, %v694
        %vm697 = vcmp.lt.s32.totalorder %v609, 0
        %v698 = vsub.s32 0, %v609
        %v699 = vsel %vm697, %v698, %v609
        %v700 = vshrl.u32 %v699, 4
        %v701 = vand.u32 %v699, 15
        %v702 = vsub.s32 0, %v701
        %v703 = vsel %vm697, %v702, %v701
        %vm704 = vcmp.lt.s32.totalorder %v610, 0
        %v705 = vsub.s32 0, %v610
        %v706 = vsel %vm704, %v705, %v610
        %v707 = vshrl.u32 %v706, 4
        %v708 = vand.u32 %v706, 15
        %v709 = vsub.s32 0, %v708
        %v710 = vsel %vm704, %v709, %v708
        %vm711 = vcmp.lt.s32.totalorder %v611, 0
        %v712 = vsub.s32 0, %v611
        %v713 = vsel %vm711, %v712, %v611
        %v714 = vshrl.u32 %v713, 4
        %v715 = vand.u32 %v713, 15
        %v716 = vsub.s32 0, %v715
        %v717 = vsel %vm711, %v716, %v715
        %vm718 = vcmp.lt.s32.totalorder %v612, 0
        %v719 = vsub.s32 0, %v612
        %v720 = vsel %vm718, %v719, %v612
        %v721 = vshrl.u32 %v720, 4
        %v722 = vand.u32 %v720, 15
        %v723 = vsub.s32 0, %v722
        %v724 = vsel %vm718, %v723, %v722
        %vm725 = vcmp.ne.s32.totalorder %v619, 0
        %vm726 = vcmp.ne.s32.totalorder %v626, 0
        %vm727 = vcmp.ne.s32.totalorder %v633, 0
        %vm728 = vcmp.ne.s32.totalorder %v640, 0
        %vm729 = vcmp.ne.s32.totalorder %v647, 0
        %vm730 = vcmp.ne.s32.totalorder %v654, 0
        %vm731 = vcmp.ne.s32.totalorder %v661, 0
        %vm732 = vcmp.ne.s32.totalorder %v668, 0
        %vm733 = vcmp.ne.s32.totalorder %v675, 0
        %vm734 = vcmp.ne.s32.totalorder %v682, 0
        %vm735 = vcmp.ne.s32.totalorder %v689, 0
        %vm736 = vcmp.ne.s32.totalorder %v696, 0
        %vm737 = vcmp.ne.s32.totalorder %v703, 0
        %vm738 = vcmp.ne.s32.totalorder %v710, 0
        %vm739 = vcmp.ne.s32.totalorder %v717, 0
        %vm740 = vcmp.ne.s32.totalorder %v724, 0
        %vm741 = vcmp.lt.s32.totalorder %v619, 0
        %vm742 = vcmp.lt.s32.totalorder %v626, 0
        %vm743 = vcmp.lt.s32.totalorder %v633, 0
        %vm744 = vcmp.lt.s32.totalorder %v640, 0
        %vm745 = vcmp.lt.s32.totalorder %v647, 0
        %vm746 = vcmp.lt.s32.totalorder %v654, 0
        %vm747 = vcmp.lt.s32.totalorder %v661, 0
        %vm748 = vcmp.lt.s32.totalorder %v668, 0
        %vm749 = vcmp.lt.s32.totalorder %v675, 0
        %vm750 = vcmp.lt.s32.totalorder %v682, 0
        %vm751 = vcmp.lt.s32.totalorder %v689, 0
        %vm752 = vcmp.lt.s32.totalorder %v696, 0
        %vm753 = vcmp.lt.s32.totalorder %v703, 0
        %vm754 = vcmp.lt.s32.totalorder %v710, 0
        %vm755 = vcmp.lt.s32.totalorder %v717, 0
        %vm756 = vcmp.lt.s32.totalorder %v724, 0
        %vm757 = vmand %vm741, %vm725
        %vm758 = vmand %vm742, %vm726
        %vm759 = vmand %vm743, %vm727
        %vm760 = vmand %vm744, %vm728
        %vm761 = vmand %vm745, %vm729
        %vm762 = vmand %vm746, %vm730
        %vm763 = vmand %vm747, %vm731
        %vm764 = vmand %vm748, %vm732
        %vm765 = vmand %vm749, %vm733
        %vm766 = vmand %vm750, %vm734
        %vm767 = vmand %vm751, %vm735
        %vm768 = vmand %vm752, %vm736
        %vm769 = vmand %vm753, %vm737
        %vm770 = vmand %vm754, %vm738
        %vm771 = vmand %vm755, %vm739
        %vm772 = vmand %vm756, %vm740
        %v773 = vadd.s32 %v619, 16
        %v774 = vadd.s32 %v626, 16
        %v775 = vadd.s32 %v633, 16
        %v776 = vadd.s32 %v640, 16
        %v777 = vadd.s32 %v647, 16
        %v778 = vadd.s32 %v654, 16
        %v779 = vadd.s32 %v661, 16
        %v780 = vadd.s32 %v668, 16
        %v781 = vadd.s32 %v675, 16
        %v782 = vadd.s32 %v682, 16
        %v783 = vadd.s32 %v689, 16
        %v784 = vadd.s32 %v696, 16
        %v785 = vadd.s32 %v703, 16
        %v786 = vadd.s32 %v710, 16
        %v787 = vadd.s32 %v717, 16
        %v788 = vadd.s32 %v724, 16
        %v789 = vsel %vm757, %v773, %v619
        %v790 = vsel %vm758, %v774, %v626
        %v791 = vsel %vm759, %v775, %v633
        %v792 = vsel %vm760, %v776, %v640
        %v793 = vsel %vm761, %v777, %v647
        %v794 = vsel %vm762, %v778, %v654
        %v795 = vsel %vm763, %v779, %v661
        %v796 = vsel %vm764, %v780, %v668
        %v797 = vsel %vm765, %v781, %v675
        %v798 = vsel %vm766, %v782, %v682
        %v799 = vsel %vm767, %v783, %v689
        %v800 = vsel %vm768, %v784, %v696
        %v801 = vsel %vm769, %v785, %v703
        %v802 = vsel %vm770, %v786, %v710
        %v803 = vsel %vm771, %v787, %v717
        %v804 = vsel %vm772, %v788, %v724
        %vm805 = vcmp.ne.s32.totalorder %v789, 0
        %vm806 = vcmp.ne.s32.totalorder %v790, 0
        %vm807 = vcmp.ne.s32.totalorder %v791, 0
        %vm808 = vcmp.ne.s32.totalorder %v792, 0
        %vm809 = vcmp.ne.s32.totalorder %v793, 0
        %vm810 = vcmp.ne.s32.totalorder %v794, 0
        %vm811 = vcmp.ne.s32.totalorder %v795, 0
        %vm812 = vcmp.ne.s32.totalorder %v796, 0
        %vm813 = vcmp.ne.s32.totalorder %v797, 0
        %vm814 = vcmp.ne.s32.totalorder %v798, 0
        %vm815 = vcmp.ne.s32.totalorder %v799, 0
        %vm816 = vcmp.ne.s32.totalorder %v800, 0
        %vm817 = vcmp.ne.s32.totalorder %v801, 0
        %vm818 = vcmp.ne.s32.totalorder %v802, 0
        %vm819 = vcmp.ne.s32.totalorder %v803, 0
        %vm820 = vcmp.ne.s32.totalorder %v804, 0
        %v821 = vsel %vm805, 1, 0
        %v822 = vsel %vm806, 1, 0
        %v823 = vsel %vm807, 1, 0
        %v824 = vsel %vm808, 1, 0
        %v825 = vsel %vm809, 1, 0
        %v826 = vsel %vm810, 1, 0
        %v827 = vsel %vm811, 1, 0
        %v828 = vsel %vm812, 1, 0
        %v829 = vsel %vm813, 1, 0
        %v830 = vsel %vm814, 1, 0
        %v831 = vsel %vm815, 1, 0
        %v832 = vsel %vm816, 1, 0
        %v833 = vsel %vm817, 1, 0
        %v834 = vsel %vm818, 1, 0
        %v835 = vsel %vm819, 1, 0
        %v836 = vsel %vm820, 1, 0
        %vm837 = vcmp.eq.s32.totalorder %v821, 1
        %vm838 = vcmp.eq.s32.totalorder %v822, 1
        %vm839 = vcmp.eq.s32.totalorder %v823, 1
        %vm840 = vcmp.eq.s32.totalorder %v824, 1
        %vm841 = vcmp.eq.s32.totalorder %v825, 1
        %vm842 = vcmp.eq.s32.totalorder %v826, 1
        %vm843 = vcmp.eq.s32.totalorder %v827, 1
        %vm844 = vcmp.eq.s32.totalorder %v828, 1
        %vm845 = vcmp.eq.s32.totalorder %v829, 1
        %vm846 = vcmp.eq.s32.totalorder %v830, 1
        %vm847 = vcmp.eq.s32.totalorder %v831, 1
        %vm848 = vcmp.eq.s32.totalorder %v832, 1
        %vm849 = vcmp.eq.s32.totalorder %v833, 1
        %vm850 = vcmp.eq.s32.totalorder %v834, 1
        %vm851 = vcmp.eq.s32.totalorder %v835, 1
        %vm852 = vcmp.eq.s32.totalorder %v836, 1
        %vm853 = vcmp.ne.s32.totalorder %v789, 15
        %vm854 = vcmp.ne.s32.totalorder %v790, 15
        %vm855 = vcmp.ne.s32.totalorder %v791, 15
        %vm856 = vcmp.ne.s32.totalorder %v792, 15
        %vm857 = vcmp.ne.s32.totalorder %v793, 15
        %vm858 = vcmp.ne.s32.totalorder %v794, 15
        %vm859 = vcmp.ne.s32.totalorder %v795, 15
        %vm860 = vcmp.ne.s32.totalorder %v796, 15
        %vm861 = vcmp.ne.s32.totalorder %v797, 15
        %vm862 = vcmp.ne.s32.totalorder %v798, 15
        %vm863 = vcmp.ne.s32.totalorder %v799, 15
        %vm864 = vcmp.ne.s32.totalorder %v800, 15
        %vm865 = vcmp.ne.s32.totalorder %v801, 15
        %vm866 = vcmp.ne.s32.totalorder %v802, 15
        %vm867 = vcmp.ne.s32.totalorder %v803, 15
        %vm868 = vcmp.ne.s32.totalorder %v804, 15
        %v869 = vsel %vm853, 1, 0
        %v870 = vsel %vm854, 1, 0
        %v871 = vsel %vm855, 1, 0
        %v872 = vsel %vm856, 1, 0
        %v873 = vsel %vm857, 1, 0
        %v874 = vsel %vm858, 1, 0
        %v875 = vsel %vm859, 1, 0
        %v876 = vsel %vm860, 1, 0
        %v877 = vsel %vm861, 1, 0
        %v878 = vsel %vm862, 1, 0
        %v879 = vsel %vm863, 1, 0
        %v880 = vsel %vm864, 1, 0
        %v881 = vsel %vm865, 1, 0
        %v882 = vsel %vm866, 1, 0
        %v883 = vsel %vm867, 1, 0
        %v884 = vsel %vm868, 1, 0
        %vm885 = vcmp.eq.s32.totalorder %v869, 1
        %vm886 = vcmp.eq.s32.totalorder %v870, 1
        %vm887 = vcmp.eq.s32.totalorder %v871, 1
        %vm888 = vcmp.eq.s32.totalorder %v872, 1
        %vm889 = vcmp.eq.s32.totalorder %v873, 1
        %vm890 = vcmp.eq.s32.totalorder %v874, 1
        %vm891 = vcmp.eq.s32.totalorder %v875, 1
        %vm892 = vcmp.eq.s32.totalorder %v876, 1
        %vm893 = vcmp.eq.s32.totalorder %v877, 1
        %vm894 = vcmp.eq.s32.totalorder %v878, 1
        %vm895 = vcmp.eq.s32.totalorder %v879, 1
        %vm896 = vcmp.eq.s32.totalorder %v880, 1
        %vm897 = vcmp.eq.s32.totalorder %v881, 1
        %vm898 = vcmp.eq.s32.totalorder %v882, 1
        %vm899 = vcmp.eq.s32.totalorder %v883, 1
        %vm900 = vcmp.eq.s32.totalorder %v884, 1
        %v901 = vld [vmem:[#allocation2] sm:$0xf]
        %v902 = vld [vmem:[#allocation2 + $0x4] sm:$0xf]
        %v903 = vld [vmem:[#allocation2 + $0x8] sm:$0xf]
        %v904 = vld [vmem:[#allocation2 + $0xc] sm:$0xf]
        %v905 = vld [vmem:[#allocation2 + $0x10] sm:$0xf]
        %v906 = vld [vmem:[#allocation2 + $0x14] sm:$0xf]
        %v907 = vld [vmem:[#allocation2 + $0x18] sm:$0xf]
        %v908 = vld [vmem:[#allocation2 + $0x1c] sm:$0xf]
        %v909 = vld [vmem:[#allocation2 + $0x20] sm:$0xf]
        %v910 = vld [vmem:[#allocation2 + $0x24] sm:$0xf]
        %v911 = vld [vmem:[#allocation2 + $0x28] sm:$0xf]
        %v912 = vld [vmem:[#allocation2 + $0x2c] sm:$0xf]
        %v913 = vld [vmem:[#allocation2 + $0x30] sm:$0xf]
        %v914 = vld [vmem:[#allocation2 + $0x34] sm:$0xf]
        %v915 = vld [vmem:[#allocation2 + $0x38] sm:$0xf]
        %v916 = vld [vmem:[#allocation2 + $0x3c] sm:$0xf]
        %vm917 = vmpackc.low %vm837, %vm837
        %vm918 = vmpackc.low %vm838, %vm838
        %vm919 = vmpackc.low %vm839, %vm839
        %vm920 = vmpackc.low %vm840, %vm840
        %vm921 = vmpackc.low %vm841, %vm841
        %vm922 = vmpackc.low %vm842, %vm842
        %vm923 = vmpackc.low %vm843, %vm843
        %vm924 = vmpackc.low %vm844, %vm844
        %vm925 = vmpackc.low %vm845, %vm845
        %vm926 = vmpackc.low %vm846, %vm846
        %vm927 = vmpackc.low %vm847, %vm847
        %vm928 = vmpackc.low %vm848, %vm848
        %vm929 = vmpackc.low %vm849, %vm849
        %vm930 = vmpackc.low %vm850, %vm850
        %vm931 = vmpackc.low %vm851, %vm851
        %vm932 = vmpackc.low %vm852, %vm852
        %v933 = vsel %vm917, %v901, 0
        %v934 = vsel %vm918, %v902, 0
        %v935 = vsel %vm919, %v903, 0
        %v936 = vsel %vm920, %v904, 0
        %v937 = vsel %vm921, %v905, 0
        %v938 = vsel %vm922, %v906, 0
        %v939 = vsel %vm923, %v907, 0
        %v940 = vsel %vm924, %v908, 0
        %v941 = vsel %vm925, %v909, 0
        %v942 = vsel %vm926, %v910, 0
        %v943 = vsel %vm927, %v911, 0
        %v944 = vsel %vm928, %v912, 0
        %v945 = vsel %vm929, %v913, 0
        %v946 = vsel %vm930, %v914, 0
        %v947 = vsel %vm931, %v915, 0
        %v948 = vsel %vm932, %v916, 0
        %v949 = vld [vmem:[#allocation2 + $0x40] sm:$0x1]
        %v950 = vld [vmem:[#allocation2] sm:$0xe]
        %vm951 = vmpackc.low %vm885, %vm885
        %vm952 = vmpackc.low %vm886, %vm886
        %vm953 = vmpackc.low %vm887, %vm887
        %vm954 = vmpackc.low %vm888, %vm888
        %vm955 = vmpackc.low %vm889, %vm889
        %vm956 = vmpackc.low %vm890, %vm890
        %vm957 = vmpackc.low %vm891, %vm891
        %vm958 = vmpackc.low %vm892, %vm892
        %vm959 = vmpackc.low %vm893, %vm893
        %vm960 = vmpackc.low %vm894, %vm894
        %vm961 = vmpackc.low %vm895, %vm895
        %vm962 = vmpackc.low %vm896, %vm896
        %vm963 = vmpackc.low %vm897, %vm897
        %vm964 = vmpackc.low %vm898, %vm898
        %vm965 = vmpackc.low %vm899, %vm899
        %vm966 = vmpackc.low %vm900, %vm900
        %v967 = vsel %vm951, 65537, 0
        %v968 = vsel %vm952, 65537, 0
        %v969 = vsel %vm953, 65537, 0
        %v970 = vsel %vm954, 65537, 0
        %v971 = vsel %vm955, 65537, 0
        %v972 = vsel %vm956, 65537, 0
        %v973 = vsel %vm957, 65537, 0
        %v974 = vsel %vm958, 65537, 0
        %v975 = vsel %vm959, 65537, 0
        %v976 = vsel %vm960, 65537, 0
        %v977 = vsel %vm961, 65537, 0
        %v978 = vsel %vm962, 65537, 0
        %v979 = vsel %vm963, 65537, 0
        %v980 = vsel %vm964, 65537, 0
        %v981 = vsel %vm965, 65537, 0
        %v982 = vsel %vm966, 65537, 0
        %vm983 = vcmask 1040384
        %vm984 = vcmask 1044484
        %vm985 = vmor %vm983, %vm984
        %v986 = vrot.slane %v967, 7
        %v987 = vrot.slane %v986, 4
        %v988 = vrot.slane %v968, 7
        %v989 = vsel %vm985, %v987, %v988
        %v990 = vrot.slane %v988, 4
        %v991 = vrot.slane %v969, 7
        %v992 = vsel %vm985, %v990, %v991
        %v993 = vrot.slane %v991, 4
        %v994 = vrot.slane %v970, 7
        %v995 = vsel %vm985, %v993, %v994
        %v996 = vrot.slane %v994, 4
        %v997 = vrot.slane %v971, 7
        %v998 = vsel %vm985, %v996, %v997
        %v999 = vrot.slane %v997, 4
        %v1000 = vrot.slane %v972, 7
        %v1001 = vsel %vm985, %v999, %v1000
        %v1002 = vrot.slane %v1000, 4
        %v1003 = vrot.slane %v973, 7
        %v1004 = vsel %vm985, %v1002, %v1003
        %v1005 = vrot.slane %v1003, 4
        %v1006 = vrot.slane %v974, 7
        %v1007 = vsel %vm985, %v1005, %v1006
        %v1008 = vrot.slane %v1006, 4
        %v1009 = vrot.slane %v975, 7
        %v1010 = vsel %vm985, %v1008, %v1009
        %v1011 = vrot.slane %v1009, 4
        %v1012 = vrot.slane %v976, 7
        %v1013 = vsel %vm985, %v1011, %v1012
        %v1014 = vrot.slane %v1012, 4
        %v1015 = vrot.slane %v977, 7
        %v1016 = vsel %vm985, %v1014, %v1015
        %v1017 = vrot.slane %v1015, 4
        %v1018 = vrot.slane %v978, 7
        %v1019 = vsel %vm985, %v1017, %v1018
        %v1020 = vrot.slane %v1018, 4
        %v1021 = vrot.slane %v979, 7
        %v1022 = vsel %vm985, %v1020, %v1021
        %v1023 = vrot.slane %v1021, 4
        %v1024 = vrot.slane %v980, 7
        %v1025 = vsel %vm985, %v1023, %v1024
        %v1026 = vrot.slane %v1024, 4
        %v1027 = vrot.slane %v981, 7
        %v1028 = vsel %vm985, %v1026, %v1027
        %v1029 = vrot.slane %v1027, 4
        %v1030 = vrot.slane %v982, 7
        %v1031 = vsel %vm985, %v1029, %v1030
        %v1032 = vrot.slane %v1030, 4
        %vm1033 = vcmp.ne.s16.totalorder %v986, 0
        %vm1034 = vcmp.ne.s16.totalorder %v989, 0
        %vm1035 = vcmp.ne.s16.totalorder %v992, 0
        %vm1036 = vcmp.ne.s16.totalorder %v995, 0
        %vm1037 = vcmp.ne.s16.totalorder %v998, 0
        %vm1038 = vcmp.ne.s16.totalorder %v1001, 0
        %vm1039 = vcmp.ne.s16.totalorder %v1004, 0
        %vm1040 = vcmp.ne.s16.totalorder %v1007, 0
        %vm1041 = vcmp.ne.s16.totalorder %v1010, 0
        %vm1042 = vcmp.ne.s16.totalorder %v1013, 0
        %vm1043 = vcmp.ne.s16.totalorder %v1016, 0
        %vm1044 = vcmp.ne.s16.totalorder %v1019, 0
        %vm1045 = vcmp.ne.s16.totalorder %v1022, 0
        %vm1046 = vcmp.ne.s16.totalorder %v1025, 0
        %vm1047 = vcmp.ne.s16.totalorder %v1028, 0
        %vm1048 = vcmp.ne.s16.totalorder %v1031, 0
        %vm1049 = vcmp.ne.s16.totalorder %v1032, 0
        %v1050 = vsel %vm1033, %v950, 0
        %v1051 = vsel %vm1034, %v902, 0
        %v1052 = vsel %vm1035, %v903, 0
        %v1053 = vsel %vm1036, %v904, 0
        %v1054 = vsel %vm1037, %v905, 0
        %v1055 = vsel %vm1038, %v906, 0
        %v1056 = vsel %vm1039, %v907, 0
        %v1057 = vsel %vm1040, %v908, 0
        %v1058 = vsel %vm1041, %v909, 0
        %v1059 = vsel %vm1042, %v910, 0
        %v1060 = vsel %vm1043, %v911, 0
        %v1061 = vsel %vm1044, %v912, 0
        %v1062 = vsel %vm1045, %v913, 0
        %v1063 = vsel %vm1046, %v914, 0
        %v1064 = vsel %vm1047, %v915, 0
        %v1065 = vsel %vm1048, %v916, 0
        %v1066 = vsel %vm1049, %v949, 0
        %v1067 = vld [vmem:[#allocation2 + $0x40] sm:$0xf]
        %v1068 = vld [vmem:[#allocation2 + $0x44] sm:$0xf]
        %v1069 = vsel %vm917, %v903, 0
        %v1070 = vsel %vm918, %v904, 0
        %v1071 = vsel %vm919, %v905, 0
        %v1072 = vsel %vm920, %v906, 0
        %v1073 = vsel %vm921, %v907, 0
        %v1074 = vsel %vm922, %v908, 0
        %v1075 = vsel %vm923, %v909, 0
        %v1076 = vsel %vm924, %v910, 0
        %v1077 = vsel %vm925, %v911, 0
        %v1078 = vsel %vm926, %v912, 0
        %v1079 = vsel %vm927, %v913, 0
        %v1080 = vsel %vm928, %v914, 0
        %v1081 = vsel %vm929, %v915, 0
        %v1082 = vsel %vm930, %v916, 0
        %v1083 = vsel %vm931, %v1067, 0
        %v1084 = vsel %vm932, %v1068, 0
        %v1085 = vld [vmem:[#allocation2 + $0x48] sm:$0x1]
        %v1086 = vld [vmem:[#allocation2 + $0x8] sm:$0xe]
        %v1087 = vsel %vm1033, %v1086, 0
        %v1088 = vsel %vm1034, %v904, 0
        %v1089 = vsel %vm1035, %v905, 0
        %v1090 = vsel %vm1036, %v906, 0
        %v1091 = vsel %vm1037, %v907, 0
        %v1092 = vsel %vm1038, %v908, 0
        %v1093 = vsel %vm1039, %v909, 0
        %v1094 = vsel %vm1040, %v910, 0
        %v1095 = vsel %vm1041, %v911, 0
        %v1096 = vsel %vm1042, %v912, 0
        %v1097 = vsel %vm1043, %v913, 0
        %v1098 = vsel %vm1044, %v914, 0
        %v1099 = vsel %vm1045, %v915, 0
        %v1100 = vsel %vm1046, %v916, 0
        %v1101 = vsel %vm1047, %v1067, 0
        %v1102 = vsel %vm1048, %v1068, 0
        %v1103 = vsel %vm1049, %v1085, 0
        %v1104 = vld [vmem:[#allocation2 + $0x48] sm:$0xf]
        %v1105 = vld [vmem:[#allocation2 + $0x4c] sm:$0xf]
        %v1106 = vsel %vm917, %v905, 0
        %v1107 = vsel %vm918, %v906, 0
        %v1108 = vsel %vm919, %v907, 0
        %v1109 = vsel %vm920, %v908, 0
        %v1110 = vsel %vm921, %v909, 0
        %v1111 = vsel %vm922, %v910, 0
        %v1112 = vsel %vm923, %v911, 0
        %v1113 = vsel %vm924, %v912, 0
        %v1114 = vsel %vm925, %v913, 0
        %v1115 = vsel %vm926, %v914, 0
        %v1116 = vsel %vm927, %v915, 0
        %v1117 = vsel %vm928, %v916, 0
        %v1118 = vsel %vm929, %v1067, 0
        %v1119 = vsel %vm930, %v1068, 0
        %v1120 = vsel %vm931, %v1104, 0
        %v1121 = vsel %vm932, %v1105, 0
        %v1122 = vld [vmem:[#allocation2 + $0x50] sm:$0x1]
        %v1123 = vld [vmem:[#allocation2 + $0x10] sm:$0xe]
        %v1124 = vsel %vm1033, %v1123, 0
        %v1125 = vsel %vm1034, %v906, 0
        %v1126 = vsel %vm1035, %v907, 0
        %v1127 = vsel %vm1036, %v908, 0
        %v1128 = vsel %vm1037, %v909, 0
        %v1129 = vsel %vm1038, %v910, 0
        %v1130 = vsel %vm1039, %v911, 0
        %v1131 = vsel %vm1040, %v912, 0
        %v1132 = vsel %vm1041, %v913, 0
        %v1133 = vsel %vm1042, %v914, 0
        %v1134 = vsel %vm1043, %v915, 0
        %v1135 = vsel %vm1044, %v916, 0
        %v1136 = vsel %vm1045, %v1067, 0
        %v1137 = vsel %vm1046, %v1068, 0
        %v1138 = vsel %vm1047, %v1104, 0
        %v1139 = vsel %vm1048, %v1105, 0
        %v1140 = vsel %vm1049, %v1122, 0
        %v1157 = vunpack.c.l.b16 %v933
        %v1158 = vunpack.c.l.b16 %v934
        %v1159 = vunpack.c.l.b16 %v935
        %v1160 = vunpack.c.l.b16 %v936
        %v1161 = vunpack.c.l.b16 %v937
        %v1162 = vunpack.c.l.b16 %v938
        %v1163 = vunpack.c.l.b16 %v939
        %v1164 = vunpack.c.l.b16 %v940
        %v1165 = vunpack.c.l.b16 %v941
        %v1166 = vunpack.c.l.b16 %v942
        %v1167 = vunpack.c.l.b16 %v943
        %v1168 = vunpack.c.l.b16 %v944
        %v1169 = vunpack.c.l.b16 %v945
        %v1170 = vunpack.c.l.b16 %v946
        %v1171 = vunpack.c.l.b16 %v947
        %v1172 = vunpack.c.l.b16 %v948
        %v1173 = vpack.c.b16 %v1158, %v1157
        %v1174 = vpack.c.b16 %v1160, %v1159
        %v1175 = vpack.c.b16 %v1162, %v1161
        %v1176 = vpack.c.b16 %v1164, %v1163
        %v1177 = vpack.c.b16 %v1166, %v1165
        %v1178 = vpack.c.b16 %v1168, %v1167
        %v1179 = vpack.c.b16 %v1170, %v1169
        %v1180 = vpack.c.b16 %v1172, %v1171
        %v1198 = vunpack.c.l.b16 %v901
        %v1199 = vunpack.c.l.b16 %v902
        %v1200 = vunpack.c.l.b16 %v903
        %v1201 = vunpack.c.l.b16 %v904
        %v1202 = vunpack.c.l.b16 %v905
        %v1203 = vunpack.c.l.b16 %v906
        %v1204 = vunpack.c.l.b16 %v907
        %v1205 = vunpack.c.l.b16 %v908
        %v1206 = vunpack.c.l.b16 %v909
        %v1207 = vunpack.c.l.b16 %v910
        %v1208 = vunpack.c.l.b16 %v911
        %v1209 = vunpack.c.l.b16 %v912
        %v1210 = vunpack.c.l.b16 %v913
        %v1211 = vunpack.c.l.b16 %v914
        %v1212 = vunpack.c.l.b16 %v915
        %v1213 = vunpack.c.l.b16 %v916
        %v1214 = vunpack.c.l.b16 %v949
        %v1215 = vpack.c.b16 %v1199, %v1198
        %v1216 = vpack.c.b16 %v1201, %v1200
        %v1217 = vpack.c.b16 %v1203, %v1202
        %v1218 = vpack.c.b16 %v1205, %v1204
        %v1219 = vpack.c.b16 %v1207, %v1206
        %v1220 = vpack.c.b16 %v1209, %v1208
        %v1221 = vpack.c.b16 %v1211, %v1210
        %v1222 = vpack.c.b16 %v1213, %v1212
        %v1223 = vpack.c.b16 %v1214, %v1214
        %vm1224 = vsmask.f32 7424
        %v1226 = vshrl.u32 %v1215, 16
        %v1228 = vshll.u32 %v1215, 16
        %v1230 = vrot.slane %v1228, 1
        %v1231 = vor.u32 %v1226, %v1230
        %v1233 = vshll.u32 %v1216, 16
        %v1235 = vrot.slane %v1233, 1
        %v1236 = vsel %vm1224, %v1231, %v1235
        %v1237 = vshrl.u32 %v1216, 16
        %v1239 = vor.u32 %v1237, %v1235
        %v1241 = vshll.u32 %v1217, 16
        %v1243 = vrot.slane %v1241, 1
        %v1244 = vsel %vm1224, %v1239, %v1243
        %v1245 = vshrl.u32 %v1217, 16
        %v1247 = vor.u32 %v1245, %v1243
        %v1249 = vshll.u32 %v1218, 16
        %v1251 = vrot.slane %v1249, 1
        %v1252 = vsel %vm1224, %v1247, %v1251
        %v1253 = vshrl.u32 %v1218, 16
        %v1255 = vor.u32 %v1253, %v1251
        %v1257 = vshll.u32 %v1219, 16
        %v1259 = vrot.slane %v1257, 1
        %v1260 = vsel %vm1224, %v1255, %v1259
        %v1261 = vshrl.u32 %v1219, 16
        %v1263 = vor.u32 %v1261, %v1259
        %v1265 = vshll.u32 %v1220, 16
        %v1267 = vrot.slane %v1265, 1
        %v1268 = vsel %vm1224, %v1263, %v1267
        %v1269 = vshrl.u32 %v1220, 16
        %v1271 = vor.u32 %v1269, %v1267
        %v1273 = vshll.u32 %v1221, 16
        %v1275 = vrot.slane %v1273, 1
        %v1276 = vsel %vm1224, %v1271, %v1275
        %v1277 = vshrl.u32 %v1221, 16
        %v1279 = vor.u32 %v1277, %v1275
        %v1281 = vshll.u32 %v1222, 16
        %v1283 = vrot.slane %v1281, 1
        %v1284 = vsel %vm1224, %v1279, %v1283
        %v1285 = vshrl.u32 %v1222, 16
        %v1287 = vor.u32 %v1285, %v1283
        %v1289 = vshll.u32 %v1223, 16
        %v1291 = vrot.slane %v1289, 1
        %v1292 = vsel %vm1224, %v1287, %v1291
        %1293 = vrot.lane.b32.xlu0 %v1236, 4
        %v1294 = vpop.permute.xlu0 %1293
        %1295 = vrot.lane.b32.xlu0 %v1244, 4
        %v1296 = vpop.permute.xlu0 %1295
        %1297 = vrot.lane.b32.xlu0 %v1252, 4
        %v1298 = vpop.permute.xlu0 %1297
        %1299 = vrot.lane.b32.xlu0 %v1260, 4
        %v1300 = vpop.permute.xlu0 %1299
        %1301 = vrot.lane.b32.xlu0 %v1268, 4
        %v1302 = vpop.permute.xlu0 %1301
        %1303 = vrot.lane.b32.xlu0 %v1276, 4
        %v1304 = vpop.permute.xlu0 %1303
        %1305 = vrot.lane.b32.xlu0 %v1284, 4
        %v1306 = vpop.permute.xlu0 %1305
        %1307 = vrot.lane.b32.xlu0 %v1292, 4
        %v1308 = vpop.permute.xlu0 %1307
        %v1326 = vunpack.c.l.b16 %v1050
        %v1327 = vunpack.c.l.b16 %v1051
        %v1328 = vunpack.c.l.b16 %v1052
        %v1329 = vunpack.c.l.b16 %v1053
        %v1330 = vunpack.c.l.b16 %v1054
        %v1331 = vunpack.c.l.b16 %v1055
        %v1332 = vunpack.c.l.b16 %v1056
        %v1333 = vunpack.c.l.b16 %v1057
        %v1334 = vunpack.c.l.b16 %v1058
        %v1335 = vunpack.c.l.b16 %v1059
        %v1336 = vunpack.c.l.b16 %v1060
        %v1337 = vunpack.c.l.b16 %v1061
        %v1338 = vunpack.c.l.b16 %v1062
        %v1339 = vunpack.c.l.b16 %v1063
        %v1340 = vunpack.c.l.b16 %v1064
        %v1341 = vunpack.c.l.b16 %v1065
        %v1342 = vunpack.c.l.b16 %v1066
        %v1343 = vpack.c.b16 %v1327, %v1326
        %v1344 = vpack.c.b16 %v1329, %v1328
        %v1345 = vpack.c.b16 %v1331, %v1330
        %v1346 = vpack.c.b16 %v1333, %v1332
        %v1347 = vpack.c.b16 %v1335, %v1334
        %v1348 = vpack.c.b16 %v1337, %v1336
        %v1349 = vpack.c.b16 %v1339, %v1338
        %v1350 = vpack.c.b16 %v1341, %v1340
        %v1351 = vpack.c.b16 %v1342, %v1342
        %vm1352 = vcmask 1046528
        %v1353 = vrot.slane %v1343, 1
        %v1354 = vrot.slane %v1344, 1
        %v1355 = vsel %vm1352, %v1353, %v1354
        %v1356 = vrot.slane %v1345, 1
        %v1357 = vsel %vm1352, %v1354, %v1356
        %v1358 = vrot.slane %v1346, 1
        %v1359 = vsel %vm1352, %v1356, %v1358
        %v1360 = vrot.slane %v1347, 1
        %v1361 = vsel %vm1352, %v1358, %v1360
        %v1362 = vrot.slane %v1348, 1
        %v1363 = vsel %vm1352, %v1360, %v1362
        %v1364 = vrot.slane %v1349, 1
        %v1365 = vsel %vm1352, %v1362, %v1364
        %v1366 = vrot.slane %v1350, 1
        %v1367 = vsel %vm1352, %v1364, %v1366
        %v1368 = vrot.slane %v1351, 1
        %v1369 = vsel %vm1352, %v1366, %v1368
        %1370 = vrot.lane.b32.xlu0 %v1355, 8
        %v1371 = vpop.permute.xlu0 %1370
        %1372 = vrot.lane.b32.xlu0 %v1357, 8
        %v1373 = vpop.permute.xlu0 %1372
        %1374 = vrot.lane.b32.xlu0 %v1359, 8
        %v1375 = vpop.permute.xlu0 %1374
        %1376 = vrot.lane.b32.xlu0 %v1361, 8
        %v1377 = vpop.permute.xlu0 %1376
        %1378 = vrot.lane.b32.xlu0 %v1363, 8
        %v1379 = vpop.permute.xlu0 %1378
        %1380 = vrot.lane.b32.xlu0 %v1365, 8
        %v1381 = vpop.permute.xlu0 %1380
        %1382 = vrot.lane.b32.xlu0 %v1367, 8
        %v1383 = vpop.permute.xlu0 %1382
        %1384 = vrot.lane.b32.xlu0 %v1369, 8
        %v1385 = vpop.permute.xlu0 %1384
        %v1402 = vunpack.c.l.b16 %v1069
        %v1403 = vunpack.c.l.b16 %v1070
        %v1404 = vunpack.c.l.b16 %v1071
        %v1405 = vunpack.c.l.b16 %v1072
        %v1406 = vunpack.c.l.b16 %v1073
        %v1407 = vunpack.c.l.b16 %v1074
        %v1408 = vunpack.c.l.b16 %v1075
        %v1409 = vunpack.c.l.b16 %v1076
        %v1410 = vunpack.c.l.b16 %v1077
        %v1411 = vunpack.c.l.b16 %v1078
        %v1412 = vunpack.c.l.b16 %v1079
        %v1413 = vunpack.c.l.b16 %v1080
        %v1414 = vunpack.c.l.b16 %v1081
        %v1415 = vunpack.c.l.b16 %v1082
        %v1416 = vunpack.c.l.b16 %v1083
        %v1417 = vunpack.c.l.b16 %v1084
        %v1418 = vpack.c.b16 %v1403, %v1402
        %v1419 = vpack.c.b16 %v1405, %v1404
        %v1420 = vpack.c.b16 %v1407, %v1406
        %v1421 = vpack.c.b16 %v1409, %v1408
        %v1422 = vpack.c.b16 %v1411, %v1410
        %v1423 = vpack.c.b16 %v1413, %v1412
        %v1424 = vpack.c.b16 %v1415, %v1414
        %v1425 = vpack.c.b16 %v1417, %v1416
        %1426 = vrot.lane.b32.xlu0 %v1418, 12
        %v1427 = vpop.permute.xlu0 %1426
        %1428 = vrot.lane.b32.xlu0 %v1419, 12
        %v1429 = vpop.permute.xlu0 %1428
        %1430 = vrot.lane.b32.xlu0 %v1420, 12
        %v1431 = vpop.permute.xlu0 %1430
        %1432 = vrot.lane.b32.xlu0 %v1421, 12
        %v1433 = vpop.permute.xlu0 %1432
        %1434 = vrot.lane.b32.xlu0 %v1422, 12
        %v1435 = vpop.permute.xlu0 %1434
        %1436 = vrot.lane.b32.xlu0 %v1423, 12
        %v1437 = vpop.permute.xlu0 %1436
        %1438 = vrot.lane.b32.xlu0 %v1424, 12
        %v1439 = vpop.permute.xlu0 %1438
        %1440 = vrot.lane.b32.xlu0 %v1425, 12
        %v1441 = vpop.permute.xlu0 %1440
        %v1445 = vunpack.c.l.b16 %v1067
        %v1446 = vunpack.c.l.b16 %v1068
        %v1447 = vunpack.c.l.b16 %v1085
        %v1448 = vpack.c.b16 %v1446, %v1445
        %v1449 = vpack.c.b16 %v1447, %v1447
        %v1451 = vshll.u32 %v1448, 16
        %v1453 = vrot.slane %v1451, 1
        %v1454 = vsel %vm1224, %v1287, %v1453
        %v1455 = vshrl.u32 %v1448, 16
        %v1457 = vor.u32 %v1455, %v1453
        %v1459 = vshll.u32 %v1449, 16
        %v1461 = vrot.slane %v1459, 1
        %v1462 = vsel %vm1224, %v1457, %v1461
        %1463 = vrot.lane.b32.xlu0 %v1244, 16
        %v1464 = vpop.permute.xlu0 %1463
        %1465 = vrot.lane.b32.xlu0 %v1252, 16
        %v1466 = vpop.permute.xlu0 %1465
        %1467 = vrot.lane.b32.xlu0 %v1260, 16
        %v1468 = vpop.permute.xlu0 %1467
        %1469 = vrot.lane.b32.xlu0 %v1268, 16
        %v1470 = vpop.permute.xlu0 %1469
        %1471 = vrot.lane.b32.xlu0 %v1276, 16
        %v1472 = vpop.permute.xlu0 %1471
        %1473 = vrot.lane.b32.xlu0 %v1284, 16
        %v1474 = vpop.permute.xlu0 %1473
        %1475 = vrot.lane.b32.xlu0 %v1454, 16
        %v1476 = vpop.permute.xlu0 %1475
        %1477 = vrot.lane.b32.xlu0 %v1462, 16
        %v1478 = vpop.permute.xlu0 %1477
        %v1496 = vunpack.c.l.b16 %v1087
        %v1497 = vunpack.c.l.b16 %v1088
        %v1498 = vunpack.c.l.b16 %v1089
        %v1499 = vunpack.c.l.b16 %v1090
        %v1500 = vunpack.c.l.b16 %v1091
        %v1501 = vunpack.c.l.b16 %v1092
        %v1502 = vunpack.c.l.b16 %v1093
        %v1503 = vunpack.c.l.b16 %v1094
        %v1504 = vunpack.c.l.b16 %v1095
        %v1505 = vunpack.c.l.b16 %v1096
        %v1506 = vunpack.c.l.b16 %v1097
        %v1507 = vunpack.c.l.b16 %v1098
        %v1508 = vunpack.c.l.b16 %v1099
        %v1509 = vunpack.c.l.b16 %v1100
        %v1510 = vunpack.c.l.b16 %v1101
        %v1511 = vunpack.c.l.b16 %v1102
        %v1512 = vunpack.c.l.b16 %v1103
        %v1513 = vpack.c.b16 %v1497, %v1496
        %v1514 = vpack.c.b16 %v1499, %v1498
        %v1515 = vpack.c.b16 %v1501, %v1500
        %v1516 = vpack.c.b16 %v1503, %v1502
        %v1517 = vpack.c.b16 %v1505, %v1504
        %v1518 = vpack.c.b16 %v1507, %v1506
        %v1519 = vpack.c.b16 %v1509, %v1508
        %v1520 = vpack.c.b16 %v1511, %v1510
        %v1521 = vpack.c.b16 %v1512, %v1512
        %v1522 = vrot.slane %v1513, 1
        %v1523 = vrot.slane %v1514, 1
        %v1524 = vsel %vm1352, %v1522, %v1523
        %v1525 = vrot.slane %v1515, 1
        %v1526 = vsel %vm1352, %v1523, %v1525
        %v1527 = vrot.slane %v1516, 1
        %v1528 = vsel %vm1352, %v1525, %v1527
        %v1529 = vrot.slane %v1517, 1
        %v1530 = vsel %vm1352, %v1527, %v1529
        %v1531 = vrot.slane %v1518, 1
        %v1532 = vsel %vm1352, %v1529, %v1531
        %v1533 = vrot.slane %v1519, 1
        %v1534 = vsel %vm1352, %v1531, %v1533
        %v1535 = vrot.slane %v1520, 1
        %v1536 = vsel %vm1352, %v1533, %v1535
        %v1537 = vrot.slane %v1521, 1
        %v1538 = vsel %vm1352, %v1535, %v1537
        %1539 = vrot.lane.b32.xlu0 %v1524, 20
        %v1540 = vpop.permute.xlu0 %1539
        %1541 = vrot.lane.b32.xlu0 %v1526, 20
        %v1542 = vpop.permute.xlu0 %1541
        %1543 = vrot.lane.b32.xlu0 %v1528, 20
        %v1544 = vpop.permute.xlu0 %1543
        %1545 = vrot.lane.b32.xlu0 %v1530, 20
        %v1546 = vpop.permute.xlu0 %1545
        %1547 = vrot.lane.b32.xlu0 %v1532, 20
        %v1548 = vpop.permute.xlu0 %1547
        %1549 = vrot.lane.b32.xlu0 %v1534, 20
        %v1550 = vpop.permute.xlu0 %1549
        %1551 = vrot.lane.b32.xlu0 %v1536, 20
        %v1552 = vpop.permute.xlu0 %1551
        %1553 = vrot.lane.b32.xlu0 %v1538, 20
        %v1554 = vpop.permute.xlu0 %1553
        %v1571 = vunpack.c.l.b16 %v1106
        %v1572 = vunpack.c.l.b16 %v1107
        %v1573 = vunpack.c.l.b16 %v1108
        %v1574 = vunpack.c.l.b16 %v1109
        %v1575 = vunpack.c.l.b16 %v1110
        %v1576 = vunpack.c.l.b16 %v1111
        %v1577 = vunpack.c.l.b16 %v1112
        %v1578 = vunpack.c.l.b16 %v1113
        %v1579 = vunpack.c.l.b16 %v1114
        %v1580 = vunpack.c.l.b16 %v1115
        %v1581 = vunpack.c.l.b16 %v1116
        %v1582 = vunpack.c.l.b16 %v1117
        %v1583 = vunpack.c.l.b16 %v1118
        %v1584 = vunpack.c.l.b16 %v1119
        %v1585 = vunpack.c.l.b16 %v1120
        %v1586 = vunpack.c.l.b16 %v1121
        %v1587 = vpack.c.b16 %v1572, %v1571
        %v1588 = vpack.c.b16 %v1574, %v1573
        %v1589 = vpack.c.b16 %v1576, %v1575
        %v1590 = vpack.c.b16 %v1578, %v1577
        %v1591 = vpack.c.b16 %v1580, %v1579
        %v1592 = vpack.c.b16 %v1582, %v1581
        %v1593 = vpack.c.b16 %v1584, %v1583
        %v1594 = vpack.c.b16 %v1586, %v1585
        %1595 = vrot.lane.b32.xlu0 %v1587, 24
        %v1596 = vpop.permute.xlu0 %1595
        %1597 = vrot.lane.b32.xlu0 %v1588, 24
        %v1598 = vpop.permute.xlu0 %1597
        %1599 = vrot.lane.b32.xlu0 %v1589, 24
        %v1600 = vpop.permute.xlu0 %1599
        %1601 = vrot.lane.b32.xlu0 %v1590, 24
        %v1602 = vpop.permute.xlu0 %1601
        %1603 = vrot.lane.b32.xlu0 %v1591, 24
        %v1604 = vpop.permute.xlu0 %1603
        %1605 = vrot.lane.b32.xlu0 %v1592, 24
        %v1606 = vpop.permute.xlu0 %1605
        %1607 = vrot.lane.b32.xlu0 %v1593, 24
        %v1608 = vpop.permute.xlu0 %1607
        %1609 = vrot.lane.b32.xlu0 %v1594, 24
        %v1610 = vpop.permute.xlu0 %1609
        %v1614 = vunpack.c.l.b16 %v1104
        %v1615 = vunpack.c.l.b16 %v1105
        %v1616 = vunpack.c.l.b16 %v1122
        %v1617 = vpack.c.b16 %v1615, %v1614
        %v1618 = vpack.c.b16 %v1616, %v1616
        %v1620 = vshll.u32 %v1617, 16
        %v1622 = vrot.slane %v1620, 1
        %v1623 = vsel %vm1224, %v1457, %v1622
        %v1624 = vshrl.u32 %v1617, 16
        %v1626 = vor.u32 %v1624, %v1622
        %v1628 = vshll.u32 %v1618, 16
        %v1630 = vrot.slane %v1628, 1
        %v1631 = vsel %vm1224, %v1626, %v1630
        %1632 = vrot.lane.b32.xlu0 %v1252, 28
        %v1633 = vpop.permute.xlu0 %1632
        %1634 = vrot.lane.b32.xlu0 %v1260, 28
        %v1635 = vpop.permute.xlu0 %1634
        %1636 = vrot.lane.b32.xlu0 %v1268, 28
        %v1637 = vpop.permute.xlu0 %1636
        %1638 = vrot.lane.b32.xlu0 %v1276, 28
        %v1639 = vpop.permute.xlu0 %1638
        %1640 = vrot.lane.b32.xlu0 %v1284, 28
        %v1641 = vpop.permute.xlu0 %1640
        %1642 = vrot.lane.b32.xlu0 %v1454, 28
        %v1643 = vpop.permute.xlu0 %1642
        %1644 = vrot.lane.b32.xlu0 %v1623, 28
        %v1645 = vpop.permute.xlu0 %1644
        %1646 = vrot.lane.b32.xlu0 %v1631, 28
        %v1647 = vpop.permute.xlu0 %1646
        %v1665 = vunpack.c.l.b16 %v1124
        %v1666 = vunpack.c.l.b16 %v1125
        %v1667 = vunpack.c.l.b16 %v1126
        %v1668 = vunpack.c.l.b16 %v1127
        %v1669 = vunpack.c.l.b16 %v1128
        %v1670 = vunpack.c.l.b16 %v1129
        %v1671 = vunpack.c.l.b16 %v1130
        %v1672 = vunpack.c.l.b16 %v1131
        %v1673 = vunpack.c.l.b16 %v1132
        %v1674 = vunpack.c.l.b16 %v1133
        %v1675 = vunpack.c.l.b16 %v1134
        %v1676 = vunpack.c.l.b16 %v1135
        %v1677 = vunpack.c.l.b16 %v1136
        %v1678 = vunpack.c.l.b16 %v1137
        %v1679 = vunpack.c.l.b16 %v1138
        %v1680 = vunpack.c.l.b16 %v1139
        %v1681 = vunpack.c.l.b16 %v1140
        %v1682 = vpack.c.b16 %v1666, %v1665
        %v1683 = vpack.c.b16 %v1668, %v1667
        %v1684 = vpack.c.b16 %v1670, %v1669
        %v1685 = vpack.c.b16 %v1672, %v1671
        %v1686 = vpack.c.b16 %v1674, %v1673
        %v1687 = vpack.c.b16 %v1676, %v1675
        %v1688 = vpack.c.b16 %v1678, %v1677
        %v1689 = vpack.c.b16 %v1680, %v1679
        %v1690 = vpack.c.b16 %v1681, %v1681
        %v1691 = vrot.slane %v1682, 1
        %v1692 = vrot.slane %v1683, 1
        %v1693 = vsel %vm1352, %v1691, %v1692
        %v1694 = vrot.slane %v1684, 1
        %v1695 = vsel %vm1352, %v1692, %v1694
        %v1696 = vrot.slane %v1685, 1
        %v1697 = vsel %vm1352, %v1694, %v1696
        %v1698 = vrot.slane %v1686, 1
        %v1699 = vsel %vm1352, %v1696, %v1698
        %v1700 = vrot.slane %v1687, 1
        %v1701 = vsel %vm1352, %v1698, %v1700
        %v1702 = vrot.slane %v1688, 1
        %v1703 = vsel %vm1352, %v1700, %v1702
        %v1704 = vrot.slane %v1689, 1
        %v1705 = vsel %vm1352, %v1702, %v1704
        %v1706 = vrot.slane %v1690, 1
        %v1707 = vsel %vm1352, %v1704, %v1706
        %1708 = vrot.lane.b32.xlu0 %v1693, 32
        %v1709 = vpop.permute.xlu0 %1708
        %1710 = vrot.lane.b32.xlu0 %v1695, 32
        %v1711 = vpop.permute.xlu0 %1710
        %1712 = vrot.lane.b32.xlu0 %v1697, 32
        %v1713 = vpop.permute.xlu0 %1712
        %1714 = vrot.lane.b32.xlu0 %v1699, 32
        %v1715 = vpop.permute.xlu0 %1714
        %1716 = vrot.lane.b32.xlu0 %v1701, 32
        %v1717 = vpop.permute.xlu0 %1716
        %1718 = vrot.lane.b32.xlu0 %v1703, 32
        %v1719 = vpop.permute.xlu0 %1718
        %1720 = vrot.lane.b32.xlu0 %v1705, 32
        %v1721 = vpop.permute.xlu0 %1720
        %1722 = vrot.lane.b32.xlu0 %v1707, 32
        %v1723 = vpop.permute.xlu0 %1722
        %vm1724 = vcmask 31744
        %v1727 = vsel %vm1724, %v1173, %v1294
        %v1730 = vsel %vm1724, %v1174, %v1296
        %v1733 = vsel %vm1724, %v1175, %v1298
        %v1736 = vsel %vm1724, %v1176, %v1300
        %v1739 = vsel %vm1724, %v1177, %v1302
        %v1742 = vsel %vm1724, %v1178, %v1304
        %v1745 = vsel %vm1724, %v1179, %v1306
        %v1748 = vsel %vm1724, %v1180, %v1308
        %vm1749 = vcmask 64512
        %v1751 = vsel %vm1749, %v1727, %v1371
        %v1753 = vsel %vm1749, %v1730, %v1373
        %v1755 = vsel %vm1749, %v1733, %v1375
        %v1757 = vsel %vm1749, %v1736, %v1377
        %v1759 = vsel %vm1749, %v1739, %v1379
        %v1761 = vsel %vm1749, %v1742, %v1381
        %v1763 = vsel %vm1749, %v1745, %v1383
        %v1765 = vsel %vm1749, %v1748, %v1385
        %vm1766 = vcmask 97280
        %v1768 = vsel %vm1766, %v1751, %v1427
        %v1770 = vsel %vm1766, %v1753, %v1429
        %v1772 = vsel %vm1766, %v1755, %v1431
        %v1774 = vsel %vm1766, %v1757, %v1433
        %v1776 = vsel %vm1766, %v1759, %v1435
        %v1778 = vsel %vm1766, %v1761, %v1437
        %v1780 = vsel %vm1766, %v1763, %v1439
        %v1782 = vsel %vm1766, %v1765, %v1441
        %vm1783 = vcmask 130048
        %v1785 = vsel %vm1783, %v1768, %v1464
        %v1787 = vsel %vm1783, %v1770, %v1466
        %v1789 = vsel %vm1783, %v1772, %v1468
        %v1791 = vsel %vm1783, %v1774, %v1470
        %v1793 = vsel %vm1783, %v1776, %v1472
        %v1795 = vsel %vm1783, %v1778, %v1474
        %v1797 = vsel %vm1783, %v1780, %v1476
        %v1799 = vsel %vm1783, %v1782, %v1478
        %vm1800 = vcmask 162816
        %v1802 = vsel %vm1800, %v1785, %v1540
        %v1804 = vsel %vm1800, %v1787, %v1542
        %v1806 = vsel %vm1800, %v1789, %v1544
        %v1808 = vsel %vm1800, %v1791, %v1546
        %v1810 = vsel %vm1800, %v1793, %v1548
        %v1812 = vsel %vm1800, %v1795, %v1550
        %v1814 = vsel %vm1800, %v1797, %v1552
        %v1816 = vsel %vm1800, %v1799, %v1554
        %vm1817 = vcmask 195584
        %v1819 = vsel %vm1817, %v1802, %v1596
        %v1821 = vsel %vm1817, %v1804, %v1598
        %v1823 = vsel %vm1817, %v1806, %v1600
        %v1825 = vsel %vm1817, %v1808, %v1602
        %v1827 = vsel %vm1817, %v1810, %v1604
        %v1829 = vsel %vm1817, %v1812, %v1606
        %v1831 = vsel %vm1817, %v1814, %v1608
        %v1833 = vsel %vm1817, %v1816, %v1610
        %vm1834 = vcmask 228352
        %v1836 = vsel %vm1834, %v1819, %v1633
        %v1838 = vsel %vm1834, %v1821, %v1635
        %v1840 = vsel %vm1834, %v1823, %v1637
        %v1842 = vsel %vm1834, %v1825, %v1639
        %v1844 = vsel %vm1834, %v1827, %v1641
        %v1846 = vsel %vm1834, %v1829, %v1643
        %v1848 = vsel %vm1834, %v1831, %v1645
        %v1850 = vsel %vm1834, %v1833, %v1647
        %vm1851 = vcmask 261120
        %v1853 = vsel %vm1851, %v1836, %v1709
        %v1855 = vsel %vm1851, %v1838, %v1711
        %v1857 = vsel %vm1851, %v1840, %v1713
        %v1859 = vsel %vm1851, %v1842, %v1715
        %v1861 = vsel %vm1851, %v1844, %v1717
        %v1863 = vsel %vm1851, %v1846, %v1719
        %v1865 = vsel %vm1851, %v1848, %v1721
        %v1867 = vsel %vm1851, %v1850, %v1723
        %v1868 = vld [vmem:[%s3] sm:$0xf]
        %v1869 = vld [vmem:[%s3 + $0x4] sm:$0xf]
        %v1870 = vld [vmem:[%s3 + $0x8] sm:$0xf]
        %v1871 = vld [vmem:[%s3 + $0xc] sm:$0xf]
        %v1872 = vld [vmem:[%s3 + $0x10] sm:$0x3]
        %v1873 = vld [vmem:[%s4] sm:$0x1]
        %v1875 = vlaneseq
        %v1876 = vshrl.u32 %v1875, 7
        %v1877 = vsub.s32 0, %v1876
        %v1878 = vrot.slane %v1873, %v1877
        %v1885 = vunpack.c.l.b16 %v1868
        %v1886 = vunpack.c.l.b16 %v1869
        %v1887 = vunpack.c.l.b16 %v1870
        %v1888 = vunpack.c.l.b16 %v1871
        %v1889 = vunpack.c.l.b16 %v1872
        %v1890 = vpack.c.b16 %v1886, %v1885
        %v1891 = vpack.c.b16 %v1888, %v1887
        %v1892 = vpack.c.b16 %v1889, %v1889
        %vm1895 = vcmask 293888
        %v1896 = vsel %vm1895, %v1853, 0
        %v1898 = vsel %vm1895, %v1855, 0
        %v1900 = vsel %vm1895, %v1857, 0
        %v1902 = vsel %vm1895, %v1859, 0
        %v1904 = vsel %vm1895, %v1861, 0
        %v1906 = vsel %vm1895, %v1863, 0
        %v1908 = vsel %vm1895, %v1865, 0
        %v1910 = vsel %vm1895, %v1867, 0
        %vm1912 = vcmask 1041408
        %v1914 = vsel %vm1912, %v1892, 0
        %1916 = vmatprep.subr.bf16.mxu0 0
        %1917 = vmatpush1.bf16.msra.mxu0 %v1890
        %1918 = vmatprep.subr.bf16.mxu0 0
        %1919 = vmatpush1.bf16.msra.mxu0 %v1891
        %1920 = vmatprep.subr.bf16.mxu0 0
        %1921 = vmatpush1.bf16.msra.mxu0 %v1914
        %1922 = vmatprep.subr.bf16.mxu0 0
        %1923 = vmatpush1.bf16.msra.mxu0 0
        %1924 = vmatprep.subr.bf16.mxu0 0
        %1925 = vmatpush1.bf16.msra.mxu0 0
        %1926 = vmatprep.subr.bf16.mxu0 0
        %1927 = vmatpush1.bf16.msra.mxu0 0
        %1928 = vmatprep.subr.bf16.mxu0 0
        %1929 = vmatpush1.bf16.msra.mxu0 0
        %1930 = vmatprep.subr.bf16.mxu0 0
        %1931 = vmatpush1.bf16.msra.mxu0 0
        %1932 = vmatprep.subr.bf16.mxu0 0
        %1933 = vmatpush1.bf16.msra.mxu0 0
        %1934 = vmatprep.subr.bf16.mxu0 0
        %1935 = vmatpush1.bf16.msra.mxu0 0
        %1936 = vmatprep.subr.bf16.mxu0 0
        %1937 = vmatpush1.bf16.msra.mxu0 0
        %1938 = vmatprep.subr.bf16.mxu0 0
        %1939 = vmatpush1.bf16.msra.mxu0 0
        %1940 = vmatprep.subr.bf16.mxu0 0
        %1941 = vmatpush1.bf16.msra.mxu0 0
        %1942 = vmatprep.subr.bf16.mxu0 0
        %1943 = vmatpush1.bf16.msra.mxu0 0
        %1944 = vmatprep.subr.bf16.mxu0 0
        %1945 = vmatpush1.bf16.msra.mxu0 0
        %1946 = vmatprep.subr.bf16.mxu0 0
        %1947 = vmatpush1.bf16.msra.mxu0 0
        %1948 = vmatprep.mubr.bf16.mxu0 0
        %1949 = vmatmul.mubr.bf16.gmra.mrb[0].mxu0 %v1896
        %v1950 = vpop.f32.mrb[0].mxu0
        %v1951 = vadd.f32 %v1878, %v1950
        %v1952 = vpop.f32.mrb[0].mxu0
        %v1953 = vpop.f32.mrb[0].mxu0
        %v1954 = vadd.f32 %v1878, %v1953
        %v1955 = vpop.f32.mrb[0].mxu0
        %1956 = vmatprep.mubr.bf16.mxu0 0
        %1957 = vmatmul.mubr.bf16.gmra.mrb[0].mxu0 %v1898
        %v1958 = vpop.f32.mrb[0].mxu0
        %v1959 = vadd.f32 %v1878, %v1958
        %v1960 = vpop.f32.mrb[0].mxu0
        %v1961 = vpop.f32.mrb[0].mxu0
        %v1962 = vadd.f32 %v1878, %v1961
        %v1963 = vpop.f32.mrb[0].mxu0
        %1964 = vmatprep.mubr.bf16.mxu0 0
        %1965 = vmatmul.mubr.bf16.gmra.mrb[0].mxu0 %v1900
        %v1966 = vpop.f32.mrb[0].mxu0
        %v1967 = vadd.f32 %v1878, %v1966
        %v1968 = vpop.f32.mrb[0].mxu0
        %v1969 = vpop.f32.mrb[0].mxu0
        %v1970 = vadd.f32 %v1878, %v1969
        %v1971 = vpop.f32.mrb[0].mxu0
        %1972 = vmatprep.mubr.bf16.mxu0 0
        %1973 = vmatmul.mubr.bf16.gmra.mrb[0].mxu0 %v1902
        %v1974 = vpop.f32.mrb[0].mxu0
        %v1975 = vadd.f32 %v1878, %v1974
        %v1976 = vpop.f32.mrb[0].mxu0
        %v1977 = vpop.f32.mrb[0].mxu0
        %v1978 = vadd.f32 %v1878, %v1977
        %v1979 = vpop.f32.mrb[0].mxu0
        %1980 = vmatprep.mubr.bf16.mxu0 0
        %1981 = vmatmul.mubr.bf16.gmra.mrb[0].mxu0 %v1904
        %v1982 = vpop.f32.mrb[0].mxu0
        %v1983 = vadd.f32 %v1878, %v1982
        %v1984 = vpop.f32.mrb[0].mxu0
        %v1985 = vpop.f32.mrb[0].mxu0
        %v1986 = vadd.f32 %v1878, %v1985
        %v1987 = vpop.f32.mrb[0].mxu0
        %1988 = vmatprep.mubr.bf16.mxu0 0
        %1989 = vmatmul.mubr.bf16.gmra.mrb[0].mxu0 %v1906
        %v1990 = vpop.f32.mrb[0].mxu0
        %v1991 = vadd.f32 %v1878, %v1990
        %v1992 = vpop.f32.mrb[0].mxu0
        %v1993 = vpop.f32.mrb[0].mxu0
        %v1994 = vadd.f32 %v1878, %v1993
        %v1995 = vpop.f32.mrb[0].mxu0
        %1996 = vmatprep.mubr.bf16.mxu0 0
        %1997 = vmatmul.mubr.bf16.gmra.mrb[0].mxu0 %v1908
        %v1998 = vpop.f32.mrb[0].mxu0
        %v1999 = vadd.f32 %v1878, %v1998
        %v2000 = vpop.f32.mrb[0].mxu0
        %v2001 = vpop.f32.mrb[0].mxu0
        %v2002 = vadd.f32 %v1878, %v2001
        %v2003 = vpop.f32.mrb[0].mxu0
        %2004 = vmatprep.mubr.bf16.mxu0 0
        %2005 = vmatmul.mubr.bf16.gmra.mrb[0].mxu0 %v1910
        %v2006 = vpop.f32.mrb[0].mxu0
        %v2007 = vadd.f32 %v1878, %v2006
        %v2008 = vpop.f32.mrb[0].mxu0
        %v2009 = vpop.f32.mrb[0].mxu0
        %v2010 = vadd.f32 %v1878, %v2009
        %v2011 = vpop.f32.mrb[0].mxu0
        %2012 = vdwg.mxu0
        %2013 = vst [vmem:[%s292] sm:$0xff] %v1951
        %2014 = vst [vmem:[%s292 + $0x8] sm:$0xff] %v1954
        %2015 = vst [vmem:[%s292 + $0x10] sm:$0xff] %v1959
        %2016 = vst [vmem:[%s292 + $0x18] sm:$0xff] %v1962
        %2017 = vst [vmem:[%s292 + $0x20] sm:$0xff] %v1967
        %2018 = vst [vmem:[%s292 + $0x28] sm:$0xff] %v1970
        %2019 = vst [vmem:[%s292 + $0x30] sm:$0xff] %v1975
        %2020 = vst [vmem:[%s292 + $0x38] sm:$0xff] %v1978
        %2021 = vst [vmem:[%s292 + $0x40] sm:$0xff] %v1983
        %2022 = vst [vmem:[%s292 + $0x48] sm:$0xff] %v1986
        %2023 = vst [vmem:[%s292 + $0x50] sm:$0xff] %v1991
        %2024 = vst [vmem:[%s292 + $0x58] sm:$0xff] %v1994
        %2025 = vst [vmem:[%s292 + $0x60] sm:$0xff] %v1999
        %2026 = vst [vmem:[%s292 + $0x68] sm:$0xff] %v2002
        %2027 = vst [vmem:[%s292 + $0x70] sm:$0xff] %v2007
        %2028 = vst [vmem:[%s292 + $0x78] sm:$0xff] %v2010
        %s2029 = sand.u32 %s167, 1
        %s2030 = scalar_lea.sflag [#allocation4], %s2029
        %s2031 = sand.u32 %s167, 1
        %s2032 = smul.addr %s2031, 128
        %s2033 = scalar_lea.vmem [#allocation3], %s2032
        // Predicated region
        $region41: #{tpu_custom_call.1} parent=39 // pred_check
          %p2034 = pneg %p177
        $region42: #{tpu_custom_call.1} parent=39 // pred_check_branch
          %2036 = sbr.rel (%p2034) target = $region44
        $region43: #{tpu_custom_call.1} parent=39 // pred_region
          %s2037 = smul.u32 16, %s24
          %s2039 = ssub.s32 2048, 2048
          %2040 = vsyncadd %s2030, %s2039
          %s2041 = smul.addr %s23, 32
          %s2042 = sadd.s32 %s2037, %s2041
          %s2043 = smul.addr %s2042, 128
          %s2044 = scalar_lea.hbm %s5, %s2043
          %s2045 = sshll.u32 %s2033, 4
          %s2046 = int_to_ptr.vmem [resolvable:$true] %s2045
          %2051 = dma.vmem_to_hbm [thread:$0]  %s2046, 2048, %s2044, %s2030, 128, 128, 8
        $region44: #{tpu_custom_call.1} parent=39 // pred_fallthru
          _
      $region40: #{tpu_custom_call.1} parent=5 // pred_fallthru
        _
      %p2052 = scmp.le.s32.totalorder 2, %s14
      // Predicated region
      $region45: #{tpu_custom_call.1} parent=5 // pred_check
        %p2053 = pneg %p2052
      $region46: #{tpu_custom_call.1} parent=5 // pred_check_branch
        %2055 = sbr.rel (%p2053) target = $region48
      $region47: #{tpu_custom_call.1} parent=5 // pred_region
        %s2056 = ssub.s32 %s14, 2
        // Predicated region
        $region49: #{tpu_custom_call.1} parent=47 // pred_check
          %p2057 = pneg %p183
        $region50: #{tpu_custom_call.1} parent=47 // pred_check_branch
          %2059 = sbr.rel (%p2057) target = $region52
        $region51: #{tpu_custom_call.1} parent=47 // pred_region
          %s2060 = sand.u32 %s168, 1
          %s2061 = scalar_lea.sflag [#allocation4], %s2060
          %s2062 = sand.u32 %s168, 1
          %s2063 = smul.addr %s2062, 128
          %s2064 = scalar_lea.vmem [#allocation3], %s2063
          %2065 = dma.done %s2061, 2048
        $region52: #{tpu_custom_call.1} parent=47 // pred_fallthru
          _
      $region48: #{tpu_custom_call.1} parent=5 // pred_fallthru
        _
    $region6: #{tpu_custom_call.1} parent=1 // loop_footer
      %s18 = sadd.s32 1, %s14
    $region7: #{tpu_custom_call.1} parent=1 // loop_footer_branch
      %13 = sbr.rel target = $region3
    $region8: #{tpu_custom_call.1} parent=1 // loop_exit
      _
    %2066 = vsyncpa [#allocation4], 1
    %s2067 = scalar_lea.sflag [#allocation4], 1
    %2068 = vsyncpa %s2067, 1

// kernel: tpu_custom_call.1
$region0: #{tpu_custom_call.1}
  #allocation0 [shape = 'u32[]', space=smem, size = 0x4, offset = 0x4, fixed_abs, tag = 'smem constant byte address 0x4 - core index']
  #allocation1 [shape = 'u32[144,128]{1,0:T(1,128)}', space=vmem, size = 0x12000, scoped, tag = 'internal scratch']
  #allocation2 [shape = 'bf16[162,4]{1,0:T(8,128)(2,1)}', space=vmem, size = 0xa800, scoped, tag = 'scratch operand']
  %s0 = inlined_call_operand.vmem [shape: bf16[2,256,4], index: 0, kind: input, shape index: {}]
  %s1 = inlined_call_operand.vmem [shape: bf16[2,2,16,4], index: 1, kind: input, shape index: {}]
  %s2 = inlined_call_operand.vmem [shape: bf16[2,2,16,4], index: 2, kind: input, shape index: {}]
  %s3 = inlined_call_operand.vmem [shape: bf16[9,4,128], index: 3, kind: input, shape index: {}]
  %s4 = inlined_call_operand.vmem [shape: f32[1,128], index: 4, kind: input, shape index: {}]
  %s5 = inlined_call_operand.hbm [shape: f32[2,256,128], index: 5, kind: output, shape index: {}]
  %s6 = sld [smem:[#allocation0]]
  $region53: #{tpu_custom_call.1} parent=0
    _
  %s8 = ssub.s32 1, %s6
  %s9 = scalar_select 0, %s8, %s6
  $region1: #{tpu_custom_call.1} parent=0
    #allocation3 [shape = 'u8[131072]{0}', space=vmem, size = 0x20000, scoped, tag = 'output window, operand 0']
    #allocation4 [shape = 's32[2]{0}', space=sflag, size = 0x8, scoped, tag = 'scoped memory for tpu_custom_call.1']
    %10 = vsyncpa [#allocation4], 0
    %s11 = scalar_lea.sflag [#allocation4], 1
    %12 = vsyncpa %s11, 0
    loop: start=0, step=1, limit=6
    $region2: #{tpu_custom_call.1} parent=1 // loop_pre_header
      _
    $region3: #{tpu_custom_call.1} parent=1 // loop_header
      %s14 = sphi 0, %s18
      %p15 = scmp.ge.s32.totalorder %s14, 6
      %s21 = sphi 0, %s33
      %s22 = sphi 0, %s29
      %s23 = sphi 0, %s21
      %s24 = sphi 0, %s22
      %s25 = sphi 0, %s23
      %s26 = sphi 0, %s24
      %s38 = sphi 0, %s40
      %s41 = sphi 0, %s38
      %s42 = sphi 0, %s41
      %s58 = sphi 0, %s42
      %s66 = sphi 0, %s68
      %s69 = sphi 0, %s66
      %s70 = sphi 0, %s69
      %s86 = sphi 0, %s70
      %s94 = sphi 0, %s96
      %s97 = sphi 0, %s94
      %s98 = sphi 0, %s97
      %s114 = sphi 0, %s98
      %s118 = sphi 0, %s118
      %s120 = sphi 0, %s118
      %s121 = sphi 0, %s120
      %s135 = sphi 0, %s121
      %s139 = sphi 0, %s139
      %s141 = sphi 0, %s139
      %s142 = sphi 0, %s141
      %s156 = sphi 0, %s142
      %s164 = sphi 0, %s166
      %s167 = sphi 0, %s164
      %s168 = sphi 0, %s167
      %s184 = sphi 0, %s168
    $region4: #{tpu_custom_call.1} parent=1 // loop_header_branch
      %17 = sbr.rel (%p15) target = $region8
    $region5: #{tpu_custom_call.1} parent=1 // loop_body
      %s19 = ssub.s32 %s14, 1
      %s20 = ssub.s32 %s14, 2
      %s27 = sadd.s32 1, %s22
      %p28 = scmp.ge.s32.totalorder %s27, 2
      %s29 = scalar_select %p28, 0, %s27
      %s30 = sadd.s32 1, %s21
      %s31 = scalar_select %p28, %s30, %s21
      %p32 = scmp.ge.s32.totalorder %s31, 2
      %s33 = scalar_select %p32, 0, %s31
      %s34 = ssub.s32 %s21, %s33
      %s35 = ssub.s32 %s22, %s29
      %s36 = sor.u32 %s34, %s35
      %p37 = scmp.eq.s32.totalorder %s36, 0
      %s39 = sadd.s32 %s38, 1
      %s40 = scalar_select %p37, %s38, %s39
      %p43 = pneg %p37
      %p44 = scmp.eq.s32.totalorder %s14, 3
      %p45 = por %p43, %p44
      %p46 = scmp.ne.s32.totalorder %s38, %s41
      %p47 = scmp.eq.s32.totalorder %s14, 0
      %p48 = por %p46, %p47
      %p49 = scmp.ne.s32.totalorder %s38, %s41
      %p50 = scmp.eq.s32.totalorder %s19, 3
      %p51 = por %p49, %p50
      %p52 = scmp.ne.s32.totalorder %s41, %s42
      %p53 = scmp.eq.s32.totalorder %s19, 0
      %p54 = por %p52, %p53
      %p55 = scmp.ne.s32.totalorder %s41, %s42
      %p56 = scmp.eq.s32.totalorder %s20, 3
      %p57 = por %p55, %p56
      %p59 = scmp.ne.s32.totalorder %s42, %s58
      %p60 = scmp.eq.s32.totalorder %s20, 0
      %p61 = por %p59, %p60
      %s62 = ssub.s32 %s21, %s33
      %s63 = ssub.s32 %s22, %s29
      %s64 = sor.u32 %s62, %s63
      %p65 = scmp.eq.s32.totalorder %s64, 0
      %s67 = sadd.s32 %s66, 1
      %s68 = scalar_select %p65, %s66, %s67
      %p71 = pneg %p65
      %p72 = scmp.eq.s32.totalorder %s14, 3
      %p73 = por %p71, %p72
      %p74 = scmp.ne.s32.totalorder %s66, %s69
      %p75 = scmp.eq.s32.totalorder %s14, 0
      %p76 = por %p74, %p75
      %p77 = scmp.ne.s32.totalorder %s66, %s69
      %p78 = scmp.eq.s32.totalorder %s19, 3
      %p79 = por %p77, %p78
      %p80 = scmp.ne.s32.totalorder %s69, %s70
      %p81 = scmp.eq.s32.totalorder %s19, 0
      %p82 = por %p80, %p81
      %p83 = scmp.ne.s32.totalorder %s69, %s70
      %p84 = scmp.eq.s32.totalorder %s20, 3
      %p85 = por %p83, %p84
      %p87 = scmp.ne.s32.totalorder %s70, %s86
      %p88 = scmp.eq.s32.totalorder %s20, 0
      %p89 = por %p87, %p88
      %s90 = ssub.s32 %s21, %s33
      %s91 = ssub.s32 %s22, %s29
      %s92 = sor.u32 %s90, %s91
      %p93 = scmp.eq.s32.totalorder %s92, 0
      %s95 = sadd.s32 %s94, 1
      %s96 = scalar_select %p93, %s94, %s95
      %p99 = pneg %p93
      %p100 = scmp.eq.s32.totalorder %s14, 3
      %p101 = por %p99, %p100
      %p102 = scmp.ne.s32.totalorder %s94, %s97
      %p103 = scmp.eq.s32.totalorder %s14, 0
      %p104 = por %p102, %p103
      %p105 = scmp.ne.s32.totalorder %s94, %s97
      %p106 = scmp.eq.s32.totalorder %s19, 3
      %p107 = por %p105, %p106
      %p108 = scmp.ne.s32.totalorder %s97, %s98
      %p109 = scmp.eq.s32.totalorder %s19, 0
      %p110 = por %p108, %p109
      %p111 = scmp.ne.s32.totalorder %s97, %s98
      %p112 = scmp.eq.s32.totalorder %s20, 3
      %p113 = por %p111, %p112
      %p115 = scmp.ne.s32.totalorder %s98, %s114
      %p116 = scmp.eq.s32.totalorder %s20, 0
      %p117 = por %p115, %p116
      %s119 = sadd.s32 %s118, 1
      %p122 = scmp.eq.s32.totalorder %s14, 3
      %p123 = scmp.ne.s32.totalorder %s118, %s120
      %p124 = scmp.eq.s32.totalorder %s14, 0
      %p125 = por %p123, %p124
      %p126 = scmp.ne.s32.totalorder %s118, %s120
      %p127 = scmp.eq.s32.totalorder %s19, 3
      %p128 = por %p126, %p127
      %p129 = scmp.ne.s32.totalorder %s120, %s121
      %p130 = scmp.eq.s32.totalorder %s19, 0
      %p131 = por %p129, %p130
      %p132 = scmp.ne.s32.totalorder %s120, %s121
      %p133 = scmp.eq.s32.totalorder %s20, 3
      %p134 = por %p132, %p133
      %p136 = scmp.ne.s32.totalorder %s121, %s135
      %p137 = scmp.eq.s32.totalorder %s20, 0
      %p138 = por %p136, %p137
      %s140 = sadd.s32 %s139, 1
      %p143 = scmp.eq.s32.totalorder %s14, 3
      %p144 = scmp.ne.s32.totalorder %s139, %s141
      %p145 = scmp.eq.s32.totalorder %s14, 0
      %p146 = por %p144, %p145
      %p147 = scmp.ne.s32.totalorder %s139, %s141
      %p148 = scmp.eq.s32.totalorder %s19, 3
      %p149 = por %p147, %p148
      %p150 = scmp.ne.s32.totalorder %s141, %s142
      %p151 = scmp.eq.s32.totalorder %s19, 0
      %p152 = por %p150, %p151
      %p153 = scmp.ne.s32.totalorder %s141, %s142
      %p154 = scmp.eq.s32.totalorder %s20, 3
      %p155 = por %p153, %p154
      %p157 = scmp.ne.s32.totalorder %s142, %s156
      %p158 = scmp.eq.s32.totalorder %s20, 0
      %p159 = por %p157, %p158
      %s160 = ssub.s32 %s21, %s33
      %s161 = ssub.s32 %s22, %s29
      %s162 = sor.u32 %s160, %s161
      %p163 = scmp.eq.s32.totalorder %s162, 0
      %s165 = sadd.s32 %s164, 1
      %s166 = scalar_select %p163, %s164, %s165
      %p169 = pneg %p163
      %p170 = scmp.eq.s32.totalorder %s14, 3
      %p171 = por %p169, %p170
      %p172 = scmp.ne.s32.totalorder %s164, %s167
      %p173 = scmp.eq.s32.totalorder %s14, 0
      %p174 = por %p172, %p173
      %p175 = scmp.ne.s32.totalorder %s164, %s167
      %p176 = scmp.eq.s32.totalorder %s19, 3
      %p177 = por %p175, %p176
      %p178 = scmp.ne.s32.totalorder %s167, %s168
      %p179 = scmp.eq.s32.totalorder %s19, 0
      %p180 = por %p178, %p179
      %p181 = scmp.ne.s32.totalorder %s167, %s168
      %p182 = scmp.eq.s32.totalorder %s20, 3
      %p183 = por %p181, %p182
      %p185 = scmp.ne.s32.totalorder %s168, %s184
      %p186 = scmp.eq.s32.totalorder %s20, 0
      %p187 = por %p185, %p186
      %p188 = scmp.le.s32.totalorder 1, %s14
      %p189 = scmp.lt.s32.totalorder %s14, 5
      %p190 = pnand %p188, %p189
      %p191 = pneg %p190
      // Predicated region
      $region9: #{tpu_custom_call.1} parent=5 // pred_check
        _
      $region10: #{tpu_custom_call.1} parent=5 // pred_check_branch
        %193 = sbr.rel (%p190) target = $region12
      $region11: #{tpu_custom_call.1} parent=5 // pred_region
        %s194 = ssub.s32 %s14, 1
        // Predicated region
        $region13: #{tpu_custom_call.1} parent=11 // pred_check
          %p195 = pneg %p131
        $region14: #{tpu_custom_call.1} parent=11 // pred_check_branch
          %197 = sbr.rel (%p195) target = $region16
        $region15: #{tpu_custom_call.1} parent=11 // pred_region
          _
        $region16: #{tpu_custom_call.1} parent=11 // pred_fallthru
          _
        // Predicated region
        $region17: #{tpu_custom_call.1} parent=11 // pred_check
          %p198 = pneg %p152
        $region18: #{tpu_custom_call.1} parent=11 // pred_check_branch
          %200 = sbr.rel (%p198) target = $region20
        $region19: #{tpu_custom_call.1} parent=11 // pred_region
          _
        $region20: #{tpu_custom_call.1} parent=11 // pred_fallthru
          _
      $region12: #{tpu_custom_call.1} parent=5 // pred_fallthru
        _
      %p201 = scmp.lt.s32.totalorder %s14, 4
      // Predicated region
      $region21: #{tpu_custom_call.1} parent=5 // pred_check
        %p202 = pneg %p201
      $region22: #{tpu_custom_call.1} parent=5 // pred_check_branch
        %204 = sbr.rel (%p202) target = $region24
      $region23: #{tpu_custom_call.1} parent=5 // pred_region
        // Predicated region
        $region25: #{tpu_custom_call.1} parent=23 // pred_check
          %p205 = pneg %p48
        $region26: #{tpu_custom_call.1} parent=23 // pred_check_branch
          %207 = sbr.rel (%p205) target = $region28
        $region27: #{tpu_custom_call.1} parent=23 // pred_region
          %s208 = smul.u32 16, %s22
          %p209 = scmp.lt.s32.totalorder %s21, 1
          %s210 = scalar_select %p209, %s21, 1
          %p211 = scmp.lt.s32.totalorder %s208, 31
          %s212 = scalar_select %p211, %s208, 31
          %s213 = smul.addr %s210, 32
          %s214 = sadd.s32 %s212, %s213
          %s215 = smul.addr %s214, 4
          %s216 = scalar_lea.vmem %s0, %s215
          %s217 = smul.u32 16, %s22
        $region28: #{tpu_custom_call.1} parent=23 // pred_fallthru
          _
        // Predicated region
        $region29: #{tpu_custom_call.1} parent=23 // pred_check
          %p218 = pneg %p76
        $region30: #{tpu_custom_call.1} parent=23 // pred_check_branch
          %220 = sbr.rel (%p218) target = $region32
        $region31: #{tpu_custom_call.1} parent=23 // pred_region
          %p221 = scmp.lt.s32.totalorder %s21, 1
          %s222 = scalar_select %p221, %s21, 1
          %p223 = scmp.lt.s32.totalorder %s22, 1
          %s224 = scalar_select %p223, %s22, 1
          %s225 = smul.addr %s224, 2
          %s226 = smul.addr %s222, 4
          %s227 = sadd.s32 %s225, %s226
          %s228 = smul.addr %s227, 4
          %s229 = scalar_lea.vmem %s1, %s228
        $region32: #{tpu_custom_call.1} parent=23 // pred_fallthru
          _
        // Predicated region
        $region33: #{tpu_custom_call.1} parent=23 // pred_check
          %p230 = pneg %p104
        $region34: #{tpu_custom_call.1} parent=23 // pred_check_branch
          %232 = sbr.rel (%p230) target = $region36
        $region35: #{tpu_custom_call.1} parent=23 // pred_region
          %p233 = scmp.lt.s32.totalorder %s21, 1
          %s234 = scalar_select %p233, %s21, 1
          %p235 = scmp.lt.s32.totalorder %s22, 1
          %s236 = scalar_select %p235, %s22, 1
          %s237 = smul.addr %s236, 2
          %s238 = smul.addr %s234, 4
          %s239 = sadd.s32 %s237, %s238
          %s240 = smul.addr %s239, 4
          %s241 = scalar_lea.vmem %s2, %s240
        $region36: #{tpu_custom_call.1} parent=23 // pred_fallthru
          _
      $region24: #{tpu_custom_call.1} parent=5 // pred_fallthru
        _
      %p242 = scmp.le.s32.totalorder 1, %s14
      %p243 = scmp.lt.s32.totalorder %s14, 5
      %p244 = pnand %p242, %p243
      %p245 = pneg %p244
      // Predicated region
      $region37: #{tpu_custom_call.1} parent=5 // pred_check
        _
      $region38: #{tpu_custom_call.1} parent=5 // pred_check_branch
        %247 = sbr.rel (%p244) target = $region40
      $region39: #{tpu_custom_call.1} parent=5 // pred_region
        %s248 = ssub.s32 %s14, 1
        %s249 = smul.u32 16, %s24
        %p250 = scmp.lt.s32.totalorder %s23, 1
        %s251 = scalar_select %p250, %s23, 1
        %p252 = scmp.lt.s32.totalorder %s249, 31
        %s253 = scalar_select %p252, %s249, 31
        %s254 = smul.addr %s251, 32
        %s255 = sadd.s32 %s253, %s254
        %s256 = smul.addr %s255, 4
        %s257 = scalar_lea.vmem %s0, %s256
        %p258 = pneg %p54
        %p259 = pneg %p51
        %p260 = scmp.lt.s32.totalorder %s23, 1
        %s261 = scalar_select %p260, %s23, 1
        %p262 = scmp.lt.s32.totalorder %s24, 1
        %s263 = scalar_select %p262, %s24, 1
        %s264 = smul.addr %s263, 2
        %s265 = smul.addr %s261, 4
        %s266 = sadd.s32 %s264, %s265
        %s267 = smul.addr %s266, 4
        %s268 = scalar_lea.vmem %s1, %s267
        %p269 = pneg %p82
        %p270 = pneg %p79
        %p271 = scmp.lt.s32.totalorder %s23, 1
        %s272 = scalar_select %p271, %s23, 1
        %p273 = scmp.lt.s32.totalorder %s24, 1
        %s274 = scalar_select %p273, %s24, 1
        %s275 = smul.addr %s274, 2
        %s276 = smul.addr %s272, 4
        %s277 = sadd.s32 %s275, %s276
        %s278 = smul.addr %s277, 4
        %s279 = scalar_lea.vmem %s2, %s278
        %p280 = pneg %p110
        %p281 = pneg %p107
        %p282 = pneg %p131
        %p283 = pneg %p128
        %p284 = pneg %p152
        %p285 = pneg %p149
        %p286 = pneg %p180
        %p287 = pneg %p177
        %s288 = sand.u32 %s167, 1
        %s289 = scalar_lea.sflag [#allocation4], %s288
        %s290 = sand.u32 %s167, 1
        %s291 = smul.addr %s290, 128
        %s292 = scalar_lea.vmem [#allocation3], %s291
        %s293 = smul.u32 16, %s24
        %p294 = scmp.lt.s32.totalorder %s23, 1
        %s295 = scalar_select %p294, %s23, 1
        %p296 = scmp.lt.s32.totalorder %s293, 31
        %s297 = scalar_select %p296, %s293, 31
        %s298 = smul.addr %s295, 32
        %s299 = sadd.s32 %s297, %s298
        %s300 = smul.addr %s299, 4
        %s301 = scalar_lea.vmem %s0, %s300
        %s302 = smul.u32 16, %s24
        %p303 = scmp.lt.s32.totalorder %s23, 1
        %s304 = scalar_select %p303, %s23, 1
        %p305 = scmp.lt.s32.totalorder %s24, 1
        %s306 = scalar_select %p305, %s24, 1
        %s307 = smul.addr %s306, 2
        %s308 = smul.addr %s304, 4
        %s309 = sadd.s32 %s307, %s308
        %s310 = smul.addr %s309, 4
        %s311 = scalar_lea.vmem %s1, %s310
        %p312 = scmp.lt.s32.totalorder %s23, 1
        %s313 = scalar_select %p312, %s23, 1
        %p314 = scmp.lt.s32.totalorder %s24, 1
        %s315 = scalar_select %p314, %s24, 1
        %s316 = smul.addr %s315, 2
        %s317 = smul.addr %s313, 4
        %s318 = sadd.s32 %s316, %s317
        %s319 = smul.addr %s318, 4
        %s320 = scalar_lea.vmem %s2, %s319
        %s321 = smul.u32 16, %s24
        %vm325 = vcmask 24576
        %vm326 = vsmask.f32 256
        %vm327 = vmand %vm325, %vm326
        %v328 = vld [vmem:[#allocation2] sm:$0x1]
        %v329 = vsel %vm327, 0, %v328
        %330 = vst [vmem:[#allocation2] sm:$0x1] %v329
        %v331 = vld [vmem:[%s311] sm:$0xf]
        %v332 = vld [vmem:[%s311 + $0x4] sm:$0xf]
        %vm333 = vsmask.f32 4368
        %vm334 = vmor %vm326, %vm333
        %v336 = vshrl.u32 %v331, 16
        %v338 = vrot.slane %v336, 7
        %v339 = vshll.u32 %v331, 16
        %v341 = vor.u32 %v338, %v339
        %v342 = vrot.slane %v338, 4
        %v344 = vshrl.u32 %v332, 16
        %v346 = vrot.slane %v344, 7
        %v347 = vshll.u32 %v332, 16
        %v349 = vor.u32 %v346, %v347
        %v350 = vsel %vm334, %v342, %v349
        %v351 = vrot.slane %v346, 4
        %vm355 = vcmask 27648
        %vm356 = vsmask.f32 7938
        %vm357 = vmand %vm355, %vm356
        %v358 = vld [vmem:[#allocation2] sm:$0xf]
        %v359 = vsel %vm357, %v341, %v358
        %360 = vst [vmem:[#allocation2] sm:$0xf] %v359
        %vm361 = vcmask 27648
        %362 = vst.msk [vmem:[#allocation2 + $0x4] sm:$0xf] %vm361, %v350
        %v363 = vld [vmem:[#allocation2 + $0x8] sm:$0x1]
        %v364 = vsel %vm327, %v351, %v363
        %365 = vst [vmem:[#allocation2 + $0x8] sm:$0x1] %v364
        %v366 = vld [vmem:[%s301] sm:$0xf]
        %v367 = vld [vmem:[%s301 + $0x4] sm:$0xf]
        %v368 = vld [vmem:[%s301 + $0x8] sm:$0xf]
        %v369 = vld [vmem:[%s301 + $0xc] sm:$0xf]
        %v370 = vld [vmem:[%s301 + $0x10] sm:$0xf]
        %v371 = vld [vmem:[%s301 + $0x14] sm:$0xf]
        %v372 = vld [vmem:[%s301 + $0x18] sm:$0xf]
        %v373 = vld [vmem:[%s301 + $0x1c] sm:$0xf]
        %v374 = vld [vmem:[%s301 + $0x20] sm:$0xf]
        %v375 = vld [vmem:[%s301 + $0x24] sm:$0xf]
        %v376 = vld [vmem:[%s301 + $0x28] sm:$0xf]
        %v377 = vld [vmem:[%s301 + $0x2c] sm:$0xf]
        %v378 = vld [vmem:[%s301 + $0x30] sm:$0xf]
        %v379 = vld [vmem:[%s301 + $0x34] sm:$0xf]
        %v380 = vld [vmem:[%s301 + $0x38] sm:$0xf]
        %v381 = vld [vmem:[%s301 + $0x3c] sm:$0xf]
        %v383 = vshrl.u32 %v366, 16
        %v385 = vrot.slane %v383, 7
        %v386 = vshll.u32 %v366, 16
        %v388 = vor.u32 %v385, %v386
        %v389 = vrot.slane %v385, 4
        %v391 = vshrl.u32 %v367, 16
        %v393 = vrot.slane %v391, 7
        %v394 = vshll.u32 %v367, 16
        %v396 = vor.u32 %v393, %v394
        %v397 = vsel %vm334, %v389, %v396
        %v398 = vrot.slane %v393, 4
        %v400 = vshrl.u32 %v368, 16
        %v402 = vrot.slane %v400, 7
        %v403 = vshll.u32 %v368, 16
        %v405 = vor.u32 %v402, %v403
        %v406 = vsel %vm334, %v398, %v405
        %v407 = vrot.slane %v402, 4
        %v409 = vshrl.u32 %v369, 16
        %v411 = vrot.slane %v409, 7
        %v412 = vshll.u32 %v369, 16
        %v414 = vor.u32 %v411, %v412
        %v415 = vsel %vm334, %v407, %v414
        %v416 = vrot.slane %v411, 4
        %v418 = vshrl.u32 %v370, 16
        %v420 = vrot.slane %v418, 7
        %v421 = vshll.u32 %v370, 16
        %v423 = vor.u32 %v420, %v421
        %v424 = vsel %vm334, %v416, %v423
        %v425 = vrot.slane %v420, 4
        %v427 = vshrl.u32 %v371, 16
        %v429 = vrot.slane %v427, 7
        %v430 = vshll.u32 %v371, 16
        %v432 = vor.u32 %v429, %v430
        %v433 = vsel %vm334, %v425, %v432
        %v434 = vrot.slane %v429, 4
        %v436 = vshrl.u32 %v372, 16
        %v438 = vrot.slane %v436, 7
        %v439 = vshll.u32 %v372, 16
        %v441 = vor.u32 %v438, %v439
        %v442 = vsel %vm334, %v434, %v441
        %v443 = vrot.slane %v438, 4
        %v445 = vshrl.u32 %v373, 16
        %v447 = vrot.slane %v445, 7
        %v448 = vshll.u32 %v373, 16
        %v450 = vor.u32 %v447, %v448
        %v451 = vsel %vm334, %v443, %v450
        %v452 = vrot.slane %v447, 4
        %v454 = vshrl.u32 %v374, 16
        %v456 = vrot.slane %v454, 7
        %v457 = vshll.u32 %v374, 16
        %v459 = vor.u32 %v456, %v457
        %v460 = vsel %vm334, %v452, %v459
        %v461 = vrot.slane %v456, 4
        %v463 = vshrl.u32 %v375, 16
        %v465 = vrot.slane %v463, 7
        %v466 = vshll.u32 %v375, 16
        %v468 = vor.u32 %v465, %v466
        %v469 = vsel %vm334, %v461, %v468
        %v470 = vrot.slane %v465, 4
        %v472 = vshrl.u32 %v376, 16
        %v474 = vrot.slane %v472, 7
        %v475 = vshll.u32 %v376, 16
        %v477 = vor.u32 %v474, %v475
        %v478 = vsel %vm334, %v470, %v477
        %v479 = vrot.slane %v474, 4
        %v481 = vshrl.u32 %v377, 16
        %v483 = vrot.slane %v481, 7
        %v484 = vshll.u32 %v377, 16
        %v486 = vor.u32 %v483, %v484
        %v487 = vsel %vm334, %v479, %v486
        %v488 = vrot.slane %v483, 4
        %v490 = vshrl.u32 %v378, 16
        %v492 = vrot.slane %v490, 7
        %v493 = vshll.u32 %v378, 16
        %v495 = vor.u32 %v492, %v493
        %v496 = vsel %vm334, %v488, %v495
        %v497 = vrot.slane %v492, 4
        %v499 = vshrl.u32 %v379, 16
        %v501 = vrot.slane %v499, 7
        %v502 = vshll.u32 %v379, 16
        %v504 = vor.u32 %v501, %v502
        %v505 = vsel %vm334, %v497, %v504
        %v506 = vrot.slane %v501, 4
        %v508 = vshrl.u32 %v380, 16
        %v510 = vrot.slane %v508, 7
        %v511 = vshll.u32 %v380, 16
        %v513 = vor.u32 %v510, %v511
        %v514 = vsel %vm334, %v506, %v513
        %v515 = vrot.slane %v510, 4
        %v517 = vshrl.u32 %v381, 16
        %v519 = vrot.slane %v517, 7
        %v520 = vshll.u32 %v381, 16
        %v522 = vor.u32 %v519, %v520
        %v523 = vsel %vm334, %v515, %v522
        %v524 = vrot.slane %v519, 4
        %v542 = vld [vmem:[#allocation2 + $0x8] sm:$0xf]
        %v543 = vsel %vm357, %v388, %v542
        %544 = vst [vmem:[#allocation2 + $0x8] sm:$0xf] %v543
        %545 = vst.msk [vmem:[#allocation2 + $0xc] sm:$0xf] %vm361, %v397
        %546 = vst.msk [vmem:[#allocation2 + $0x10] sm:$0xf] %vm361, %v406
        %547 = vst.msk [vmem:[#allocation2 + $0x14] sm:$0xf] %vm361, %v415
        %548 = vst.msk [vmem:[#allocation2 + $0x18] sm:$0xf] %vm361, %v424
        %549 = vst.msk [vmem:[#allocation2 + $0x1c] sm:$0xf] %vm361, %v433
        %550 = vst.msk [vmem:[#allocation2 + $0x20] sm:$0xf] %vm361, %v442
        %551 = vst.msk [vmem:[#allocation2 + $0x24] sm:$0xf] %vm361, %v451
        %552 = vst.msk [vmem:[#allocation2 + $0x28] sm:$0xf] %vm361, %v460
        %553 = vst.msk [vmem:[#allocation2 + $0x2c] sm:$0xf] %vm361, %v469
        %554 = vst.msk [vmem:[#allocation2 + $0x30] sm:$0xf] %vm361, %v478
        %555 = vst.msk [vmem:[#allocation2 + $0x34] sm:$0xf] %vm361, %v487
        %556 = vst.msk [vmem:[#allocation2 + $0x38] sm:$0xf] %vm361, %v496
        %557 = vst.msk [vmem:[#allocation2 + $0x3c] sm:$0xf] %vm361, %v505
        %558 = vst.msk [vmem:[#allocation2 + $0x40] sm:$0xf] %vm361, %v514
        %559 = vst.msk [vmem:[#allocation2 + $0x44] sm:$0xf] %vm361, %v523
        %v560 = vld [vmem:[#allocation2 + $0x48] sm:$0x1]
        %v561 = vsel %vm327, %v524, %v560
        %562 = vst [vmem:[#allocation2 + $0x48] sm:$0x1] %v561
        %v563 = vld [vmem:[%s320] sm:$0xf]
        %v564 = vld [vmem:[%s320 + $0x4] sm:$0xf]
        %v566 = vshrl.u32 %v563, 16
        %v568 = vrot.slane %v566, 7
        %v569 = vshll.u32 %v563, 16
        %v571 = vor.u32 %v568, %v569
        %v572 = vrot.slane %v568, 4
        %v574 = vshrl.u32 %v564, 16
        %v576 = vrot.slane %v574, 7
        %v577 = vshll.u32 %v564, 16
        %v579 = vor.u32 %v576, %v577
        %v580 = vsel %vm334, %v572, %v579
        %v581 = vrot.slane %v576, 4
        %v585 = vld [vmem:[#allocation2 + $0x48] sm:$0xf]
        %v586 = vsel %vm357, %v571, %v585
        %587 = vst [vmem:[#allocation2 + $0x48] sm:$0xf] %v586
        %588 = vst.msk [vmem:[#allocation2 + $0x4c] sm:$0xf] %vm361, %v580
        %v589 = vld [vmem:[#allocation2 + $0x50] sm:$0x1]
        %v590 = vsel %vm327, %v581, %v589
        %591 = vst [vmem:[#allocation2 + $0x50] sm:$0x1] %v590
        %vm592 = vmand %vm325, %vm356
        %v593 = vld [vmem:[#allocation2 + $0x50] sm:$0x1]
        %v594 = vsel %vm592, 0, %v593
        %595 = vst [vmem:[#allocation2 + $0x50] sm:$0x1] %v594
        %v596 = vlaneseq
        %v597 = vshrl.u32 %v596, 7
        %v598 = vadd.s32 %v597, 8
        %v599 = vadd.s32 %v597, 16
        %v600 = vadd.s32 %v597, 24
        %v601 = vadd.s32 %v597, 32
        %v602 = vadd.s32 %v597, 40
        %v603 = vadd.s32 %v597, 48
        %v604 = vadd.s32 %v597, 56
        %v605 = vadd.s32 %v597, 64
        %v606 = vadd.s32 %v597, 72
        %v607 = vadd.s32 %v597, 80
        %v608 = vadd.s32 %v597, 88
        %v609 = vadd.s32 %v597, 96
        %v610 = vadd.s32 %v597, 104
        %v611 = vadd.s32 %v597, 112
        %v612 = vadd.s32 %v597, 120
        %vm613 = vcmp.lt.s32.totalorder %v597, 0
        %v614 = vsub.s32 0, %v597
        %v615 = vsel %vm613, %v614, %v597
        %v616 = vshrl.u32 %v615, 4
        %v617 = vand.u32 %v615, 15
        %v618 = vsub.s32 0, %v617
        %v619 = vsel %vm613, %v618, %v617
        %vm620 = vcmp.lt.s32.totalorder %v598, 0
        %v621 = vsub.s32 0, %v598
        %v622 = vsel %vm620, %v621, %v598
        %v623 = vshrl.u32 %v622, 4
        %v624 = vand.u32 %v622, 15
        %v625 = vsub.s32 0, %v624
        %v626 = vsel %vm620, %v625, %v624
        %vm627 = vcmp.lt.s32.totalorder %v599, 0
        %v628 = vsub.s32 0, %v599
        %v629 = vsel %vm627, %v628, %v599
        %v630 = vshrl.u32 %v629, 4
        %v631 = vand.u32 %v629, 15
        %v632 = vsub.s32 0, %v631
        %v633 = vsel %vm627, %v632, %v631
        %vm634 = vcmp.lt.s32.totalorder %v600, 0
        %v635 = vsub.s32 0, %v600
        %v636 = vsel %vm634, %v635, %v600
        %v637 = vshrl.u32 %v636, 4
        %v638 = vand.u32 %v636, 15
        %v639 = vsub.s32 0, %v638
        %v640 = vsel %vm634, %v639, %v638
        %vm641 = vcmp.lt.s32.totalorder %v601, 0
        %v642 = vsub.s32 0, %v601
        %v643 = vsel %vm641, %v642, %v601
        %v644 = vshrl.u32 %v643, 4
        %v645 = vand.u32 %v643, 15
        %v646 = vsub.s32 0, %v645
        %v647 = vsel %vm641, %v646, %v645
        %vm648 = vcmp.lt.s32.totalorder %v602, 0
        %v649 = vsub.s32 0, %v602
        %v650 = vsel %vm648, %v649, %v602
        %v651 = vshrl.u32 %v650, 4
        %v652 = vand.u32 %v650, 15
        %v653 = vsub.s32 0, %v652
        %v654 = vsel %vm648, %v653, %v652
        %vm655 = vcmp.lt.s32.totalorder %v603, 0
        %v656 = vsub.s32 0, %v603
        %v657 = vsel %vm655, %v656, %v603
        %v658 = vshrl.u32 %v657, 4
        %v659 = vand.u32 %v657, 15
        %v660 = vsub.s32 0, %v659
        %v661 = vsel %vm655, %v660, %v659
        %vm662 = vcmp.lt.s32.totalorder %v604, 0
        %v663 = vsub.s32 0, %v604
        %v664 = vsel %vm662, %v663, %v604
        %v665 = vshrl.u32 %v664, 4
        %v666 = vand.u32 %v664, 15
        %v667 = vsub.s32 0, %v666
        %v668 = vsel %vm662, %v667, %v666
        %vm669 = vcmp.lt.s32.totalorder %v605, 0
        %v670 = vsub.s32 0, %v605
        %v671 = vsel %vm669, %v670, %v605
        %v672 = vshrl.u32 %v671, 4
        %v673 = vand.u32 %v671, 15
        %v674 = vsub.s32 0, %v673
        %v675 = vsel %vm669, %v674, %v673
        %vm676 = vcmp.lt.s32.totalorder %v606, 0
        %v677 = vsub.s32 0, %v606
        %v678 = vsel %vm676, %v677, %v606
        %v679 = vshrl.u32 %v678, 4
        %v680 = vand.u32 %v678, 15
        %v681 = vsub.s32 0, %v680
        %v682 = vsel %vm676, %v681, %v680
        %vm683 = vcmp.lt.s32.totalorder %v607, 0
        %v684 = vsub.s32 0, %v607
        %v685 = vsel %vm683, %v684, %v607
        %v686 = vshrl.u32 %v685, 4
        %v687 = vand.u32 %v685, 15
        %v688 = vsub.s32 0, %v687
        %v689 = vsel %vm683, %v688, %v687
        %vm690 = vcmp.lt.s32.totalorder %v608, 0
        %v691 = vsub.s32 0, %v608
        %v692 = vsel %vm690, %v691, %v608
        %v693 = vshrl.u32 %v692, 4
        %v694 = vand.u32 %v692, 15
        %v695 = vsub.s32 0, %v694
        %v696 = vsel %vm690, %v695, %v694
        %vm697 = vcmp.lt.s32.totalorder %v609, 0
        %v698 = vsub.s32 0, %v609
        %v699 = vsel %vm697, %v698, %v609
        %v700 = vshrl.u32 %v699, 4
        %v701 = vand.u32 %v699, 15
        %v702 = vsub.s32 0, %v701
        %v703 = vsel %vm697, %v702, %v701
        %vm704 = vcmp.lt.s32.totalorder %v610, 0
        %v705 = vsub.s32 0, %v610
        %v706 = vsel %vm704, %v705, %v610
        %v707 = vshrl.u32 %v706, 4
        %v708 = vand.u32 %v706, 15
        %v709 = vsub.s32 0, %v708
        %v710 = vsel %vm704, %v709, %v708
        %vm711 = vcmp.lt.s32.totalorder %v611, 0
        %v712 = vsub.s32 0, %v611
        %v713 = vsel %vm711, %v712, %v611
        %v714 = vshrl.u32 %v713, 4
        %v715 = vand.u32 %v713, 15
        %v716 = vsub.s32 0, %v715
        %v717 = vsel %vm711, %v716, %v715
        %vm718 = vcmp.lt.s32.totalorder %v612, 0
        %v719 = vsub.s32 0, %v612
        %v720 = vsel %vm718, %v719, %v612
        %v721 = vshrl.u32 %v720, 4
        %v722 = vand.u32 %v720, 15
        %v723 = vsub.s32 0, %v722
        %v724 = vsel %vm718, %v723, %v722
        %vm725 = vcmp.ne.s32.totalorder %v619, 0
        %vm726 = vcmp.ne.s32.totalorder %v626, 0
        %vm727 = vcmp.ne.s32.totalorder %v633, 0
        %vm728 = vcmp.ne.s32.totalorder %v640, 0
        %vm729 = vcmp.ne.s32.totalorder %v647, 0
        %vm730 = vcmp.ne.s32.totalorder %v654, 0
        %vm731 = vcmp.ne.s32.totalorder %v661, 0
        %vm732 = vcmp.ne.s32.totalorder %v668, 0
        %vm733 = vcmp.ne.s32.totalorder %v675, 0
        %vm734 = vcmp.ne.s32.totalorder %v682, 0
        %vm735 = vcmp.ne.s32.totalorder %v689, 0
        %vm736 = vcmp.ne.s32.totalorder %v696, 0
        %vm737 = vcmp.ne.s32.totalorder %v703, 0
        %vm738 = vcmp.ne.s32.totalorder %v710, 0
        %vm739 = vcmp.ne.s32.totalorder %v717, 0
        %vm740 = vcmp.ne.s32.totalorder %v724, 0
        %vm741 = vcmp.lt.s32.totalorder %v619, 0
        %vm742 = vcmp.lt.s32.totalorder %v626, 0
        %vm743 = vcmp.lt.s32.totalorder %v633, 0
        %vm744 = vcmp.lt.s32.totalorder %v640, 0
        %vm745 = vcmp.lt.s32.totalorder %v647, 0
        %vm746 = vcmp.lt.s32.totalorder %v654, 0
        %vm747 = vcmp.lt.s32.totalorder %v661, 0
        %vm748 = vcmp.lt.s32.totalorder %v668, 0
        %vm749 = vcmp.lt.s32.totalorder %v675, 0
        %vm750 = vcmp.lt.s32.totalorder %v682, 0
        %vm751 = vcmp.lt.s32.totalorder %v689, 0
        %vm752 = vcmp.lt.s32.totalorder %v696, 0
        %vm753 = vcmp.lt.s32.totalorder %v703, 0
        %vm754 = vcmp.lt.s32.totalorder %v710, 0
        %vm755 = vcmp.lt.s32.totalorder %v717, 0
        %vm756 = vcmp.lt.s32.totalorder %v724, 0
        %vm757 = vmand %vm741, %vm725
        %vm758 = vmand %vm742, %vm726
        %vm759 = vmand %vm743, %vm727
        %vm760 = vmand %vm744, %vm728
        %vm761 = vmand %vm745, %vm729
        %vm762 = vmand %vm746, %vm730
        %vm763 = vmand %vm747, %vm731
        %vm764 = vmand %vm748, %vm732
        %vm765 = vmand %vm749, %vm733
        %vm766 = vmand %vm750, %vm734
        %vm767 = vmand %vm751, %vm735
        %vm768 = vmand %vm752, %vm736
        %vm769 = vmand %vm753, %vm737
        %vm770 = vmand %vm754, %vm738
        %vm771 = vmand %vm755, %vm739
        %vm772 = vmand %vm756, %vm740
        %v773 = vadd.s32 %v619, 16
        %v774 = vadd.s32 %v626, 16
        %v775 = vadd.s32 %v633, 16
        %v776 = vadd.s32 %v640, 16
        %v777 = vadd.s32 %v647, 16
        %v778 = vadd.s32 %v654, 16
        %v779 = vadd.s32 %v661, 16
        %v780 = vadd.s32 %v668, 16
        %v781 = vadd.s32 %v675, 16
        %v782 = vadd.s32 %v682, 16
        %v783 = vadd.s32 %v689, 16
        %v784 = vadd.s32 %v696, 16
        %v785 = vadd.s32 %v703, 16
        %v786 = vadd.s32 %v710, 16
        %v787 = vadd.s32 %v717, 16
        %v788 = vadd.s32 %v724, 16
        %v789 = vsel %vm757, %v773, %v619
        %v790 = vsel %vm758, %v774, %v626
        %v791 = vsel %vm759, %v775, %v633
        %v792 = vsel %vm760, %v776, %v640
        %v793 = vsel %vm761, %v777, %v647
        %v794 = vsel %vm762, %v778, %v654
        %v795 = vsel %vm763, %v779, %v661
        %v796 = vsel %vm764, %v780, %v668
        %v797 = vsel %vm765, %v781, %v675
        %v798 = vsel %vm766, %v782, %v682
        %v799 = vsel %vm767, %v783, %v689
        %v800 = vsel %vm768, %v784, %v696
        %v801 = vsel %vm769, %v785, %v703
        %v802 = vsel %vm770, %v786, %v710
        %v803 = vsel %vm771, %v787, %v717
        %v804 = vsel %vm772, %v788, %v724
        %vm805 = vcmp.ne.s32.totalorder %v789, 0
        %vm806 = vcmp.ne.s32.totalorder %v790, 0
        %vm807 = vcmp.ne.s32.totalorder %v791, 0
        %vm808 = vcmp.ne.s32.totalorder %v792, 0
        %vm809 = vcmp.ne.s32.totalorder %v793, 0
        %vm810 = vcmp.ne.s32.totalorder %v794, 0
        %vm811 = vcmp.ne.s32.totalorder %v795, 0
        %vm812 = vcmp.ne.s32.totalorder %v796, 0
        %vm813 = vcmp.ne.s32.totalorder %v797, 0
        %vm814 = vcmp.ne.s32.totalorder %v798, 0
        %vm815 = vcmp.ne.s32.totalorder %v799, 0
        %vm816 = vcmp.ne.s32.totalorder %v800, 0
        %vm817 = vcmp.ne.s32.totalorder %v801, 0
        %vm818 = vcmp.ne.s32.totalorder %v802, 0
        %vm819 = vcmp.ne.s32.totalorder %v803, 0
        %vm820 = vcmp.ne.s32.totalorder %v804, 0
        %v821 = vsel %vm805, 1, 0
        %v822 = vsel %vm806, 1, 0
        %v823 = vsel %vm807, 1, 0
        %v824 = vsel %vm808, 1, 0
        %v825 = vsel %vm809, 1, 0
        %v826 = vsel %vm810, 1, 0
        %v827 = vsel %vm811, 1, 0
        %v828 = vsel %vm812, 1, 0
        %v829 = vsel %vm813, 1, 0
        %v830 = vsel %vm814, 1, 0
        %v831 = vsel %vm815, 1, 0
        %v832 = vsel %vm816, 1, 0
        %v833 = vsel %vm817, 1, 0
        %v834 = vsel %vm818, 1, 0
        %v835 = vsel %vm819, 1, 0
        %v836 = vsel %vm820, 1, 0
        %vm837 = vcmp.eq.s32.totalorder %v821, 1
        %vm838 = vcmp.eq.s32.totalorder %v822, 1
        %vm839 = vcmp.eq.s32.totalorder %v823, 1
        %vm840 = vcmp.eq.s32.totalorder %v824, 1
        %vm841 = vcmp.eq.s32.totalorder %v825, 1
        %vm842 = vcmp.eq.s32.totalorder %v826, 1
        %vm843 = vcmp.eq.s32.totalorder %v827, 1
        %vm844 = vcmp.eq.s32.totalorder %v828, 1
        %vm845 = vcmp.eq.s32.totalorder %v829, 1
        %vm846 = vcmp.eq.s32.totalorder %v830, 1
        %vm847 = vcmp.eq.s32.totalorder %v831, 1
        %vm848 = vcmp.eq.s32.totalorder %v832, 1
        %vm849 = vcmp.eq.s32.totalorder %v833, 1
        %vm850 = vcmp.eq.s32.totalorder %v834, 1
        %vm851 = vcmp.eq.s32.totalorder %v835, 1
        %vm852 = vcmp.eq.s32.totalorder %v836, 1
        %vm853 = vcmp.ne.s32.totalorder %v789, 15
        %vm854 = vcmp.ne.s32.totalorder %v790, 15
        %vm855 = vcmp.ne.s32.totalorder %v791, 15
        %vm856 = vcmp.ne.s32.totalorder %v792, 15
        %vm857 = vcmp.ne.s32.totalorder %v793, 15
        %vm858 = vcmp.ne.s32.totalorder %v794, 15
        %vm859 = vcmp.ne.s32.totalorder %v795, 15
        %vm860 = vcmp.ne.s32.totalorder %v796, 15
        %vm861 = vcmp.ne.s32.totalorder %v797, 15
        %vm862 = vcmp.ne.s32.totalorder %v798, 15
        %vm863 = vcmp.ne.s32.totalorder %v799, 15
        %vm864 = vcmp.ne.s32.totalorder %v800, 15
        %vm865 = vcmp.ne.s32.totalorder %v801, 15
        %vm866 = vcmp.ne.s32.totalorder %v802, 15
        %vm867 = vcmp.ne.s32.totalorder %v803, 15
        %vm868 = vcmp.ne.s32.totalorder %v804, 15
        %v869 = vsel %vm853, 1, 0
        %v870 = vsel %vm854, 1, 0
        %v871 = vsel %vm855, 1, 0
        %v872 = vsel %vm856, 1, 0
        %v873 = vsel %vm857, 1, 0
        %v874 = vsel %vm858, 1, 0
        %v875 = vsel %vm859, 1, 0
        %v876 = vsel %vm860, 1, 0
        %v877 = vsel %vm861, 1, 0
        %v878 = vsel %vm862, 1, 0
        %v879 = vsel %vm863, 1, 0
        %v880 = vsel %vm864, 1, 0
        %v881 = vsel %vm865, 1, 0
        %v882 = vsel %vm866, 1, 0
        %v883 = vsel %vm867, 1, 0
        %v884 = vsel %vm868, 1, 0
        %vm885 = vcmp.eq.s32.totalorder %v869, 1
        %vm886 = vcmp.eq.s32.totalorder %v870, 1
        %vm887 = vcmp.eq.s32.totalorder %v871, 1
        %vm888 = vcmp.eq.s32.totalorder %v872, 1
        %vm889 = vcmp.eq.s32.totalorder %v873, 1
        %vm890 = vcmp.eq.s32.totalorder %v874, 1
        %vm891 = vcmp.eq.s32.totalorder %v875, 1
        %vm892 = vcmp.eq.s32.totalorder %v876, 1
        %vm893 = vcmp.eq.s32.totalorder %v877, 1
        %vm894 = vcmp.eq.s32.totalorder %v878, 1
        %vm895 = vcmp.eq.s32.totalorder %v879, 1
        %vm896 = vcmp.eq.s32.totalorder %v880, 1
        %vm897 = vcmp.eq.s32.totalorder %v881, 1
        %vm898 = vcmp.eq.s32.totalorder %v882, 1
        %vm899 = vcmp.eq.s32.totalorder %v883, 1
        %vm900 = vcmp.eq.s32.totalorder %v884, 1
        %v901 = vld [vmem:[#allocation2] sm:$0xf]
        %v902 = vld [vmem:[#allocation2 + $0x4] sm:$0xf]
        %v903 = vld [vmem:[#allocation2 + $0x8] sm:$0xf]
        %v904 = vld [vmem:[#allocation2 + $0xc] sm:$0xf]
        %v905 = vld [vmem:[#allocation2 + $0x10] sm:$0xf]
        %v906 = vld [vmem:[#allocation2 + $0x14] sm:$0xf]
        %v907 = vld [vmem:[#allocation2 + $0x18] sm:$0xf]
        %v908 = vld [vmem:[#allocation2 + $0x1c] sm:$0xf]
        %v909 = vld [vmem:[#allocation2 + $0x20] sm:$0xf]
        %v910 = vld [vmem:[#allocation2 + $0x24] sm:$0xf]
        %v911 = vld [vmem:[#allocation2 + $0x28] sm:$0xf]
        %v912 = vld [vmem:[#allocation2 + $0x2c] sm:$0xf]
        %v913 = vld [vmem:[#allocation2 + $0x30] sm:$0xf]
        %v914 = vld [vmem:[#allocation2 + $0x34] sm:$0xf]
        %v915 = vld [vmem:[#allocation2 + $0x38] sm:$0xf]
        %v916 = vld [vmem:[#allocation2 + $0x3c] sm:$0xf]
        %vm917 = vmpackc.low %vm837, %vm837
        %vm918 = vmpackc.low %vm838, %vm838
        %vm919 = vmpackc.low %vm839, %vm839
        %vm920 = vmpackc.low %vm840, %vm840
        %vm921 = vmpackc.low %vm841, %vm841
        %vm922 = vmpackc.low %vm842, %vm842
        %vm923 = vmpackc.low %vm843, %vm843
        %vm924 = vmpackc.low %vm844, %vm844
        %vm925 = vmpackc.low %vm845, %vm845
        %vm926 = vmpackc.low %vm846, %vm846
        %vm927 = vmpackc.low %vm847, %vm847
        %vm928 = vmpackc.low %vm848, %vm848
        %vm929 = vmpackc.low %vm849, %vm849
        %vm930 = vmpackc.low %vm850, %vm850
        %vm931 = vmpackc.low %vm851, %vm851
        %vm932 = vmpackc.low %vm852, %vm852
        %v933 = vsel %vm917, %v901, 0
        %v934 = vsel %vm918, %v902, 0
        %v935 = vsel %vm919, %v903, 0
        %v936 = vsel %vm920, %v904, 0
        %v937 = vsel %vm921, %v905, 0
        %v938 = vsel %vm922, %v906, 0
        %v939 = vsel %vm923, %v907, 0
        %v940 = vsel %vm924, %v908, 0
        %v941 = vsel %vm925, %v909, 0
        %v942 = vsel %vm926, %v910, 0
        %v943 = vsel %vm927, %v911, 0
        %v944 = vsel %vm928, %v912, 0
        %v945 = vsel %vm929, %v913, 0
        %v946 = vsel %vm930, %v914, 0
        %v947 = vsel %vm931, %v915, 0
        %v948 = vsel %vm932, %v916, 0
        %v949 = vld [vmem:[%s3] sm:$0x3]
        %v950 = vld [vmem:[#allocation2 + $0x40] sm:$0x1]
        %s951 = scalar_lea.vmem %s3, 2
        %v952 = vld [vmem:[%s951] sm:$0x3]
        %v970 = vunpack.c.l.b16 %v901
        %v971 = vunpack.c.l.b16 %v902
        %v972 = vunpack.c.l.b16 %v903
        %v973 = vunpack.c.l.b16 %v904
        %v974 = vunpack.c.l.b16 %v905
        %v975 = vunpack.c.l.b16 %v906
        %v976 = vunpack.c.l.b16 %v907
        %v977 = vunpack.c.l.b16 %v908
        %v978 = vunpack.c.l.b16 %v909
        %v979 = vunpack.c.l.b16 %v910
        %v980 = vunpack.c.l.b16 %v911
        %v981 = vunpack.c.l.b16 %v912
        %v982 = vunpack.c.l.b16 %v913
        %v983 = vunpack.c.l.b16 %v914
        %v984 = vunpack.c.l.b16 %v915
        %v985 = vunpack.c.l.b16 %v916
        %v986 = vunpack.c.l.b16 %v950
        %v987 = vpack.c.b16 %v971, %v970
        %v988 = vpack.c.b16 %v973, %v972
        %v989 = vpack.c.b16 %v975, %v974
        %v990 = vpack.c.b16 %v977, %v976
        %v991 = vpack.c.b16 %v979, %v978
        %v992 = vpack.c.b16 %v981, %v980
        %v993 = vpack.c.b16 %v983, %v982
        %v994 = vpack.c.b16 %v985, %v984
        %v995 = vpack.c.b16 %v986, %v986
        %vm996 = vsmask.f32 7424
        %v998 = vshrl.u32 %v987, 16
        %v1000 = vshll.u32 %v987, 16
        %v1002 = vrot.slane %v1000, 1
        %v1003 = vor.u32 %v998, %v1002
        %v1005 = vshll.u32 %v988, 16
        %v1007 = vrot.slane %v1005, 1
        %v1008 = vsel %vm996, %v1003, %v1007
        %v1009 = vshrl.u32 %v988, 16
        %v1011 = vor.u32 %v1009, %v1007
        %v1013 = vshll.u32 %v989, 16
        %v1015 = vrot.slane %v1013, 1
        %v1016 = vsel %vm996, %v1011, %v1015
        %v1017 = vshrl.u32 %v989, 16
        %v1019 = vor.u32 %v1017, %v1015
        %v1021 = vshll.u32 %v990, 16
        %v1023 = vrot.slane %v1021, 1
        %v1024 = vsel %vm996, %v1019, %v1023
        %v1025 = vshrl.u32 %v990, 16
        %v1027 = vor.u32 %v1025, %v1023
        %v1029 = vshll.u32 %v991, 16
        %v1031 = vrot.slane %v1029, 1
        %v1032 = vsel %vm996, %v1027, %v1031
        %v1033 = vshrl.u32 %v991, 16
        %v1035 = vor.u32 %v1033, %v1031
        %v1037 = vshll.u32 %v992, 16
        %v1039 = vrot.slane %v1037, 1
        %v1040 = vsel %vm996, %v1035, %v1039
        %v1041 = vshrl.u32 %v992, 16
        %v1043 = vor.u32 %v1041, %v1039
        %v1045 = vshll.u32 %v993, 16
        %v1047 = vrot.slane %v1045, 1
        %v1048 = vsel %vm996, %v1043, %v1047
        %v1049 = vshrl.u32 %v993, 16
        %v1051 = vor.u32 %v1049, %v1047
        %v1053 = vshll.u32 %v994, 16
        %v1055 = vrot.slane %v1053, 1
        %v1056 = vsel %vm996, %v1051, %v1055
        %v1057 = vshrl.u32 %v994, 16
        %v1059 = vor.u32 %v1057, %v1055
        %v1061 = vshll.u32 %v995, 16
        %v1063 = vrot.slane %v1061, 1
        %v1064 = vsel %vm996, %v1059, %v1063
        %vm1065 = vcmask 31744
        %v1067 = vsel %vm1065, %v1008, 0
        %v1070 = vsel %vm1065, %v1016, 0
        %v1073 = vsel %vm1065, %v1024, 0
        %v1076 = vsel %vm1065, %v1032, 0
        %v1079 = vsel %vm1065, %v1040, 0
        %v1082 = vsel %vm1065, %v1048, 0
        %v1085 = vsel %vm1065, %v1056, 0
        %v1088 = vsel %vm1065, %v1064, 0
        %vm1090 = vcmask 1041408
        %v1092 = vsel %vm1090, %v952, 0
        %1094 = vmatprep.subr.bf16.mxu0 0
        %1095 = vmatpush1.bf16.msra.mxu0 %v1092
        %1096 = vmatprep.subr.bf16.mxu0 0
        %1097 = vmatpush1.bf16.msra.mxu0 0
        %1098 = vmatprep.subr.bf16.mxu0 0
        %1099 = vmatpush1.bf16.msra.mxu0 0
        %1100 = vmatprep.subr.bf16.mxu0 0
        %1101 = vmatpush1.bf16.msra.mxu0 0
        %1102 = vmatprep.subr.bf16.mxu0 0
        %1103 = vmatpush1.bf16.msra.mxu0 0
        %1104 = vmatprep.subr.bf16.mxu0 0
        %1105 = vmatpush1.bf16.msra.mxu0 0
        %1106 = vmatprep.subr.bf16.mxu0 0
        %1107 = vmatpush1.bf16.msra.mxu0 0
        %1108 = vmatprep.subr.bf16.mxu0 0
        %1109 = vmatpush1.bf16.msra.mxu0 0
        %1110 = vmatprep.subr.bf16.mxu0 0
        %1111 = vmatpush1.bf16.msra.mxu0 0
        %1112 = vmatprep.subr.bf16.mxu0 0
        %1113 = vmatpush1.bf16.msra.mxu0 0
        %1114 = vmatprep.subr.bf16.mxu0 0
        %1115 = vmatpush1.bf16.msra.mxu0 0
        %1116 = vmatprep.subr.bf16.mxu0 0
        %1117 = vmatpush1.bf16.msra.mxu0 0
        %1118 = vmatprep.subr.bf16.mxu0 0
        %1119 = vmatpush1.bf16.msra.mxu0 0
        %1120 = vmatprep.subr.bf16.mxu0 0
        %1121 = vmatpush1.bf16.msra.mxu0 0
        %1122 = vmatprep.subr.bf16.mxu0 0
        %1123 = vmatpush1.bf16.msra.mxu0 0
        %1124 = vmatprep.subr.bf16.mxu0 0
        %1125 = vmatpush1.bf16.msra.mxu0 0
        %1126 = vmatprep.mubr.bf16.mxu0 0
        %1127 = vmatmul.mubr.bf16.gmra.mrb[0].mxu0 %v1067
        %v1128 = vpop.f32.mrb[0].mxu0
        %v1129 = vadd.f32 0.0, %v1128
        %v1130 = vpop.f32.mrb[0].mxu0
        %v1131 = vpop.f32.mrb[0].mxu0
        %v1132 = vadd.f32 0.0, %v1131
        %v1133 = vpop.f32.mrb[0].mxu0
        %1134 = vmatprep.mubr.bf16.mxu0 0
        %1135 = vmatmul.mubr.bf16.gmra.mrb[0].mxu0 %v1070
        %v1136 = vpop.f32.mrb[0].mxu0
        %v1137 = vadd.f32 0.0, %v1136
        %v1138 = vpop.f32.mrb[0].mxu0
        %v1139 = vpop.f32.mrb[0].mxu0
        %v1140 = vadd.f32 0.0, %v1139
        %v1141 = vpop.f32.mrb[0].mxu0
        %1142 = vmatprep.mubr.bf16.mxu0 0
        %1143 = vmatmul.mubr.bf16.gmra.mrb[0].mxu0 %v1073
        %v1144 = vpop.f32.mrb[0].mxu0
        %v1145 = vadd.f32 0.0, %v1144
        %v1146 = vpop.f32.mrb[0].mxu0
        %v1147 = vpop.f32.mrb[0].mxu0
        %v1148 = vadd.f32 0.0, %v1147
        %v1149 = vpop.f32.mrb[0].mxu0
        %1150 = vmatprep.mubr.bf16.mxu0 0
        %1151 = vmatmul.mubr.bf16.gmra.mrb[0].mxu0 %v1076
        %v1152 = vpop.f32.mrb[0].mxu0
        %v1153 = vadd.f32 0.0, %v1152
        %v1154 = vpop.f32.mrb[0].mxu0
        %v1155 = vpop.f32.mrb[0].mxu0
        %v1156 = vadd.f32 0.0, %v1155
        %v1157 = vpop.f32.mrb[0].mxu0
        %1158 = vmatprep.mubr.bf16.mxu0 0
        %1159 = vmatmul.mubr.bf16.gmra.mrb[0].mxu0 %v1079
        %v1160 = vpop.f32.mrb[0].mxu0
        %v1161 = vadd.f32 0.0, %v1160
        %v1162 = vpop.f32.mrb[0].mxu0
        %v1163 = vpop.f32.mrb[0].mxu0
        %v1164 = vadd.f32 0.0, %v1163
        %v1165 = vpop.f32.mrb[0].mxu0
        %1166 = vmatprep.mubr.bf16.mxu0 0
        %1167 = vmatmul.mubr.bf16.gmra.mrb[0].mxu0 %v1082
        %v1168 = vpop.f32.mrb[0].mxu0
        %v1169 = vadd.f32 0.0, %v1168
        %v1170 = vpop.f32.mrb[0].mxu0
        %v1171 = vpop.f32.mrb[0].mxu0
        %v1172 = vadd.f32 0.0, %v1171
        %v1173 = vpop.f32.mrb[0].mxu0
        %1174 = vmatprep.mubr.bf16.mxu0 0
        %1175 = vmatmul.mubr.bf16.gmra.mrb[0].mxu0 %v1085
        %v1176 = vpop.f32.mrb[0].mxu0
        %v1177 = vadd.f32 0.0, %v1176
        %v1178 = vpop.f32.mrb[0].mxu0
        %v1179 = vpop.f32.mrb[0].mxu0
        %v1180 = vadd.f32 0.0, %v1179
        %v1181 = vpop.f32.mrb[0].mxu0
        %1182 = vmatprep.mubr.bf16.mxu0 0
        %1183 = vmatmul.mubr.bf16.gmra.mrb[0].mxu0 %v1088
        %v1184 = vpop.f32.mrb[0].mxu0
        %v1185 = vadd.f32 0.0, %v1184
        %v1186 = vpop.f32.mrb[0].mxu0
        %v1187 = vpop.f32.mrb[0].mxu0
        %v1188 = vadd.f32 0.0, %v1187
        %v1189 = vpop.f32.mrb[0].mxu0
        %1190 = vdwg.mxu0
        %v1207 = vunpack.c.l.b16 %v933
        %v1208 = vunpack.c.l.b16 %v934
        %v1209 = vunpack.c.l.b16 %v935
        %v1210 = vunpack.c.l.b16 %v936
        %v1211 = vunpack.c.l.b16 %v937
        %v1212 = vunpack.c.l.b16 %v938
        %v1213 = vunpack.c.l.b16 %v939
        %v1214 = vunpack.c.l.b16 %v940
        %v1215 = vunpack.c.l.b16 %v941
        %v1216 = vunpack.c.l.b16 %v942
        %v1217 = vunpack.c.l.b16 %v943
        %v1218 = vunpack.c.l.b16 %v944
        %v1219 = vunpack.c.l.b16 %v945
        %v1220 = vunpack.c.l.b16 %v946
        %v1221 = vunpack.c.l.b16 %v947
        %v1222 = vunpack.c.l.b16 %v948
        %v1223 = vpack.c.b16 %v1208, %v1207
        %v1224 = vpack.c.b16 %v1210, %v1209
        %v1225 = vpack.c.b16 %v1212, %v1211
        %v1226 = vpack.c.b16 %v1214, %v1213
        %v1227 = vpack.c.b16 %v1216, %v1215
        %v1228 = vpack.c.b16 %v1218, %v1217
        %v1229 = vpack.c.b16 %v1220, %v1219
        %v1230 = vpack.c.b16 %v1222, %v1221
        %v1232 = vsel %vm1065, %v1223, 0
        %v1235 = vsel %vm1065, %v1224, 0
        %v1238 = vsel %vm1065, %v1225, 0
        %v1241 = vsel %vm1065, %v1226, 0
        %v1244 = vsel %vm1065, %v1227, 0
        %v1247 = vsel %vm1065, %v1228, 0
        %v1250 = vsel %vm1065, %v1229, 0
        %v1253 = vsel %vm1065, %v1230, 0
        %v1256 = vsel %vm1090, %v949, 0
        %1258 = vmatprep.subr.bf16.mxu0 0
        %1259 = vmatpush1.bf16.msra.mxu0 %v1256
        %1260 = vmatprep.subr.bf16.mxu0 0
        %1261 = vmatpush1.bf16.msra.mxu0 0
        %1262 = vmatprep.subr.bf16.mxu0 0
        %1263 = vmatpush1.bf16.msra.mxu0 0
        %1264 = vmatprep.subr.bf16.mxu0 0
        %1265 = vmatpush1.bf16.msra.mxu0 0
        %1266 = vmatprep.subr.bf16.mxu0 0
        %1267 = vmatpush1.bf16.msra.mxu0 0
        %1268 = vmatprep.subr.bf16.mxu0 0
        %1269 = vmatpush1.bf16.msra.mxu0 0
        %1270 = vmatprep.subr.bf16.mxu0 0
        %1271 = vmatpush1.bf16.msra.mxu0 0
        %1272 = vmatprep.subr.bf16.mxu0 0
        %1273 = vmatpush1.bf16.msra.mxu0 0
        %1274 = vmatprep.subr.bf16.mxu0 0
        %1275 = vmatpush1.bf16.msra.mxu0 0
        %1276 = vmatprep.subr.bf16.mxu0 0
        %1277 = vmatpush1.bf16.msra.mxu0 0
        %1278 = vmatprep.subr.bf16.mxu0 0
        %1279 = vmatpush1.bf16.msra.mxu0 0
        %1280 = vmatprep.subr.bf16.mxu0 0
        %1281 = vmatpush1.bf16.msra.mxu0 0
        %1282 = vmatprep.subr.bf16.mxu0 0
        %1283 = vmatpush1.bf16.msra.mxu0 0
        %1284 = vmatprep.subr.bf16.mxu0 0
        %1285 = vmatpush1.bf16.msra.mxu0 0
        %1286 = vmatprep.subr.bf16.mxu0 0
        %1287 = vmatpush1.bf16.msra.mxu0 0
        %1288 = vmatprep.subr.bf16.mxu0 0
        %1289 = vmatpush1.bf16.msra.mxu0 0
        %1290 = vmatprep.mubr.bf16.mxu0 0
        %1291 = vmatmul.mubr.bf16.gmra.mrb[0].mxu0 %v1232
        %v1292 = vpop.f32.mrb[0].mxu0
        %v1293 = vadd.f32 %v1129, %v1292
        %v1294 = vpop.f32.mrb[0].mxu0
        %v1295 = vpop.f32.mrb[0].mxu0
        %v1296 = vadd.f32 %v1132, %v1295
        %v1297 = vpop.f32.mrb[0].mxu0
        %1298 = vmatprep.mubr.bf16.mxu0 0
        %1299 = vmatmul.mubr.bf16.gmra.mrb[0].mxu0 %v1235
        %v1300 = vpop.f32.mrb[0].mxu0
        %v1301 = vadd.f32 %v1137, %v1300
        %v1302 = vpop.f32.mrb[0].mxu0
        %v1303 = vpop.f32.mrb[0].mxu0
        %v1304 = vadd.f32 %v1140, %v1303
        %v1305 = vpop.f32.mrb[0].mxu0
        %1306 = vmatprep.mubr.bf16.mxu0 0
        %1307 = vmatmul.mubr.bf16.gmra.mrb[0].mxu0 %v1238
        %v1308 = vpop.f32.mrb[0].mxu0
        %v1309 = vadd.f32 %v1145, %v1308
        %v1310 = vpop.f32.mrb[0].mxu0
        %v1311 = vpop.f32.mrb[0].mxu0
        %v1312 = vadd.f32 %v1148, %v1311
        %v1313 = vpop.f32.mrb[0].mxu0
        %1314 = vmatprep.mubr.bf16.mxu0 0
        %1315 = vmatmul.mubr.bf16.gmra.mrb[0].mxu0 %v1241
        %v1316 = vpop.f32.mrb[0].mxu0
        %v1317 = vadd.f32 %v1153, %v1316
        %v1318 = vpop.f32.mrb[0].mxu0
        %v1319 = vpop.f32.mrb[0].mxu0
        %v1320 = vadd.f32 %v1156, %v1319
        %v1321 = vpop.f32.mrb[0].mxu0
        %1322 = vmatprep.mubr.bf16.mxu0 0
        %1323 = vmatmul.mubr.bf16.gmra.mrb[0].mxu0 %v1244
        %v1324 = vpop.f32.mrb[0].mxu0
        %v1325 = vadd.f32 %v1161, %v1324
        %v1326 = vpop.f32.mrb[0].mxu0
        %v1327 = vpop.f32.mrb[0].mxu0
        %v1328 = vadd.f32 %v1164, %v1327
        %v1329 = vpop.f32.mrb[0].mxu0
        %1330 = vmatprep.mubr.bf16.mxu0 0
        %1331 = vmatmul.mubr.bf16.gmra.mrb[0].mxu0 %v1247
        %v1332 = vpop.f32.mrb[0].mxu0
        %v1333 = vadd.f32 %v1169, %v1332
        %v1334 = vpop.f32.mrb[0].mxu0
        %v1335 = vpop.f32.mrb[0].mxu0
        %v1336 = vadd.f32 %v1172, %v1335
        %v1337 = vpop.f32.mrb[0].mxu0
        %1338 = vmatprep.mubr.bf16.mxu0 0
        %1339 = vmatmul.mubr.bf16.gmra.mrb[0].mxu0 %v1250
        %v1340 = vpop.f32.mrb[0].mxu0
        %v1341 = vadd.f32 %v1177, %v1340
        %v1342 = vpop.f32.mrb[0].mxu0
        %v1343 = vpop.f32.mrb[0].mxu0
        %v1344 = vadd.f32 %v1180, %v1343
        %v1345 = vpop.f32.mrb[0].mxu0
        %1346 = vmatprep.mubr.bf16.mxu0 0
        %1347 = vmatmul.mubr.bf16.gmra.mrb[0].mxu0 %v1253
        %v1348 = vpop.f32.mrb[0].mxu0
        %v1349 = vadd.f32 %v1185, %v1348
        %v1350 = vpop.f32.mrb[0].mxu0
        %v1351 = vpop.f32.mrb[0].mxu0
        %v1352 = vadd.f32 %v1188, %v1351
        %v1353 = vpop.f32.mrb[0].mxu0
        %1354 = vdwg.mxu0
        %v1355 = vld [vmem:[#allocation2] sm:$0xe]
        %vm1356 = vmpackc.low %vm885, %vm885
        %vm1357 = vmpackc.low %vm886, %vm886
        %vm1358 = vmpackc.low %vm887, %vm887
        %vm1359 = vmpackc.low %vm888, %vm888
        %vm1360 = vmpackc.low %vm889, %vm889
        %vm1361 = vmpackc.low %vm890, %vm890
        %vm1362 = vmpackc.low %vm891, %vm891
        %vm1363 = vmpackc.low %vm892, %vm892
        %vm1364 = vmpackc.low %vm893, %vm893
        %vm1365 = vmpackc.low %vm894, %vm894
        %vm1366 = vmpackc.low %vm895, %vm895
        %vm1367 = vmpackc.low %vm896, %vm896
        %vm1368 = vmpackc.low %vm897, %vm897
        %vm1369 = vmpackc.low %vm898, %vm898
        %vm1370 = vmpackc.low %vm899, %vm899
        %vm1371 = vmpackc.low %vm900, %vm900
        %v1372 = vsel %vm1356, 65537, 0
        %v1373 = vsel %vm1357, 65537, 0
        %v1374 = vsel %vm1358, 65537, 0
        %v1375 = vsel %vm1359, 65537, 0
        %v1376 = vsel %vm1360, 65537, 0
        %v1377 = vsel %vm1361, 65537, 0
        %v1378 = vsel %vm1362, 65537, 0
        %v1379 = vsel %vm1363, 65537, 0
        %v1380 = vsel %vm1364, 65537, 0
        %v1381 = vsel %vm1365, 65537, 0
        %v1382 = vsel %vm1366, 65537, 0
        %v1383 = vsel %vm1367, 65537, 0
        %v1384 = vsel %vm1368, 65537, 0
        %v1385 = vsel %vm1369, 65537, 0
        %v1386 = vsel %vm1370, 65537, 0
        %v1387 = vsel %vm1371, 65537, 0
        %vm1388 = vcmask 1040384
        %vm1389 = vcmask 1044484
        %vm1390 = vmor %vm1388, %vm1389
        %v1391 = vrot.slane %v1372, 7
        %v1392 = vrot.slane %v1391, 4
        %v1393 = vrot.slane %v1373, 7
        %v1394 = vsel %vm1390, %v1392, %v1393
        %v1395 = vrot.slane %v1393, 4
        %v1396 = vrot.slane %v1374, 7
        %v1397 = vsel %vm1390, %v1395, %v1396
        %v1398 = vrot.slane %v1396, 4
        %v1399 = vrot.slane %v1375, 7
        %v1400 = vsel %vm1390, %v1398, %v1399
        %v1401 = vrot.slane %v1399, 4
        %v1402 = vrot.slane %v1376, 7
        %v1403 = vsel %vm1390, %v1401, %v1402
        %v1404 = vrot.slane %v1402, 4
        %v1405 = vrot.slane %v1377, 7
        %v1406 = vsel %vm1390, %v1404, %v1405
        %v1407 = vrot.slane %v1405, 4
        %v1408 = vrot.slane %v1378, 7
        %v1409 = vsel %vm1390, %v1407, %v1408
        %v1410 = vrot.slane %v1408, 4
        %v1411 = vrot.slane %v1379, 7
        %v1412 = vsel %vm1390, %v1410, %v1411
        %v1413 = vrot.slane %v1411, 4
        %v1414 = vrot.slane %v1380, 7
        %v1415 = vsel %vm1390, %v1413, %v1414
        %v1416 = vrot.slane %v1414, 4
        %v1417 = vrot.slane %v1381, 7
        %v1418 = vsel %vm1390, %v1416, %v1417
        %v1419 = vrot.slane %v1417, 4
        %v1420 = vrot.slane %v1382, 7
        %v1421 = vsel %vm1390, %v1419, %v1420
        %v1422 = vrot.slane %v1420, 4
        %v1423 = vrot.slane %v1383, 7
        %v1424 = vsel %vm1390, %v1422, %v1423
        %v1425 = vrot.slane %v1423, 4
        %v1426 = vrot.slane %v1384, 7
        %v1427 = vsel %vm1390, %v1425, %v1426
        %v1428 = vrot.slane %v1426, 4
        %v1429 = vrot.slane %v1385, 7
        %v1430 = vsel %vm1390, %v1428, %v1429
        %v1431 = vrot.slane %v1429, 4
        %v1432 = vrot.slane %v1386, 7
        %v1433 = vsel %vm1390, %v1431, %v1432
        %v1434 = vrot.slane %v1432, 4
        %v1435 = vrot.slane %v1387, 7
        %v1436 = vsel %vm1390, %v1434, %v1435
        %v1437 = vrot.slane %v1435, 4
        %vm1438 = vcmp.ne.s16.totalorder %v1391, 0
        %vm1439 = vcmp.ne.s16.totalorder %v1394, 0
        %vm1440 = vcmp.ne.s16.totalorder %v1397, 0
        %vm1441 = vcmp.ne.s16.totalorder %v1400, 0
        %vm1442 = vcmp.ne.s16.totalorder %v1403, 0
        %vm1443 = vcmp.ne.s16.totalorder %v1406, 0
        %vm1444 = vcmp.ne.s16.totalorder %v1409, 0
        %vm1445 = vcmp.ne.s16.totalorder %v1412, 0
        %vm1446 = vcmp.ne.s16.totalorder %v1415, 0
        %vm1447 = vcmp.ne.s16.totalorder %v1418, 0
        %vm1448 = vcmp.ne.s16.totalorder %v1421, 0
        %vm1449 = vcmp.ne.s16.totalorder %v1424, 0
        %vm1450 = vcmp.ne.s16.totalorder %v1427, 0
        %vm1451 = vcmp.ne.s16.totalorder %v1430, 0
        %vm1452 = vcmp.ne.s16.totalorder %v1433, 0
        %vm1453 = vcmp.ne.s16.totalorder %v1436, 0
        %vm1454 = vcmp.ne.s16.totalorder %v1437, 0
        %v1455 = vsel %vm1438, %v1355, 0
        %v1456 = vsel %vm1439, %v902, 0
        %v1457 = vsel %vm1440, %v903, 0
        %v1458 = vsel %vm1441, %v904, 0
        %v1459 = vsel %vm1442, %v905, 0
        %v1460 = vsel %vm1443, %v906, 0
        %v1461 = vsel %vm1444, %v907, 0
        %v1462 = vsel %vm1445, %v908, 0
        %v1463 = vsel %vm1446, %v909, 0
        %v1464 = vsel %vm1447, %v910, 0
        %v1465 = vsel %vm1448, %v911, 0
        %v1466 = vsel %vm1449, %v912, 0
        %v1467 = vsel %vm1450, %v913, 0
        %v1468 = vsel %vm1451, %v914, 0
        %v1469 = vsel %vm1452, %v915, 0
        %v1470 = vsel %vm1453, %v916, 0
        %v1471 = vsel %vm1454, %v950, 0
        %s1472 = scalar_lea.vmem %s3, 4
        %v1473 = vld [vmem:[%s1472] sm:$0x3]
        %v1491 = vunpack.c.l.b16 %v1455
        %v1492 = vunpack.c.l.b16 %v1456
        %v1493 = vunpack.c.l.b16 %v1457
        %v1494 = vunpack.c.l.b16 %v1458
        %v1495 = vunpack.c.l.b16 %v1459
        %v1496 = vunpack.c.l.b16 %v1460
        %v1497 = vunpack.c.l.b16 %v1461
        %v1498 = vunpack.c.l.b16 %v1462
        %v1499 = vunpack.c.l.b16 %v1463
        %v1500 = vunpack.c.l.b16 %v1464
        %v1501 = vunpack.c.l.b16 %v1465
        %v1502 = vunpack.c.l.b16 %v1466
        %v1503 = vunpack.c.l.b16 %v1467
        %v1504 = vunpack.c.l.b16 %v1468
        %v1505 = vunpack.c.l.b16 %v1469
        %v1506 = vunpack.c.l.b16 %v1470
        %v1507 = vunpack.c.l.b16 %v1471
        %v1508 = vpack.c.b16 %v1492, %v1491
        %v1509 = vpack.c.b16 %v1494, %v1493
        %v1510 = vpack.c.b16 %v1496, %v1495
        %v1511 = vpack.c.b16 %v1498, %v1497
        %v1512 = vpack.c.b16 %v1500, %v1499
        %v1513 = vpack.c.b16 %v1502, %v1501
        %v1514 = vpack.c.b16 %v1504, %v1503
        %v1515 = vpack.c.b16 %v1506, %v1505
        %v1516 = vpack.c.b16 %v1507, %v1507
        %vm1517 = vcmask 1046528
        %v1518 = vrot.slane %v1508, 1
        %v1519 = vrot.slane %v1509, 1
        %v1520 = vsel %vm1517, %v1518, %v1519
        %v1521 = vrot.slane %v1510, 1
        %v1522 = vsel %vm1517, %v1519, %v1521
        %v1523 = vrot.slane %v1511, 1
        %v1524 = vsel %vm1517, %v1521, %v1523
        %v1525 = vrot.slane %v1512, 1
        %v1526 = vsel %vm1517, %v1523, %v1525
        %v1527 = vrot.slane %v1513, 1
        %v1528 = vsel %vm1517, %v1525, %v1527
        %v1529 = vrot.slane %v1514, 1
        %v1530 = vsel %vm1517, %v1527, %v1529
        %v1531 = vrot.slane %v1515, 1
        %v1532 = vsel %vm1517, %v1529, %v1531
        %v1533 = vrot.slane %v1516, 1
        %v1534 = vsel %vm1517, %v1531, %v1533
        %v1536 = vsel %vm1065, %v1520, 0
        %v1539 = vsel %vm1065, %v1522, 0
        %v1542 = vsel %vm1065, %v1524, 0
        %v1545 = vsel %vm1065, %v1526, 0
        %v1548 = vsel %vm1065, %v1528, 0
        %v1551 = vsel %vm1065, %v1530, 0
        %v1554 = vsel %vm1065, %v1532, 0
        %v1557 = vsel %vm1065, %v1534, 0
        %v1560 = vsel %vm1090, %v1473, 0
        %1562 = vmatprep.subr.bf16.mxu0 0
        %1563 = vmatpush1.bf16.msra.mxu0 %v1560
        %1564 = vmatprep.subr.bf16.mxu0 0
        %1565 = vmatpush1.bf16.msra.mxu0 0
        %1566 = vmatprep.subr.bf16.mxu0 0
        %1567 = vmatpush1.bf16.msra.mxu0 0
        %1568 = vmatprep.subr.bf16.mxu0 0
        %1569 = vmatpush1.bf16.msra.mxu0 0
        %1570 = vmatprep.subr.bf16.mxu0 0
        %1571 = vmatpush1.bf16.msra.mxu0 0
        %1572 = vmatprep.subr.bf16.mxu0 0
        %1573 = vmatpush1.bf16.msra.mxu0 0
        %1574 = vmatprep.subr.bf16.mxu0 0
        %1575 = vmatpush1.bf16.msra.mxu0 0
        %1576 = vmatprep.subr.bf16.mxu0 0
        %1577 = vmatpush1.bf16.msra.mxu0 0
        %1578 = vmatprep.subr.bf16.mxu0 0
        %1579 = vmatpush1.bf16.msra.mxu0 0
        %1580 = vmatprep.subr.bf16.mxu0 0
        %1581 = vmatpush1.bf16.msra.mxu0 0
        %1582 = vmatprep.subr.bf16.mxu0 0
        %1583 = vmatpush1.bf16.msra.mxu0 0
        %1584 = vmatprep.subr.bf16.mxu0 0
        %1585 = vmatpush1.bf16.msra.mxu0 0
        %1586 = vmatprep.subr.bf16.mxu0 0
        %1587 = vmatpush1.bf16.msra.mxu0 0
        %1588 = vmatprep.subr.bf16.mxu0 0
        %1589 = vmatpush1.bf16.msra.mxu0 0
        %1590 = vmatprep.subr.bf16.mxu0 0
        %1591 = vmatpush1.bf16.msra.mxu0 0
        %1592 = vmatprep.subr.bf16.mxu0 0
        %1593 = vmatpush1.bf16.msra.mxu0 0
        %1594 = vmatprep.mubr.bf16.mxu0 0
        %1595 = vmatmul.mubr.bf16.gmra.mrb[0].mxu0 %v1536
        %v1596 = vpop.f32.mrb[0].mxu0
        %v1597 = vadd.f32 0.0, %v1596
        %v1598 = vpop.f32.mrb[0].mxu0
        %v1599 = vpop.f32.mrb[0].mxu0
        %v1600 = vadd.f32 0.0, %v1599
        %v1601 = vpop.f32.mrb[0].mxu0
        %1602 = vmatprep.mubr.bf16.mxu0 0
        %1603 = vmatmul.mubr.bf16.gmra.mrb[0].mxu0 %v1539
        %v1604 = vpop.f32.mrb[0].mxu0
        %v1605 = vadd.f32 0.0, %v1604
        %v1606 = vpop.f32.mrb[0].mxu0
        %v1607 = vpop.f32.mrb[0].mxu0
        %v1608 = vadd.f32 0.0, %v1607
        %v1609 = vpop.f32.mrb[0].mxu0
        %1610 = vmatprep.mubr.bf16.mxu0 0
        %1611 = vmatmul.mubr.bf16.gmra.mrb[0].mxu0 %v1542
        %v1612 = vpop.f32.mrb[0].mxu0
        %v1613 = vadd.f32 0.0, %v1612
        %v1614 = vpop.f32.mrb[0].mxu0
        %v1615 = vpop.f32.mrb[0].mxu0
        %v1616 = vadd.f32 0.0, %v1615
        %v1617 = vpop.f32.mrb[0].mxu0
        %1618 = vmatprep.mubr.bf16.mxu0 0
        %1619 = vmatmul.mubr.bf16.gmra.mrb[0].mxu0 %v1545
        %v1620 = vpop.f32.mrb[0].mxu0
        %v1621 = vadd.f32 0.0, %v1620
        %v1622 = vpop.f32.mrb[0].mxu0
        %v1623 = vpop.f32.mrb[0].mxu0
        %v1624 = vadd.f32 0.0, %v1623
        %v1625 = vpop.f32.mrb[0].mxu0
        %1626 = vmatprep.mubr.bf16.mxu0 0
        %1627 = vmatmul.mubr.bf16.gmra.mrb[0].mxu0 %v1548
        %v1628 = vpop.f32.mrb[0].mxu0
        %v1629 = vadd.f32 0.0, %v1628
        %v1630 = vpop.f32.mrb[0].mxu0
        %v1631 = vpop.f32.mrb[0].mxu0
        %v1632 = vadd.f32 0.0, %v1631
        %v1633 = vpop.f32.mrb[0].mxu0
        %1634 = vmatprep.mubr.bf16.mxu0 0
        %1635 = vmatmul.mubr.bf16.gmra.mrb[0].mxu0 %v1551
        %v1636 = vpop.f32.mrb[0].mxu0
        %v1637 = vadd.f32 0.0, %v1636
        %v1638 = vpop.f32.mrb[0].mxu0
        %v1639 = vpop.f32.mrb[0].mxu0
        %v1640 = vadd.f32 0.0, %v1639
        %v1641 = vpop.f32.mrb[0].mxu0
        %1642 = vmatprep.mubr.bf16.mxu0 0
        %1643 = vmatmul.mubr.bf16.gmra.mrb[0].mxu0 %v1554
        %v1644 = vpop.f32.mrb[0].mxu0
        %v1645 = vadd.f32 0.0, %v1644
        %v1646 = vpop.f32.mrb[0].mxu0
        %v1647 = vpop.f32.mrb[0].mxu0
        %v1648 = vadd.f32 0.0, %v1647
        %v1649 = vpop.f32.mrb[0].mxu0
        %1650 = vmatprep.mubr.bf16.mxu0 0
        %1651 = vmatmul.mubr.bf16.gmra.mrb[0].mxu0 %v1557
        %v1652 = vpop.f32.mrb[0].mxu0
        %v1653 = vadd.f32 0.0, %v1652
        %v1654 = vpop.f32.mrb[0].mxu0
        %v1655 = vpop.f32.mrb[0].mxu0
        %v1656 = vadd.f32 0.0, %v1655
        %v1657 = vpop.f32.mrb[0].mxu0
        %1658 = vdwg.mxu0
        %v1659 = vadd.f32 %v1293, %v1597
        %v1660 = vadd.f32 %v1296, %v1600
        %v1661 = vadd.f32 %v1301, %v1605
        %v1662 = vadd.f32 %v1304, %v1608
        %v1663 = vadd.f32 %v1309, %v1613
        %v1664 = vadd.f32 %v1312, %v1616
        %v1665 = vadd.f32 %v1317, %v1621
        %v1666 = vadd.f32 %v1320, %v1624
        %v1667 = vadd.f32 %v1325, %v1629
        %v1668 = vadd.f32 %v1328, %v1632
        %v1669 = vadd.f32 %v1333, %v1637
        %v1670 = vadd.f32 %v1336, %v1640
        %v1671 = vadd.f32 %v1341, %v1645
        %v1672 = vadd.f32 %v1344, %v1648
        %v1673 = vadd.f32 %v1349, %v1653
        %v1674 = vadd.f32 %v1352, %v1656
        %v1675 = vld [vmem:[#allocation2 + $0x8] sm:$0xf]
        %v1676 = vld [vmem:[#allocation2 + $0xc] sm:$0xf]
        %v1677 = vld [vmem:[#allocation2 + $0x10] sm:$0xf]
        %v1678 = vld [vmem:[#allocation2 + $0x14] sm:$0xf]
        %v1679 = vld [vmem:[#allocation2 + $0x18] sm:$0xf]
        %v1680 = vld [vmem:[#allocation2 + $0x1c] sm:$0xf]
        %v1681 = vld [vmem:[#allocation2 + $0x20] sm:$0xf]
        %v1682 = vld [vmem:[#allocation2 + $0x24] sm:$0xf]
        %v1683 = vld [vmem:[#allocation2 + $0x28] sm:$0xf]
        %v1684 = vld [vmem:[#allocation2 + $0x2c] sm:$0xf]
        %v1685 = vld [vmem:[#allocation2 + $0x30] sm:$0xf]
        %v1686 = vld [vmem:[#allocation2 + $0x34] sm:$0xf]
        %v1687 = vld [vmem:[#allocation2 + $0x38] sm:$0xf]
        %v1688 = vld [vmem:[#allocation2 + $0x3c] sm:$0xf]
        %v1689 = vld [vmem:[#allocation2 + $0x40] sm:$0xf]
        %v1690 = vld [vmem:[#allocation2 + $0x44] sm:$0xf]
        %v1691 = vsel %vm917, %v1675, 0
        %v1692 = vsel %vm918, %v1676, 0
        %v1693 = vsel %vm919, %v1677, 0
        %v1694 = vsel %vm920, %v1678, 0
        %v1695 = vsel %vm921, %v1679, 0
        %v1696 = vsel %vm922, %v1680, 0
        %v1697 = vsel %vm923, %v1681, 0
        %v1698 = vsel %vm924, %v1682, 0
        %v1699 = vsel %vm925, %v1683, 0
        %v1700 = vsel %vm926, %v1684, 0
        %v1701 = vsel %vm927, %v1685, 0
        %v1702 = vsel %vm928, %v1686, 0
        %v1703 = vsel %vm929, %v1687, 0
        %v1704 = vsel %vm930, %v1688, 0
        %v1705 = vsel %vm931, %v1689, 0
        %v1706 = vsel %vm932, %v1690, 0
        %s1707 = scalar_lea.vmem %s3, 6
        %v1708 = vld [vmem:[%s1707] sm:$0x3]
        %v1725 = vunpack.c.l.b16 %v1691
        %v1726 = vunpack.c.l.b16 %v1692
        %v1727 = vunpack.c.l.b16 %v1693
        %v1728 = vunpack.c.l.b16 %v1694
        %v1729 = vunpack.c.l.b16 %v1695
        %v1730 = vunpack.c.l.b16 %v1696
        %v1731 = vunpack.c.l.b16 %v1697
        %v1732 = vunpack.c.l.b16 %v1698
        %v1733 = vunpack.c.l.b16 %v1699
        %v1734 = vunpack.c.l.b16 %v1700
        %v1735 = vunpack.c.l.b16 %v1701
        %v1736 = vunpack.c.l.b16 %v1702
        %v1737 = vunpack.c.l.b16 %v1703
        %v1738 = vunpack.c.l.b16 %v1704
        %v1739 = vunpack.c.l.b16 %v1705
        %v1740 = vunpack.c.l.b16 %v1706
        %v1741 = vpack.c.b16 %v1726, %v1725
        %v1742 = vpack.c.b16 %v1728, %v1727
        %v1743 = vpack.c.b16 %v1730, %v1729
        %v1744 = vpack.c.b16 %v1732, %v1731
        %v1745 = vpack.c.b16 %v1734, %v1733
        %v1746 = vpack.c.b16 %v1736, %v1735
        %v1747 = vpack.c.b16 %v1738, %v1737
        %v1748 = vpack.c.b16 %v1740, %v1739
        %v1750 = vsel %vm1065, %v1741, 0
        %v1753 = vsel %vm1065, %v1742, 0
        %v1756 = vsel %vm1065, %v1743, 0
        %v1759 = vsel %vm1065, %v1744, 0
        %v1762 = vsel %vm1065, %v1745, 0
        %v1765 = vsel %vm1065, %v1746, 0
        %v1768 = vsel %vm1065, %v1747, 0
        %v1771 = vsel %vm1065, %v1748, 0
        %v1774 = vsel %vm1090, %v1708, 0
        %1776 = vmatprep.subr.bf16.mxu0 0
        %1777 = vmatpush1.bf16.msra.mxu0 %v1774
        %1778 = vmatprep.subr.bf16.mxu0 0
        %1779 = vmatpush1.bf16.msra.mxu0 0
        %1780 = vmatprep.subr.bf16.mxu0 0
        %1781 = vmatpush1.bf16.msra.mxu0 0
        %1782 = vmatprep.subr.bf16.mxu0 0
        %1783 = vmatpush1.bf16.msra.mxu0 0
        %1784 = vmatprep.subr.bf16.mxu0 0
        %1785 = vmatpush1.bf16.msra.mxu0 0
        %1786 = vmatprep.subr.bf16.mxu0 0
        %1787 = vmatpush1.bf16.msra.mxu0 0
        %1788 = vmatprep.subr.bf16.mxu0 0
        %1789 = vmatpush1.bf16.msra.mxu0 0
        %1790 = vmatprep.subr.bf16.mxu0 0
        %1791 = vmatpush1.bf16.msra.mxu0 0
        %1792 = vmatprep.subr.bf16.mxu0 0
        %1793 = vmatpush1.bf16.msra.mxu0 0
        %1794 = vmatprep.subr.bf16.mxu0 0
        %1795 = vmatpush1.bf16.msra.mxu0 0
        %1796 = vmatprep.subr.bf16.mxu0 0
        %1797 = vmatpush1.bf16.msra.mxu0 0
        %1798 = vmatprep.subr.bf16.mxu0 0
        %1799 = vmatpush1.bf16.msra.mxu0 0
        %1800 = vmatprep.subr.bf16.mxu0 0
        %1801 = vmatpush1.bf16.msra.mxu0 0
        %1802 = vmatprep.subr.bf16.mxu0 0
        %1803 = vmatpush1.bf16.msra.mxu0 0
        %1804 = vmatprep.subr.bf16.mxu0 0
        %1805 = vmatpush1.bf16.msra.mxu0 0
        %1806 = vmatprep.subr.bf16.mxu0 0
        %1807 = vmatpush1.bf16.msra.mxu0 0
        %1808 = vmatprep.mubr.bf16.mxu0 0
        %1809 = vmatmul.mubr.bf16.gmra.mrb[0].mxu0 %v1750
        %v1810 = vpop.f32.mrb[0].mxu0
        %v1811 = vadd.f32 0.0, %v1810
        %v1812 = vpop.f32.mrb[0].mxu0
        %v1813 = vpop.f32.mrb[0].mxu0
        %v1814 = vadd.f32 0.0, %v1813
        %v1815 = vpop.f32.mrb[0].mxu0
        %1816 = vmatprep.mubr.bf16.mxu0 0
        %1817 = vmatmul.mubr.bf16.gmra.mrb[0].mxu0 %v1753
        %v1818 = vpop.f32.mrb[0].mxu0
        %v1819 = vadd.f32 0.0, %v1818
        %v1820 = vpop.f32.mrb[0].mxu0
        %v1821 = vpop.f32.mrb[0].mxu0
        %v1822 = vadd.f32 0.0, %v1821
        %v1823 = vpop.f32.mrb[0].mxu0
        %1824 = vmatprep.mubr.bf16.mxu0 0
        %1825 = vmatmul.mubr.bf16.gmra.mrb[0].mxu0 %v1756
        %v1826 = vpop.f32.mrb[0].mxu0
        %v1827 = vadd.f32 0.0, %v1826
        %v1828 = vpop.f32.mrb[0].mxu0
        %v1829 = vpop.f32.mrb[0].mxu0
        %v1830 = vadd.f32 0.0, %v1829
        %v1831 = vpop.f32.mrb[0].mxu0
        %1832 = vmatprep.mubr.bf16.mxu0 0
        %1833 = vmatmul.mubr.bf16.gmra.mrb[0].mxu0 %v1759
        %v1834 = vpop.f32.mrb[0].mxu0
        %v1835 = vadd.f32 0.0, %v1834
        %v1836 = vpop.f32.mrb[0].mxu0
        %v1837 = vpop.f32.mrb[0].mxu0
        %v1838 = vadd.f32 0.0, %v1837
        %v1839 = vpop.f32.mrb[0].mxu0
        %1840 = vmatprep.mubr.bf16.mxu0 0
        %1841 = vmatmul.mubr.bf16.gmra.mrb[0].mxu0 %v1762
        %v1842 = vpop.f32.mrb[0].mxu0
        %v1843 = vadd.f32 0.0, %v1842
        %v1844 = vpop.f32.mrb[0].mxu0
        %v1845 = vpop.f32.mrb[0].mxu0
        %v1846 = vadd.f32 0.0, %v1845
        %v1847 = vpop.f32.mrb[0].mxu0
        %1848 = vmatprep.mubr.bf16.mxu0 0
        %1849 = vmatmul.mubr.bf16.gmra.mrb[0].mxu0 %v1765
        %v1850 = vpop.f32.mrb[0].mxu0
        %v1851 = vadd.f32 0.0, %v1850
        %v1852 = vpop.f32.mrb[0].mxu0
        %v1853 = vpop.f32.mrb[0].mxu0
        %v1854 = vadd.f32 0.0, %v1853
        %v1855 = vpop.f32.mrb[0].mxu0
        %1856 = vmatprep.mubr.bf16.mxu0 0
        %1857 = vmatmul.mubr.bf16.gmra.mrb[0].mxu0 %v1768
        %v1858 = vpop.f32.mrb[0].mxu0
        %v1859 = vadd.f32 0.0, %v1858
        %v1860 = vpop.f32.mrb[0].mxu0
        %v1861 = vpop.f32.mrb[0].mxu0
        %v1862 = vadd.f32 0.0, %v1861
        %v1863 = vpop.f32.mrb[0].mxu0
        %1864 = vmatprep.mubr.bf16.mxu0 0
        %1865 = vmatmul.mubr.bf16.gmra.mrb[0].mxu0 %v1771
        %v1866 = vpop.f32.mrb[0].mxu0
        %v1867 = vadd.f32 0.0, %v1866
        %v1868 = vpop.f32.mrb[0].mxu0
        %v1869 = vpop.f32.mrb[0].mxu0
        %v1870 = vadd.f32 0.0, %v1869
        %v1871 = vpop.f32.mrb[0].mxu0
        %1872 = vdwg.mxu0
        %v1873 = vadd.f32 %v1659, %v1811
        %v1874 = vadd.f32 %v1660, %v1814
        %v1875 = vadd.f32 %v1661, %v1819
        %v1876 = vadd.f32 %v1662, %v1822
        %v1877 = vadd.f32 %v1663, %v1827
        %v1878 = vadd.f32 %v1664, %v1830
        %v1879 = vadd.f32 %v1665, %v1835
        %v1880 = vadd.f32 %v1666, %v1838
        %v1881 = vadd.f32 %v1667, %v1843
        %v1882 = vadd.f32 %v1668, %v1846
        %v1883 = vadd.f32 %v1669, %v1851
        %v1884 = vadd.f32 %v1670, %v1854
        %v1885 = vadd.f32 %v1671, %v1859
        %v1886 = vadd.f32 %v1672, %v1862
        %v1887 = vadd.f32 %v1673, %v1867
        %v1888 = vadd.f32 %v1674, %v1870
        %v1889 = vld [vmem:[#allocation2 + $0x8] sm:$0xf]
        %v1890 = vld [vmem:[#allocation2 + $0xc] sm:$0xf]
        %v1891 = vld [vmem:[#allocation2 + $0x10] sm:$0xf]
        %v1892 = vld [vmem:[#allocation2 + $0x14] sm:$0xf]
        %v1893 = vld [vmem:[#allocation2 + $0x18] sm:$0xf]
        %v1894 = vld [vmem:[#allocation2 + $0x1c] sm:$0xf]
        %v1895 = vld [vmem:[#allocation2 + $0x20] sm:$0xf]
        %v1896 = vld [vmem:[#allocation2 + $0x24] sm:$0xf]
        %v1897 = vld [vmem:[#allocation2 + $0x28] sm:$0xf]
        %v1898 = vld [vmem:[#allocation2 + $0x2c] sm:$0xf]
        %v1899 = vld [vmem:[#allocation2 + $0x30] sm:$0xf]
        %v1900 = vld [vmem:[#allocation2 + $0x34] sm:$0xf]
        %v1901 = vld [vmem:[#allocation2 + $0x38] sm:$0xf]
        %v1902 = vld [vmem:[#allocation2 + $0x3c] sm:$0xf]
        %v1903 = vld [vmem:[#allocation2 + $0x40] sm:$0xf]
        %v1904 = vld [vmem:[#allocation2 + $0x44] sm:$0xf]
        %v1905 = vld [vmem:[#allocation2 + $0x48] sm:$0x1]
        %s1906 = scalar_lea.vmem %s3, 8
        %v1907 = vld [vmem:[%s1906] sm:$0x3]
        %v1908 = vld [vmem:[#allocation2 + $0x8] sm:$0xe]
        %v1909 = vsel %vm1438, %v1908, 0
        %v1910 = vsel %vm1439, %v1890, 0
        %v1911 = vsel %vm1440, %v1891, 0
        %v1912 = vsel %vm1441, %v1892, 0
        %v1913 = vsel %vm1442, %v1893, 0
        %v1914 = vsel %vm1443, %v1894, 0
        %v1915 = vsel %vm1444, %v1895, 0
        %v1916 = vsel %vm1445, %v1896, 0
        %v1917 = vsel %vm1446, %v1897, 0
        %v1918 = vsel %vm1447, %v1898, 0
        %v1919 = vsel %vm1448, %v1899, 0
        %v1920 = vsel %vm1449, %v1900, 0
        %v1921 = vsel %vm1450, %v1901, 0
        %v1922 = vsel %vm1451, %v1902, 0
        %v1923 = vsel %vm1452, %v1903, 0
        %v1924 = vsel %vm1453, %v1904, 0
        %v1925 = vsel %vm1454, %v1905, 0
        %s1926 = scalar_lea.vmem %s3, 10
        %v1927 = vld [vmem:[%s1926] sm:$0x3]
        %v1945 = vunpack.c.l.b16 %v1909
        %v1946 = vunpack.c.l.b16 %v1910
        %v1947 = vunpack.c.l.b16 %v1911
        %v1948 = vunpack.c.l.b16 %v1912
        %v1949 = vunpack.c.l.b16 %v1913
        %v1950 = vunpack.c.l.b16 %v1914
        %v1951 = vunpack.c.l.b16 %v1915
        %v1952 = vunpack.c.l.b16 %v1916
        %v1953 = vunpack.c.l.b16 %v1917
        %v1954 = vunpack.c.l.b16 %v1918
        %v1955 = vunpack.c.l.b16 %v1919
        %v1956 = vunpack.c.l.b16 %v1920
        %v1957 = vunpack.c.l.b16 %v1921
        %v1958 = vunpack.c.l.b16 %v1922
        %v1959 = vunpack.c.l.b16 %v1923
        %v1960 = vunpack.c.l.b16 %v1924
        %v1961 = vunpack.c.l.b16 %v1925
        %v1962 = vpack.c.b16 %v1946, %v1945
        %v1963 = vpack.c.b16 %v1948, %v1947
        %v1964 = vpack.c.b16 %v1950, %v1949
        %v1965 = vpack.c.b16 %v1952, %v1951
        %v1966 = vpack.c.b16 %v1954, %v1953
        %v1967 = vpack.c.b16 %v1956, %v1955
        %v1968 = vpack.c.b16 %v1958, %v1957
        %v1969 = vpack.c.b16 %v1960, %v1959
        %v1970 = vpack.c.b16 %v1961, %v1961
        %v1971 = vrot.slane %v1962, 1
        %v1972 = vrot.slane %v1963, 1
        %v1973 = vsel %vm1517, %v1971, %v1972
        %v1974 = vrot.slane %v1964, 1
        %v1975 = vsel %vm1517, %v1972, %v1974
        %v1976 = vrot.slane %v1965, 1
        %v1977 = vsel %vm1517, %v1974, %v1976
        %v1978 = vrot.slane %v1966, 1
        %v1979 = vsel %vm1517, %v1976, %v1978
        %v1980 = vrot.slane %v1967, 1
        %v1981 = vsel %vm1517, %v1978, %v1980
        %v1982 = vrot.slane %v1968, 1
        %v1983 = vsel %vm1517, %v1980, %v1982
        %v1984 = vrot.slane %v1969, 1
        %v1985 = vsel %vm1517, %v1982, %v1984
        %v1986 = vrot.slane %v1970, 1
        %v1987 = vsel %vm1517, %v1984, %v1986
        %v1989 = vsel %vm1065, %v1973, 0
        %v1992 = vsel %vm1065, %v1975, 0
        %v1995 = vsel %vm1065, %v1977, 0
        %v1998 = vsel %vm1065, %v1979, 0
        %v2001 = vsel %vm1065, %v1981, 0
        %v2004 = vsel %vm1065, %v1983, 0
        %v2007 = vsel %vm1065, %v1985, 0
        %v2010 = vsel %vm1065, %v1987, 0
        %v2013 = vsel %vm1090, %v1927, 0
        %2015 = vmatprep.subr.bf16.mxu0 0
        %2016 = vmatpush1.bf16.msra.mxu0 %v2013
        %2017 = vmatprep.subr.bf16.mxu0 0
        %2018 = vmatpush1.bf16.msra.mxu0 0
        %2019 = vmatprep.subr.bf16.mxu0 0
        %2020 = vmatpush1.bf16.msra.mxu0 0
        %2021 = vmatprep.subr.bf16.mxu0 0
        %2022 = vmatpush1.bf16.msra.mxu0 0
        %2023 = vmatprep.subr.bf16.mxu0 0
        %2024 = vmatpush1.bf16.msra.mxu0 0
        %2025 = vmatprep.subr.bf16.mxu0 0
        %2026 = vmatpush1.bf16.msra.mxu0 0
        %2027 = vmatprep.subr.bf16.mxu0 0
        %2028 = vmatpush1.bf16.msra.mxu0 0
        %2029 = vmatprep.subr.bf16.mxu0 0
        %2030 = vmatpush1.bf16.msra.mxu0 0
        %2031 = vmatprep.subr.bf16.mxu0 0
        %2032 = vmatpush1.bf16.msra.mxu0 0
        %2033 = vmatprep.subr.bf16.mxu0 0
        %2034 = vmatpush1.bf16.msra.mxu0 0
        %2035 = vmatprep.subr.bf16.mxu0 0
        %2036 = vmatpush1.bf16.msra.mxu0 0
        %2037 = vmatprep.subr.bf16.mxu0 0
        %2038 = vmatpush1.bf16.msra.mxu0 0
        %2039 = vmatprep.subr.bf16.mxu0 0
        %2040 = vmatpush1.bf16.msra.mxu0 0
        %2041 = vmatprep.subr.bf16.mxu0 0
        %2042 = vmatpush1.bf16.msra.mxu0 0
        %2043 = vmatprep.subr.bf16.mxu0 0
        %2044 = vmatpush1.bf16.msra.mxu0 0
        %2045 = vmatprep.subr.bf16.mxu0 0
        %2046 = vmatpush1.bf16.msra.mxu0 0
        %2047 = vmatprep.mubr.bf16.mxu0 0
        %2048 = vmatmul.mubr.bf16.gmra.mrb[0].mxu0 %v1989
        %v2049 = vpop.f32.mrb[0].mxu0
        %v2050 = vadd.f32 0.0, %v2049
        %v2051 = vpop.f32.mrb[0].mxu0
        %v2052 = vpop.f32.mrb[0].mxu0
        %v2053 = vadd.f32 0.0, %v2052
        %v2054 = vpop.f32.mrb[0].mxu0
        %2055 = vmatprep.mubr.bf16.mxu0 0
        %2056 = vmatmul.mubr.bf16.gmra.mrb[0].mxu0 %v1992
        %v2057 = vpop.f32.mrb[0].mxu0
        %v2058 = vadd.f32 0.0, %v2057
        %v2059 = vpop.f32.mrb[0].mxu0
        %v2060 = vpop.f32.mrb[0].mxu0
        %v2061 = vadd.f32 0.0, %v2060
        %v2062 = vpop.f32.mrb[0].mxu0
        %2063 = vmatprep.mubr.bf16.mxu0 0
        %2064 = vmatmul.mubr.bf16.gmra.mrb[0].mxu0 %v1995
        %v2065 = vpop.f32.mrb[0].mxu0
        %v2066 = vadd.f32 0.0, %v2065
        %v2067 = vpop.f32.mrb[0].mxu0
        %v2068 = vpop.f32.mrb[0].mxu0
        %v2069 = vadd.f32 0.0, %v2068
        %v2070 = vpop.f32.mrb[0].mxu0
        %2071 = vmatprep.mubr.bf16.mxu0 0
        %2072 = vmatmul.mubr.bf16.gmra.mrb[0].mxu0 %v1998
        %v2073 = vpop.f32.mrb[0].mxu0
        %v2074 = vadd.f32 0.0, %v2073
        %v2075 = vpop.f32.mrb[0].mxu0
        %v2076 = vpop.f32.mrb[0].mxu0
        %v2077 = vadd.f32 0.0, %v2076
        %v2078 = vpop.f32.mrb[0].mxu0
        %2079 = vmatprep.mubr.bf16.mxu0 0
        %2080 = vmatmul.mubr.bf16.gmra.mrb[0].mxu0 %v2001
        %v2081 = vpop.f32.mrb[0].mxu0
        %v2082 = vadd.f32 0.0, %v2081
        %v2083 = vpop.f32.mrb[0].mxu0
        %v2084 = vpop.f32.mrb[0].mxu0
        %v2085 = vadd.f32 0.0, %v2084
        %v2086 = vpop.f32.mrb[0].mxu0
        %2087 = vmatprep.mubr.bf16.mxu0 0
        %2088 = vmatmul.mubr.bf16.gmra.mrb[0].mxu0 %v2004
        %v2089 = vpop.f32.mrb[0].mxu0
        %v2090 = vadd.f32 0.0, %v2089
        %v2091 = vpop.f32.mrb[0].mxu0
        %v2092 = vpop.f32.mrb[0].mxu0
        %v2093 = vadd.f32 0.0, %v2092
        %v2094 = vpop.f32.mrb[0].mxu0
        %2095 = vmatprep.mubr.bf16.mxu0 0
        %2096 = vmatmul.mubr.bf16.gmra.mrb[0].mxu0 %v2007
        %v2097 = vpop.f32.mrb[0].mxu0
        %v2098 = vadd.f32 0.0, %v2097
        %v2099 = vpop.f32.mrb[0].mxu0
        %v2100 = vpop.f32.mrb[0].mxu0
        %v2101 = vadd.f32 0.0, %v2100
        %v2102 = vpop.f32.mrb[0].mxu0
        %2103 = vmatprep.mubr.bf16.mxu0 0
        %2104 = vmatmul.mubr.bf16.gmra.mrb[0].mxu0 %v2010
        %v2105 = vpop.f32.mrb[0].mxu0
        %v2106 = vadd.f32 0.0, %v2105
        %v2107 = vpop.f32.mrb[0].mxu0
        %v2108 = vpop.f32.mrb[0].mxu0
        %v2109 = vadd.f32 0.0, %v2108
        %v2110 = vpop.f32.mrb[0].mxu0
        %2111 = vdwg.mxu0
        %v2112 = vadd.f32 %v1873, %v2050
        %v2113 = vadd.f32 %v1874, %v2053
        %v2114 = vadd.f32 %v1875, %v2058
        %v2115 = vadd.f32 %v1876, %v2061
        %v2116 = vadd.f32 %v1877, %v2066
        %v2117 = vadd.f32 %v1878, %v2069
        %v2118 = vadd.f32 %v1879, %v2074
        %v2119 = vadd.f32 %v1880, %v2077
        %v2120 = vadd.f32 %v1881, %v2082
        %v2121 = vadd.f32 %v1882, %v2085
        %v2122 = vadd.f32 %v1883, %v2090
        %v2123 = vadd.f32 %v1884, %v2093
        %v2124 = vadd.f32 %v1885, %v2098
        %v2125 = vadd.f32 %v1886, %v2101
        %v2126 = vadd.f32 %v1887, %v2106
        %v2127 = vadd.f32 %v1888, %v2109
        %v2128 = vld [vmem:[#allocation2 + $0x10] sm:$0xf]
        %v2129 = vld [vmem:[#allocation2 + $0x14] sm:$0xf]
        %v2130 = vld [vmem:[#allocation2 + $0x18] sm:$0xf]
        %v2131 = vld [vmem:[#allocation2 + $0x1c] sm:$0xf]
        %v2132 = vld [vmem:[#allocation2 + $0x20] sm:$0xf]
        %v2133 = vld [vmem:[#allocation2 + $0x24] sm:$0xf]
        %v2134 = vld [vmem:[#allocation2 + $0x28] sm:$0xf]
        %v2135 = vld [vmem:[#allocation2 + $0x2c] sm:$0xf]
        %v2136 = vld [vmem:[#allocation2 + $0x30] sm:$0xf]
        %v2137 = vld [vmem:[#allocation2 + $0x34] sm:$0xf]
        %v2138 = vld [vmem:[#allocation2 + $0x38] sm:$0xf]
        %v2139 = vld [vmem:[#allocation2 + $0x3c] sm:$0xf]
        %v2140 = vld [vmem:[#allocation2 + $0x40] sm:$0xf]
        %v2141 = vld [vmem:[#allocation2 + $0x44] sm:$0xf]
        %v2142 = vld [vmem:[#allocation2 + $0x48] sm:$0xf]
        %v2143 = vld [vmem:[#allocation2 + $0x4c] sm:$0xf]
        %v2144 = vsel %vm917, %v2128, 0
        %v2145 = vsel %vm918, %v2129, 0
        %v2146 = vsel %vm919, %v2130, 0
        %v2147 = vsel %vm920, %v2131, 0
        %v2148 = vsel %vm921, %v2132, 0
        %v2149 = vsel %vm922, %v2133, 0
        %v2150 = vsel %vm923, %v2134, 0
        %v2151 = vsel %vm924, %v2135, 0
        %v2152 = vsel %vm925, %v2136, 0
        %v2153 = vsel %vm926, %v2137, 0
        %v2154 = vsel %vm927, %v2138, 0
        %v2155 = vsel %vm928, %v2139, 0
        %v2156 = vsel %vm929, %v2140, 0
        %v2157 = vsel %vm930, %v2141, 0
        %v2158 = vsel %vm931, %v2142, 0
        %v2159 = vsel %vm932, %v2143, 0
        %s2160 = scalar_lea.vmem %s3, 12
        %v2161 = vld [vmem:[%s2160] sm:$0x3]
        %v2178 = vunpack.c.l.b16 %v2144
        %v2179 = vunpack.c.l.b16 %v2145
        %v2180 = vunpack.c.l.b16 %v2146
        %v2181 = vunpack.c.l.b16 %v2147
        %v2182 = vunpack.c.l.b16 %v2148
        %v2183 = vunpack.c.l.b16 %v2149
        %v2184 = vunpack.c.l.b16 %v2150
        %v2185 = vunpack.c.l.b16 %v2151
        %v2186 = vunpack.c.l.b16 %v2152
        %v2187 = vunpack.c.l.b16 %v2153
        %v2188 = vunpack.c.l.b16 %v2154
        %v2189 = vunpack.c.l.b16 %v2155
        %v2190 = vunpack.c.l.b16 %v2156
        %v2191 = vunpack.c.l.b16 %v2157
        %v2192 = vunpack.c.l.b16 %v2158
        %v2193 = vunpack.c.l.b16 %v2159
        %v2194 = vpack.c.b16 %v2179, %v2178
        %v2195 = vpack.c.b16 %v2181, %v2180
        %v2196 = vpack.c.b16 %v2183, %v2182
        %v2197 = vpack.c.b16 %v2185, %v2184
        %v2198 = vpack.c.b16 %v2187, %v2186
        %v2199 = vpack.c.b16 %v2189, %v2188
        %v2200 = vpack.c.b16 %v2191, %v2190
        %v2201 = vpack.c.b16 %v2193, %v2192
        %v2203 = vsel %vm1065, %v2194, 0
        %v2206 = vsel %vm1065, %v2195, 0
        %v2209 = vsel %vm1065, %v2196, 0
        %v2212 = vsel %vm1065, %v2197, 0
        %v2215 = vsel %vm1065, %v2198, 0
        %v2218 = vsel %vm1065, %v2199, 0
        %v2221 = vsel %vm1065, %v2200, 0
        %v2224 = vsel %vm1065, %v2201, 0
        %v2227 = vsel %vm1090, %v2161, 0
        %2229 = vmatprep.subr.bf16.mxu0 0
        %2230 = vmatpush1.bf16.msra.mxu0 %v2227
        %2231 = vmatprep.subr.bf16.mxu0 0
        %2232 = vmatpush1.bf16.msra.mxu0 0
        %2233 = vmatprep.subr.bf16.mxu0 0
        %2234 = vmatpush1.bf16.msra.mxu0 0
        %2235 = vmatprep.subr.bf16.mxu0 0
        %2236 = vmatpush1.bf16.msra.mxu0 0
        %2237 = vmatprep.subr.bf16.mxu0 0
        %2238 = vmatpush1.bf16.msra.mxu0 0
        %2239 = vmatprep.subr.bf16.mxu0 0
        %2240 = vmatpush1.bf16.msra.mxu0 0
        %2241 = vmatprep.subr.bf16.mxu0 0
        %2242 = vmatpush1.bf16.msra.mxu0 0
        %2243 = vmatprep.subr.bf16.mxu0 0
        %2244 = vmatpush1.bf16.msra.mxu0 0
        %2245 = vmatprep.subr.bf16.mxu0 0
        %2246 = vmatpush1.bf16.msra.mxu0 0
        %2247 = vmatprep.subr.bf16.mxu0 0
        %2248 = vmatpush1.bf16.msra.mxu0 0
        %2249 = vmatprep.subr.bf16.mxu0 0
        %2250 = vmatpush1.bf16.msra.mxu0 0
        %2251 = vmatprep.subr.bf16.mxu0 0
        %2252 = vmatpush1.bf16.msra.mxu0 0
        %2253 = vmatprep.subr.bf16.mxu0 0
        %2254 = vmatpush1.bf16.msra.mxu0 0
        %2255 = vmatprep.subr.bf16.mxu0 0
        %2256 = vmatpush1.bf16.msra.mxu0 0
        %2257 = vmatprep.subr.bf16.mxu0 0
        %2258 = vmatpush1.bf16.msra.mxu0 0
        %2259 = vmatprep.subr.bf16.mxu0 0
        %2260 = vmatpush1.bf16.msra.mxu0 0
        %2261 = vmatprep.mubr.bf16.mxu0 0
        %2262 = vmatmul.mubr.bf16.gmra.mrb[0].mxu0 %v2203
        %v2263 = vpop.f32.mrb[0].mxu0
        %v2264 = vadd.f32 0.0, %v2263
        %v2265 = vpop.f32.mrb[0].mxu0
        %v2266 = vpop.f32.mrb[0].mxu0
        %v2267 = vadd.f32 0.0, %v2266
        %v2268 = vpop.f32.mrb[0].mxu0
        %2269 = vmatprep.mubr.bf16.mxu0 0
        %2270 = vmatmul.mubr.bf16.gmra.mrb[0].mxu0 %v2206
        %v2271 = vpop.f32.mrb[0].mxu0
        %v2272 = vadd.f32 0.0, %v2271
        %v2273 = vpop.f32.mrb[0].mxu0
        %v2274 = vpop.f32.mrb[0].mxu0
        %v2275 = vadd.f32 0.0, %v2274
        %v2276 = vpop.f32.mrb[0].mxu0
        %2277 = vmatprep.mubr.bf16.mxu0 0
        %2278 = vmatmul.mubr.bf16.gmra.mrb[0].mxu0 %v2209
        %v2279 = vpop.f32.mrb[0].mxu0
        %v2280 = vadd.f32 0.0, %v2279
        %v2281 = vpop.f32.mrb[0].mxu0
        %v2282 = vpop.f32.mrb[0].mxu0
        %v2283 = vadd.f32 0.0, %v2282
        %v2284 = vpop.f32.mrb[0].mxu0
        %2285 = vmatprep.mubr.bf16.mxu0 0
        %2286 = vmatmul.mubr.bf16.gmra.mrb[0].mxu0 %v2212
        %v2287 = vpop.f32.mrb[0].mxu0
        %v2288 = vadd.f32 0.0, %v2287
        %v2289 = vpop.f32.mrb[0].mxu0
        %v2290 = vpop.f32.mrb[0].mxu0
        %v2291 = vadd.f32 0.0, %v2290
        %v2292 = vpop.f32.mrb[0].mxu0
        %2293 = vmatprep.mubr.bf16.mxu0 0
        %2294 = vmatmul.mubr.bf16.gmra.mrb[0].mxu0 %v2215
        %v2295 = vpop.f32.mrb[0].mxu0
        %v2296 = vadd.f32 0.0, %v2295
        %v2297 = vpop.f32.mrb[0].mxu0
        %v2298 = vpop.f32.mrb[0].mxu0
        %v2299 = vadd.f32 0.0, %v2298
        %v2300 = vpop.f32.mrb[0].mxu0
        %2301 = vmatprep.mubr.bf16.mxu0 0
        %2302 = vmatmul.mubr.bf16.gmra.mrb[0].mxu0 %v2218
        %v2303 = vpop.f32.mrb[0].mxu0
        %v2304 = vadd.f32 0.0, %v2303
        %v2305 = vpop.f32.mrb[0].mxu0
        %v2306 = vpop.f32.mrb[0].mxu0
        %v2307 = vadd.f32 0.0, %v2306
        %v2308 = vpop.f32.mrb[0].mxu0
        %2309 = vmatprep.mubr.bf16.mxu0 0
        %2310 = vmatmul.mubr.bf16.gmra.mrb[0].mxu0 %v2221
        %v2311 = vpop.f32.mrb[0].mxu0
        %v2312 = vadd.f32 0.0, %v2311
        %v2313 = vpop.f32.mrb[0].mxu0
        %v2314 = vpop.f32.mrb[0].mxu0
        %v2315 = vadd.f32 0.0, %v2314
        %v2316 = vpop.f32.mrb[0].mxu0
        %2317 = vmatprep.mubr.bf16.mxu0 0
        %2318 = vmatmul.mubr.bf16.gmra.mrb[0].mxu0 %v2224
        %v2319 = vpop.f32.mrb[0].mxu0
        %v2320 = vadd.f32 0.0, %v2319
        %v2321 = vpop.f32.mrb[0].mxu0
        %v2322 = vpop.f32.mrb[0].mxu0
        %v2323 = vadd.f32 0.0, %v2322
        %v2324 = vpop.f32.mrb[0].mxu0
        %2325 = vdwg.mxu0
        %v2326 = vadd.f32 %v2112, %v2264
        %v2327 = vadd.f32 %v2113, %v2267
        %v2328 = vadd.f32 %v2114, %v2272
        %v2329 = vadd.f32 %v2115, %v2275
        %v2330 = vadd.f32 %v2116, %v2280
        %v2331 = vadd.f32 %v2117, %v2283
        %v2332 = vadd.f32 %v2118, %v2288
        %v2333 = vadd.f32 %v2119, %v2291
        %v2334 = vadd.f32 %v2120, %v2296
        %v2335 = vadd.f32 %v2121, %v2299
        %v2336 = vadd.f32 %v2122, %v2304
        %v2337 = vadd.f32 %v2123, %v2307
        %v2338 = vadd.f32 %v2124, %v2312
        %v2339 = vadd.f32 %v2125, %v2315
        %v2340 = vadd.f32 %v2126, %v2320
        %v2341 = vadd.f32 %v2127, %v2323
        %v2342 = vld [vmem:[#allocation2 + $0x10] sm:$0xf]
        %v2343 = vld [vmem:[#allocation2 + $0x14] sm:$0xf]
        %v2344 = vld [vmem:[#allocation2 + $0x18] sm:$0xf]
        %v2345 = vld [vmem:[#allocation2 + $0x1c] sm:$0xf]
        %v2346 = vld [vmem:[#allocation2 + $0x20] sm:$0xf]
        %v2347 = vld [vmem:[#allocation2 + $0x24] sm:$0xf]
        %v2348 = vld [vmem:[#allocation2 + $0x28] sm:$0xf]
        %v2349 = vld [vmem:[#allocation2 + $0x2c] sm:$0xf]
        %v2350 = vld [vmem:[#allocation2 + $0x30] sm:$0xf]
        %v2351 = vld [vmem:[#allocation2 + $0x34] sm:$0xf]
        %v2352 = vld [vmem:[#allocation2 + $0x38] sm:$0xf]
        %v2353 = vld [vmem:[#allocation2 + $0x3c] sm:$0xf]
        %v2354 = vld [vmem:[#allocation2 + $0x40] sm:$0xf]
        %v2355 = vld [vmem:[#allocation2 + $0x44] sm:$0xf]
        %v2356 = vld [vmem:[#allocation2 + $0x48] sm:$0xf]
        %v2357 = vld [vmem:[#allocation2 + $0x4c] sm:$0xf]
        %v2358 = vld [vmem:[#allocation2 + $0x50] sm:$0x1]
        %s2359 = scalar_lea.vmem %s3, 14
        %v2360 = vld [vmem:[%s2359] sm:$0x3]
        %v2378 = vunpack.c.l.b16 %v2342
        %v2379 = vunpack.c.l.b16 %v2343
        %v2380 = vunpack.c.l.b16 %v2344
        %v2381 = vunpack.c.l.b16 %v2345
        %v2382 = vunpack.c.l.b16 %v2346
        %v2383 = vunpack.c.l.b16 %v2347
        %v2384 = vunpack.c.l.b16 %v2348
        %v2385 = vunpack.c.l.b16 %v2349
        %v2386 = vunpack.c.l.b16 %v2350
        %v2387 = vunpack.c.l.b16 %v2351
        %v2388 = vunpack.c.l.b16 %v2352
        %v2389 = vunpack.c.l.b16 %v2353
        %v2390 = vunpack.c.l.b16 %v2354
        %v2391 = vunpack.c.l.b16 %v2355
        %v2392 = vunpack.c.l.b16 %v2356
        %v2393 = vunpack.c.l.b16 %v2357
        %v2394 = vunpack.c.l.b16 %v2358
        %v2395 = vpack.c.b16 %v2379, %v2378
        %v2396 = vpack.c.b16 %v2381, %v2380
        %v2397 = vpack.c.b16 %v2383, %v2382
        %v2398 = vpack.c.b16 %v2385, %v2384
        %v2399 = vpack.c.b16 %v2387, %v2386
        %v2400 = vpack.c.b16 %v2389, %v2388
        %v2401 = vpack.c.b16 %v2391, %v2390
        %v2402 = vpack.c.b16 %v2393, %v2392
        %v2403 = vpack.c.b16 %v2394, %v2394
        %v2405 = vshrl.u32 %v2395, 16
        %v2407 = vshll.u32 %v2395, 16
        %v2409 = vrot.slane %v2407, 1
        %v2410 = vor.u32 %v2405, %v2409
        %v2412 = vshll.u32 %v2396, 16
        %v2414 = vrot.slane %v2412, 1
        %v2415 = vsel %vm996, %v2410, %v2414
        %v2416 = vshrl.u32 %v2396, 16
        %v2418 = vor.u32 %v2416, %v2414
        %v2420 = vshll.u32 %v2397, 16
        %v2422 = vrot.slane %v2420, 1
        %v2423 = vsel %vm996, %v2418, %v2422
        %v2424 = vshrl.u32 %v2397, 16
        %v2426 = vor.u32 %v2424, %v2422
        %v2428 = vshll.u32 %v2398, 16
        %v2430 = vrot.slane %v2428, 1
        %v2431 = vsel %vm996, %v2426, %v2430
        %v2432 = vshrl.u32 %v2398, 16
        %v2434 = vor.u32 %v2432, %v2430
        %v2436 = vshll.u32 %v2399, 16
        %v2438 = vrot.slane %v2436, 1
        %v2439 = vsel %vm996, %v2434, %v2438
        %v2440 = vshrl.u32 %v2399, 16
        %v2442 = vor.u32 %v2440, %v2438
        %v2444 = vshll.u32 %v2400, 16
        %v2446 = vrot.slane %v2444, 1
        %v2447 = vsel %vm996, %v2442, %v2446
        %v2448 = vshrl.u32 %v2400, 16
        %v2450 = vor.u32 %v2448, %v2446
        %v2452 = vshll.u32 %v2401, 16
        %v2454 = vrot.slane %v2452, 1
        %v2455 = vsel %vm996, %v2450, %v2454
        %v2456 = vshrl.u32 %v2401, 16
        %v2458 = vor.u32 %v2456, %v2454
        %v2460 = vshll.u32 %v2402, 16
        %v2462 = vrot.slane %v2460, 1
        %v2463 = vsel %vm996, %v2458, %v2462
        %v2464 = vshrl.u32 %v2402, 16
        %v2466 = vor.u32 %v2464, %v2462
        %v2468 = vshll.u32 %v2403, 16
        %v2470 = vrot.slane %v2468, 1
        %v2471 = vsel %vm996, %v2466, %v2470
        %v2473 = vsel %vm1065, %v2415, 0
        %v2476 = vsel %vm1065, %v2423, 0
        %v2479 = vsel %vm1065, %v2431, 0
        %v2482 = vsel %vm1065, %v2439, 0
        %v2485 = vsel %vm1065, %v2447, 0
        %v2488 = vsel %vm1065, %v2455, 0
        %v2491 = vsel %vm1065, %v2463, 0
        %v2494 = vsel %vm1065, %v2471, 0
        %v2497 = vsel %vm1090, %v2360, 0
        %2499 = vmatprep.subr.bf16.mxu0 0
        %2500 = vmatpush1.bf16.msra.mxu0 %v2497
        %2501 = vmatprep.subr.bf16.mxu0 0
        %2502 = vmatpush1.bf16.msra.mxu0 0
        %2503 = vmatprep.subr.bf16.mxu0 0
        %2504 = vmatpush1.bf16.msra.mxu0 0
        %2505 = vmatprep.subr.bf16.mxu0 0
        %2506 = vmatpush1.bf16.msra.mxu0 0
        %2507 = vmatprep.subr.bf16.mxu0 0
        %2508 = vmatpush1.bf16.msra.mxu0 0
        %2509 = vmatprep.subr.bf16.mxu0 0
        %2510 = vmatpush1.bf16.msra.mxu0 0
        %2511 = vmatprep.subr.bf16.mxu0 0
        %2512 = vmatpush1.bf16.msra.mxu0 0
        %2513 = vmatprep.subr.bf16.mxu0 0
        %2514 = vmatpush1.bf16.msra.mxu0 0
        %2515 = vmatprep.subr.bf16.mxu0 0
        %2516 = vmatpush1.bf16.msra.mxu0 0
        %2517 = vmatprep.subr.bf16.mxu0 0
        %2518 = vmatpush1.bf16.msra.mxu0 0
        %2519 = vmatprep.subr.bf16.mxu0 0
        %2520 = vmatpush1.bf16.msra.mxu0 0
        %2521 = vmatprep.subr.bf16.mxu0 0
        %2522 = vmatpush1.bf16.msra.mxu0 0
        %2523 = vmatprep.subr.bf16.mxu0 0
        %2524 = vmatpush1.bf16.msra.mxu0 0
        %2525 = vmatprep.subr.bf16.mxu0 0
        %2526 = vmatpush1.bf16.msra.mxu0 0
        %2527 = vmatprep.subr.bf16.mxu0 0
        %2528 = vmatpush1.bf16.msra.mxu0 0
        %2529 = vmatprep.subr.bf16.mxu0 0
        %2530 = vmatpush1.bf16.msra.mxu0 0
        %2531 = vmatprep.mubr.bf16.mxu0 0
        %2532 = vmatmul.mubr.bf16.gmra.mrb[0].mxu0 %v2473
        %v2533 = vpop.f32.mrb[0].mxu0
        %v2534 = vadd.f32 0.0, %v2533
        %v2535 = vpop.f32.mrb[0].mxu0
        %v2536 = vpop.f32.mrb[0].mxu0
        %v2537 = vadd.f32 0.0, %v2536
        %v2538 = vpop.f32.mrb[0].mxu0
        %2539 = vmatprep.mubr.bf16.mxu0 0
        %2540 = vmatmul.mubr.bf16.gmra.mrb[0].mxu0 %v2476
        %v2541 = vpop.f32.mrb[0].mxu0
        %v2542 = vadd.f32 0.0, %v2541
        %v2543 = vpop.f32.mrb[0].mxu0
        %v2544 = vpop.f32.mrb[0].mxu0
        %v2545 = vadd.f32 0.0, %v2544
        %v2546 = vpop.f32.mrb[0].mxu0
        %2547 = vmatprep.mubr.bf16.mxu0 0
        %2548 = vmatmul.mubr.bf16.gmra.mrb[0].mxu0 %v2479
        %v2549 = vpop.f32.mrb[0].mxu0
        %v2550 = vadd.f32 0.0, %v2549
        %v2551 = vpop.f32.mrb[0].mxu0
        %v2552 = vpop.f32.mrb[0].mxu0
        %v2553 = vadd.f32 0.0, %v2552
        %v2554 = vpop.f32.mrb[0].mxu0
        %2555 = vmatprep.mubr.bf16.mxu0 0
        %2556 = vmatmul.mubr.bf16.gmra.mrb[0].mxu0 %v2482
        %v2557 = vpop.f32.mrb[0].mxu0
        %v2558 = vadd.f32 0.0, %v2557
        %v2559 = vpop.f32.mrb[0].mxu0
        %v2560 = vpop.f32.mrb[0].mxu0
        %v2561 = vadd.f32 0.0, %v2560
        %v2562 = vpop.f32.mrb[0].mxu0
        %2563 = vmatprep.mubr.bf16.mxu0 0
        %2564 = vmatmul.mubr.bf16.gmra.mrb[0].mxu0 %v2485
        %v2565 = vpop.f32.mrb[0].mxu0
        %v2566 = vadd.f32 0.0, %v2565
        %v2567 = vpop.f32.mrb[0].mxu0
        %v2568 = vpop.f32.mrb[0].mxu0
        %v2569 = vadd.f32 0.0, %v2568
        %v2570 = vpop.f32.mrb[0].mxu0
        %2571 = vmatprep.mubr.bf16.mxu0 0
        %2572 = vmatmul.mubr.bf16.gmra.mrb[0].mxu0 %v2488
        %v2573 = vpop.f32.mrb[0].mxu0
        %v2574 = vadd.f32 0.0, %v2573
        %v2575 = vpop.f32.mrb[0].mxu0
        %v2576 = vpop.f32.mrb[0].mxu0
        %v2577 = vadd.f32 0.0, %v2576
        %v2578 = vpop.f32.mrb[0].mxu0
        %2579 = vmatprep.mubr.bf16.mxu0 0
        %2580 = vmatmul.mubr.bf16.gmra.mrb[0].mxu0 %v2491
        %v2581 = vpop.f32.mrb[0].mxu0
        %v2582 = vadd.f32 0.0, %v2581
        %v2583 = vpop.f32.mrb[0].mxu0
        %v2584 = vpop.f32.mrb[0].mxu0
        %v2585 = vadd.f32 0.0, %v2584
        %v2586 = vpop.f32.mrb[0].mxu0
        %2587 = vmatprep.mubr.bf16.mxu0 0
        %2588 = vmatmul.mubr.bf16.gmra.mrb[0].mxu0 %v2494
        %v2589 = vpop.f32.mrb[0].mxu0
        %v2590 = vadd.f32 0.0, %v2589
        %v2591 = vpop.f32.mrb[0].mxu0
        %v2592 = vpop.f32.mrb[0].mxu0
        %v2593 = vadd.f32 0.0, %v2592
        %v2594 = vpop.f32.mrb[0].mxu0
        %2595 = vdwg.mxu0
        %v2596 = vadd.f32 %v2326, %v2534
        %v2597 = vadd.f32 %v2327, %v2537
        %v2598 = vadd.f32 %v2328, %v2542
        %v2599 = vadd.f32 %v2329, %v2545
        %v2600 = vadd.f32 %v2330, %v2550
        %v2601 = vadd.f32 %v2331, %v2553
        %v2602 = vadd.f32 %v2332, %v2558
        %v2603 = vadd.f32 %v2333, %v2561
        %v2604 = vadd.f32 %v2334, %v2566
        %v2605 = vadd.f32 %v2335, %v2569
        %v2606 = vadd.f32 %v2336, %v2574
        %v2607 = vadd.f32 %v2337, %v2577
        %v2608 = vadd.f32 %v2338, %v2582
        %v2609 = vadd.f32 %v2339, %v2585
        %v2610 = vadd.f32 %v2340, %v2590
        %v2611 = vadd.f32 %v2341, %v2593
        %v2612 = vld [vmem:[#allocation2 + $0x10] sm:$0xe]
        %v2613 = vsel %vm1438, %v2612, 0
        %v2614 = vsel %vm1439, %v2343, 0
        %v2615 = vsel %vm1440, %v2344, 0
        %v2616 = vsel %vm1441, %v2345, 0
        %v2617 = vsel %vm1442, %v2346, 0
        %v2618 = vsel %vm1443, %v2347, 0
        %v2619 = vsel %vm1444, %v2348, 0
        %v2620 = vsel %vm1445, %v2349, 0
        %v2621 = vsel %vm1446, %v2350, 0
        %v2622 = vsel %vm1447, %v2351, 0
        %v2623 = vsel %vm1448, %v2352, 0
        %v2624 = vsel %vm1449, %v2353, 0
        %v2625 = vsel %vm1450, %v2354, 0
        %v2626 = vsel %vm1451, %v2355, 0
        %v2627 = vsel %vm1452, %v2356, 0
        %v2628 = vsel %vm1453, %v2357, 0
        %v2629 = vsel %vm1454, %v2358, 0
        %s2630 = scalar_lea.vmem %s3, 16
        %v2631 = vld [vmem:[%s2630] sm:$0x3]
        %v2649 = vunpack.c.l.b16 %v2613
        %v2650 = vunpack.c.l.b16 %v2614
        %v2651 = vunpack.c.l.b16 %v2615
        %v2652 = vunpack.c.l.b16 %v2616
        %v2653 = vunpack.c.l.b16 %v2617
        %v2654 = vunpack.c.l.b16 %v2618
        %v2655 = vunpack.c.l.b16 %v2619
        %v2656 = vunpack.c.l.b16 %v2620
        %v2657 = vunpack.c.l.b16 %v2621
        %v2658 = vunpack.c.l.b16 %v2622
        %v2659 = vunpack.c.l.b16 %v2623
        %v2660 = vunpack.c.l.b16 %v2624
        %v2661 = vunpack.c.l.b16 %v2625
        %v2662 = vunpack.c.l.b16 %v2626
        %v2663 = vunpack.c.l.b16 %v2627
        %v2664 = vunpack.c.l.b16 %v2628
        %v2665 = vunpack.c.l.b16 %v2629
        %v2666 = vpack.c.b16 %v2650, %v2649
        %v2667 = vpack.c.b16 %v2652, %v2651
        %v2668 = vpack.c.b16 %v2654, %v2653
        %v2669 = vpack.c.b16 %v2656, %v2655
        %v2670 = vpack.c.b16 %v2658, %v2657
        %v2671 = vpack.c.b16 %v2660, %v2659
        %v2672 = vpack.c.b16 %v2662, %v2661
        %v2673 = vpack.c.b16 %v2664, %v2663
        %v2674 = vpack.c.b16 %v2665, %v2665
        %v2675 = vrot.slane %v2666, 1
        %v2676 = vrot.slane %v2667, 1
        %v2677 = vsel %vm1517, %v2675, %v2676
        %v2678 = vrot.slane %v2668, 1
        %v2679 = vsel %vm1517, %v2676, %v2678
        %v2680 = vrot.slane %v2669, 1
        %v2681 = vsel %vm1517, %v2678, %v2680
        %v2682 = vrot.slane %v2670, 1
        %v2683 = vsel %vm1517, %v2680, %v2682
        %v2684 = vrot.slane %v2671, 1
        %v2685 = vsel %vm1517, %v2682, %v2684
        %v2686 = vrot.slane %v2672, 1
        %v2687 = vsel %vm1517, %v2684, %v2686
        %v2688 = vrot.slane %v2673, 1
        %v2689 = vsel %vm1517, %v2686, %v2688
        %v2690 = vrot.slane %v2674, 1
        %v2691 = vsel %vm1517, %v2688, %v2690
        %v2693 = vsel %vm1065, %v2677, 0
        %v2696 = vsel %vm1065, %v2679, 0
        %v2699 = vsel %vm1065, %v2681, 0
        %v2702 = vsel %vm1065, %v2683, 0
        %v2705 = vsel %vm1065, %v2685, 0
        %v2708 = vsel %vm1065, %v2687, 0
        %v2711 = vsel %vm1065, %v2689, 0
        %v2714 = vsel %vm1065, %v2691, 0
        %v2717 = vsel %vm1090, %v2631, 0
        %2719 = vmatprep.subr.bf16.mxu0 0
        %2720 = vmatpush1.bf16.msra.mxu0 %v2717
        %2721 = vmatprep.subr.bf16.mxu0 0
        %2722 = vmatpush1.bf16.msra.mxu0 0
        %2723 = vmatprep.subr.bf16.mxu0 0
        %2724 = vmatpush1.bf16.msra.mxu0 0
        %2725 = vmatprep.subr.bf16.mxu0 0
        %2726 = vmatpush1.bf16.msra.mxu0 0
        %2727 = vmatprep.subr.bf16.mxu0 0
        %2728 = vmatpush1.bf16.msra.mxu0 0
        %2729 = vmatprep.subr.bf16.mxu0 0
        %2730 = vmatpush1.bf16.msra.mxu0 0
        %2731 = vmatprep.subr.bf16.mxu0 0
        %2732 = vmatpush1.bf16.msra.mxu0 0
        %2733 = vmatprep.subr.bf16.mxu0 0
        %2734 = vmatpush1.bf16.msra.mxu0 0
        %2735 = vmatprep.subr.bf16.mxu0 0
        %2736 = vmatpush1.bf16.msra.mxu0 0
        %2737 = vmatprep.subr.bf16.mxu0 0
        %2738 = vmatpush1.bf16.msra.mxu0 0
        %2739 = vmatprep.subr.bf16.mxu0 0
        %2740 = vmatpush1.bf16.msra.mxu0 0
        %2741 = vmatprep.subr.bf16.mxu0 0
        %2742 = vmatpush1.bf16.msra.mxu0 0
        %2743 = vmatprep.subr.bf16.mxu0 0
        %2744 = vmatpush1.bf16.msra.mxu0 0
        %2745 = vmatprep.subr.bf16.mxu0 0
        %2746 = vmatpush1.bf16.msra.mxu0 0
        %2747 = vmatprep.subr.bf16.mxu0 0
        %2748 = vmatpush1.bf16.msra.mxu0 0
        %2749 = vmatprep.subr.bf16.mxu0 0
        %2750 = vmatpush1.bf16.msra.mxu0 0
        %2751 = vmatprep.mubr.bf16.mxu0 0
        %2752 = vmatmul.mubr.bf16.gmra.mrb[0].mxu0 %v2693
        %v2753 = vpop.f32.mrb[0].mxu0
        %v2754 = vadd.f32 0.0, %v2753
        %v2755 = vpop.f32.mrb[0].mxu0
        %v2756 = vpop.f32.mrb[0].mxu0
        %v2757 = vadd.f32 0.0, %v2756
        %v2758 = vpop.f32.mrb[0].mxu0
        %2759 = vmatprep.mubr.bf16.mxu0 0
        %2760 = vmatmul.mubr.bf16.gmra.mrb[0].mxu0 %v2696
        %v2761 = vpop.f32.mrb[0].mxu0
        %v2762 = vadd.f32 0.0, %v2761
        %v2763 = vpop.f32.mrb[0].mxu0
        %v2764 = vpop.f32.mrb[0].mxu0
        %v2765 = vadd.f32 0.0, %v2764
        %v2766 = vpop.f32.mrb[0].mxu0
        %2767 = vmatprep.mubr.bf16.mxu0 0
        %2768 = vmatmul.mubr.bf16.gmra.mrb[0].mxu0 %v2699
        %v2769 = vpop.f32.mrb[0].mxu0
        %v2770 = vadd.f32 0.0, %v2769
        %v2771 = vpop.f32.mrb[0].mxu0
        %v2772 = vpop.f32.mrb[0].mxu0
        %v2773 = vadd.f32 0.0, %v2772
        %v2774 = vpop.f32.mrb[0].mxu0
        %2775 = vmatprep.mubr.bf16.mxu0 0
        %2776 = vmatmul.mubr.bf16.gmra.mrb[0].mxu0 %v2702
        %v2777 = vpop.f32.mrb[0].mxu0
        %v2778 = vadd.f32 0.0, %v2777
        %v2779 = vpop.f32.mrb[0].mxu0
        %v2780 = vpop.f32.mrb[0].mxu0
        %v2781 = vadd.f32 0.0, %v2780
        %v2782 = vpop.f32.mrb[0].mxu0
        %2783 = vmatprep.mubr.bf16.mxu0 0
        %2784 = vmatmul.mubr.bf16.gmra.mrb[0].mxu0 %v2705
        %v2785 = vpop.f32.mrb[0].mxu0
        %v2786 = vadd.f32 0.0, %v2785
        %v2787 = vpop.f32.mrb[0].mxu0
        %v2788 = vpop.f32.mrb[0].mxu0
        %v2789 = vadd.f32 0.0, %v2788
        %v2790 = vpop.f32.mrb[0].mxu0
        %2791 = vmatprep.mubr.bf16.mxu0 0
        %2792 = vmatmul.mubr.bf16.gmra.mrb[0].mxu0 %v2708
        %v2793 = vpop.f32.mrb[0].mxu0
        %v2794 = vadd.f32 0.0, %v2793
        %v2795 = vpop.f32.mrb[0].mxu0
        %v2796 = vpop.f32.mrb[0].mxu0
        %v2797 = vadd.f32 0.0, %v2796
        %v2798 = vpop.f32.mrb[0].mxu0
        %2799 = vmatprep.mubr.bf16.mxu0 0
        %2800 = vmatmul.mubr.bf16.gmra.mrb[0].mxu0 %v2711
        %v2801 = vpop.f32.mrb[0].mxu0
        %v2802 = vadd.f32 0.0, %v2801
        %v2803 = vpop.f32.mrb[0].mxu0
        %v2804 = vpop.f32.mrb[0].mxu0
        %v2805 = vadd.f32 0.0, %v2804
        %v2806 = vpop.f32.mrb[0].mxu0
        %2807 = vmatprep.mubr.bf16.mxu0 0
        %2808 = vmatmul.mubr.bf16.gmra.mrb[0].mxu0 %v2714
        %v2809 = vpop.f32.mrb[0].mxu0
        %v2810 = vadd.f32 0.0, %v2809
        %v2811 = vpop.f32.mrb[0].mxu0
        %v2812 = vpop.f32.mrb[0].mxu0
        %v2813 = vadd.f32 0.0, %v2812
        %v2814 = vpop.f32.mrb[0].mxu0
        %2815 = vdwg.mxu0
        %v2816 = vadd.f32 %v2596, %v2754
        %v2817 = vadd.f32 %v2597, %v2757
        %v2818 = vadd.f32 %v2598, %v2762
        %v2819 = vadd.f32 %v2599, %v2765
        %v2820 = vadd.f32 %v2600, %v2770
        %v2821 = vadd.f32 %v2601, %v2773
        %v2822 = vadd.f32 %v2602, %v2778
        %v2823 = vadd.f32 %v2603, %v2781
        %v2824 = vadd.f32 %v2604, %v2786
        %v2825 = vadd.f32 %v2605, %v2789
        %v2826 = vadd.f32 %v2606, %v2794
        %v2827 = vadd.f32 %v2607, %v2797
        %v2828 = vadd.f32 %v2608, %v2802
        %v2829 = vadd.f32 %v2609, %v2805
        %v2830 = vadd.f32 %v2610, %v2810
        %v2831 = vadd.f32 %v2611, %v2813
        %v2832 = vld [vmem:[%s4] sm:$0x1]
        %v2850 = vunpack.c.l.b16 %v1889
        %v2851 = vunpack.c.l.b16 %v1890
        %v2852 = vunpack.c.l.b16 %v1891
        %v2853 = vunpack.c.l.b16 %v1892
        %v2854 = vunpack.c.l.b16 %v1893
        %v2855 = vunpack.c.l.b16 %v1894
        %v2856 = vunpack.c.l.b16 %v1895
        %v2857 = vunpack.c.l.b16 %v1896
        %v2858 = vunpack.c.l.b16 %v1897
        %v2859 = vunpack.c.l.b16 %v1898
        %v2860 = vunpack.c.l.b16 %v1899
        %v2861 = vunpack.c.l.b16 %v1900
        %v2862 = vunpack.c.l.b16 %v1901
        %v2863 = vunpack.c.l.b16 %v1902
        %v2864 = vunpack.c.l.b16 %v1903
        %v2865 = vunpack.c.l.b16 %v1904
        %v2866 = vunpack.c.l.b16 %v1905
        %v2867 = vpack.c.b16 %v2851, %v2850
        %v2868 = vpack.c.b16 %v2853, %v2852
        %v2869 = vpack.c.b16 %v2855, %v2854
        %v2870 = vpack.c.b16 %v2857, %v2856
        %v2871 = vpack.c.b16 %v2859, %v2858
        %v2872 = vpack.c.b16 %v2861, %v2860
        %v2873 = vpack.c.b16 %v2863, %v2862
        %v2874 = vpack.c.b16 %v2865, %v2864
        %v2875 = vpack.c.b16 %v2866, %v2866
        %v2877 = vshrl.u32 %v2867, 16
        %v2879 = vshll.u32 %v2867, 16
        %v2881 = vrot.slane %v2879, 1
        %v2882 = vor.u32 %v2877, %v2881
        %v2884 = vshll.u32 %v2868, 16
        %v2886 = vrot.slane %v2884, 1
        %v2887 = vsel %vm996, %v2882, %v2886
        %v2888 = vshrl.u32 %v2868, 16
        %v2890 = vor.u32 %v2888, %v2886
        %v2892 = vshll.u32 %v2869, 16
        %v2894 = vrot.slane %v2892, 1
        %v2895 = vsel %vm996, %v2890, %v2894
        %v2896 = vshrl.u32 %v2869, 16
        %v2898 = vor.u32 %v2896, %v2894
        %v2900 = vshll.u32 %v2870, 16
        %v2902 = vrot.slane %v2900, 1
        %v2903 = vsel %vm996, %v2898, %v2902
        %v2904 = vshrl.u32 %v2870, 16
        %v2906 = vor.u32 %v2904, %v2902
        %v2908 = vshll.u32 %v2871, 16
        %v2910 = vrot.slane %v2908, 1
        %v2911 = vsel %vm996, %v2906, %v2910
        %v2912 = vshrl.u32 %v2871, 16
        %v2914 = vor.u32 %v2912, %v2910
        %v2916 = vshll.u32 %v2872, 16
        %v2918 = vrot.slane %v2916, 1
        %v2919 = vsel %vm996, %v2914, %v2918
        %v2920 = vshrl.u32 %v2872, 16
        %v2922 = vor.u32 %v2920, %v2918
        %v2924 = vshll.u32 %v2873, 16
        %v2926 = vrot.slane %v2924, 1
        %v2927 = vsel %vm996, %v2922, %v2926
        %v2928 = vshrl.u32 %v2873, 16
        %v2930 = vor.u32 %v2928, %v2926
        %v2932 = vshll.u32 %v2874, 16
        %v2934 = vrot.slane %v2932, 1
        %v2935 = vsel %vm996, %v2930, %v2934
        %v2936 = vshrl.u32 %v2874, 16
        %v2938 = vor.u32 %v2936, %v2934
        %v2940 = vshll.u32 %v2875, 16
        %v2942 = vrot.slane %v2940, 1
        %v2943 = vsel %vm996, %v2938, %v2942
        %v2945 = vsel %vm1065, %v2887, 0
        %v2948 = vsel %vm1065, %v2895, 0
        %v2951 = vsel %vm1065, %v2903, 0
        %v2954 = vsel %vm1065, %v2911, 0
        %v2957 = vsel %vm1065, %v2919, 0
        %v2960 = vsel %vm1065, %v2927, 0
        %v2963 = vsel %vm1065, %v2935, 0
        %v2966 = vsel %vm1065, %v2943, 0
        %v2969 = vsel %vm1090, %v1907, 0
        %2971 = vmatprep.subr.bf16.mxu0 0
        %2972 = vmatpush1.bf16.msra.mxu0 %v2969
        %2973 = vmatprep.subr.bf16.mxu0 0
        %2974 = vmatpush1.bf16.msra.mxu0 0
        %2975 = vmatprep.subr.bf16.mxu0 0
        %2976 = vmatpush1.bf16.msra.mxu0 0
        %2977 = vmatprep.subr.bf16.mxu0 0
        %2978 = vmatpush1.bf16.msra.mxu0 0
        %2979 = vmatprep.subr.bf16.mxu0 0
        %2980 = vmatpush1.bf16.msra.mxu0 0
        %2981 = vmatprep.subr.bf16.mxu0 0
        %2982 = vmatpush1.bf16.msra.mxu0 0
        %2983 = vmatprep.subr.bf16.mxu0 0
        %2984 = vmatpush1.bf16.msra.mxu0 0
        %2985 = vmatprep.subr.bf16.mxu0 0
        %2986 = vmatpush1.bf16.msra.mxu0 0
        %2987 = vmatprep.subr.bf16.mxu0 0
        %2988 = vmatpush1.bf16.msra.mxu0 0
        %2989 = vmatprep.subr.bf16.mxu0 0
        %2990 = vmatpush1.bf16.msra.mxu0 0
        %2991 = vmatprep.subr.bf16.mxu0 0
        %2992 = vmatpush1.bf16.msra.mxu0 0
        %2993 = vmatprep.subr.bf16.mxu0 0
        %2994 = vmatpush1.bf16.msra.mxu0 0
        %2995 = vmatprep.subr.bf16.mxu0 0
        %2996 = vmatpush1.bf16.msra.mxu0 0
        %2997 = vmatprep.subr.bf16.mxu0 0
        %2998 = vmatpush1.bf16.msra.mxu0 0
        %2999 = vmatprep.subr.bf16.mxu0 0
        %3000 = vmatpush1.bf16.msra.mxu0 0
        %3001 = vmatprep.subr.bf16.mxu0 0
        %3002 = vmatpush1.bf16.msra.mxu0 0
        %3003 = vmatprep.mubr.bf16.mxu0 0
        %3004 = vmatmul.mubr.bf16.gmra.mrb[0].mxu0 %v2945
        %v3005 = vpop.f32.mrb[0].mxu0
        %v3006 = vadd.f32 %v2816, %v3005
        %v3007 = vpop.f32.mrb[0].mxu0
        %v3008 = vpop.f32.mrb[0].mxu0
        %v3009 = vadd.f32 %v2817, %v3008
        %v3010 = vpop.f32.mrb[0].mxu0
        %3011 = vmatprep.mubr.bf16.mxu0 0
        %3012 = vmatmul.mubr.bf16.gmra.mrb[0].mxu0 %v2948
        %v3013 = vpop.f32.mrb[0].mxu0
        %v3014 = vadd.f32 %v2818, %v3013
        %v3015 = vpop.f32.mrb[0].mxu0
        %v3016 = vpop.f32.mrb[0].mxu0
        %v3017 = vadd.f32 %v2819, %v3016
        %v3018 = vpop.f32.mrb[0].mxu0
        %3019 = vmatprep.mubr.bf16.mxu0 0
        %3020 = vmatmul.mubr.bf16.gmra.mrb[0].mxu0 %v2951
        %v3021 = vpop.f32.mrb[0].mxu0
        %v3022 = vadd.f32 %v2820, %v3021
        %v3023 = vpop.f32.mrb[0].mxu0
        %v3024 = vpop.f32.mrb[0].mxu0
        %v3025 = vadd.f32 %v2821, %v3024
        %v3026 = vpop.f32.mrb[0].mxu0
        %3027 = vmatprep.mubr.bf16.mxu0 0
        %3028 = vmatmul.mubr.bf16.gmra.mrb[0].mxu0 %v2954
        %v3029 = vpop.f32.mrb[0].mxu0
        %v3030 = vadd.f32 %v2822, %v3029
        %v3031 = vpop.f32.mrb[0].mxu0
        %v3032 = vpop.f32.mrb[0].mxu0
        %v3033 = vadd.f32 %v2823, %v3032
        %v3034 = vpop.f32.mrb[0].mxu0
        %3035 = vmatprep.mubr.bf16.mxu0 0
        %3036 = vmatmul.mubr.bf16.gmra.mrb[0].mxu0 %v2957
        %v3037 = vpop.f32.mrb[0].mxu0
        %v3038 = vadd.f32 %v2824, %v3037
        %v3039 = vpop.f32.mrb[0].mxu0
        %v3040 = vpop.f32.mrb[0].mxu0
        %v3041 = vadd.f32 %v2825, %v3040
        %v3042 = vpop.f32.mrb[0].mxu0
        %3043 = vmatprep.mubr.bf16.mxu0 0
        %3044 = vmatmul.mubr.bf16.gmra.mrb[0].mxu0 %v2960
        %v3045 = vpop.f32.mrb[0].mxu0
        %v3046 = vadd.f32 %v2826, %v3045
        %v3047 = vpop.f32.mrb[0].mxu0
        %v3048 = vpop.f32.mrb[0].mxu0
        %v3049 = vadd.f32 %v2827, %v3048
        %v3050 = vpop.f32.mrb[0].mxu0
        %3051 = vmatprep.mubr.bf16.mxu0 0
        %3052 = vmatmul.mubr.bf16.gmra.mrb[0].mxu0 %v2963
        %v3053 = vpop.f32.mrb[0].mxu0
        %v3054 = vadd.f32 %v2828, %v3053
        %v3055 = vpop.f32.mrb[0].mxu0
        %v3056 = vpop.f32.mrb[0].mxu0
        %v3057 = vadd.f32 %v2829, %v3056
        %v3058 = vpop.f32.mrb[0].mxu0
        %3059 = vmatprep.mubr.bf16.mxu0 0
        %3060 = vmatmul.mubr.bf16.gmra.mrb[0].mxu0 %v2966
        %v3061 = vpop.f32.mrb[0].mxu0
        %v3062 = vadd.f32 %v2830, %v3061
        %v3063 = vpop.f32.mrb[0].mxu0
        %v3064 = vpop.f32.mrb[0].mxu0
        %v3065 = vadd.f32 %v2831, %v3064
        %v3066 = vpop.f32.mrb[0].mxu0
        %3067 = vdwg.mxu0
        %v3069 = vlaneseq
        %v3070 = vshrl.u32 %v3069, 7
        %v3071 = vsub.s32 0, %v3070
        %v3072 = vrot.slane %v2832, %v3071
        %v3074 = vadd.f32 %v3006, %v3072
        %v3075 = vadd.f32 %v3009, %v3072
        %v3076 = vadd.f32 %v3014, %v3072
        %v3077 = vadd.f32 %v3017, %v3072
        %v3078 = vadd.f32 %v3022, %v3072
        %v3079 = vadd.f32 %v3025, %v3072
        %v3080 = vadd.f32 %v3030, %v3072
        %v3081 = vadd.f32 %v3033, %v3072
        %v3082 = vadd.f32 %v3038, %v3072
        %v3083 = vadd.f32 %v3041, %v3072
        %v3084 = vadd.f32 %v3046, %v3072
        %v3085 = vadd.f32 %v3049, %v3072
        %v3086 = vadd.f32 %v3054, %v3072
        %v3087 = vadd.f32 %v3057, %v3072
        %v3088 = vadd.f32 %v3062, %v3072
        %v3089 = vadd.f32 %v3065, %v3072
        %3090 = vst [vmem:[%s292] sm:$0xff] %v3074
        %3091 = vst [vmem:[%s292 + $0x8] sm:$0xff] %v3075
        %3092 = vst [vmem:[%s292 + $0x10] sm:$0xff] %v3076
        %3093 = vst [vmem:[%s292 + $0x18] sm:$0xff] %v3077
        %3094 = vst [vmem:[%s292 + $0x20] sm:$0xff] %v3078
        %3095 = vst [vmem:[%s292 + $0x28] sm:$0xff] %v3079
        %3096 = vst [vmem:[%s292 + $0x30] sm:$0xff] %v3080
        %3097 = vst [vmem:[%s292 + $0x38] sm:$0xff] %v3081
        %3098 = vst [vmem:[%s292 + $0x40] sm:$0xff] %v3082
        %3099 = vst [vmem:[%s292 + $0x48] sm:$0xff] %v3083
        %3100 = vst [vmem:[%s292 + $0x50] sm:$0xff] %v3084
        %3101 = vst [vmem:[%s292 + $0x58] sm:$0xff] %v3085
        %3102 = vst [vmem:[%s292 + $0x60] sm:$0xff] %v3086
        %3103 = vst [vmem:[%s292 + $0x68] sm:$0xff] %v3087
        %3104 = vst [vmem:[%s292 + $0x70] sm:$0xff] %v3088
        %3105 = vst [vmem:[%s292 + $0x78] sm:$0xff] %v3089
        %s3106 = sand.u32 %s167, 1
        %s3107 = scalar_lea.sflag [#allocation4], %s3106
        %s3108 = sand.u32 %s167, 1
        %s3109 = smul.addr %s3108, 128
        %s3110 = scalar_lea.vmem [#allocation3], %s3109
        // Predicated region
        $region41: #{tpu_custom_call.1} parent=39 // pred_check
          %p3111 = pneg %p177
        $region42: #{tpu_custom_call.1} parent=39 // pred_check_branch
          %3113 = sbr.rel (%p3111) target = $region44
        $region43: #{tpu_custom_call.1} parent=39 // pred_region
          %s3114 = smul.u32 16, %s24
          %s3116 = ssub.s32 2048, 2048
          %3117 = vsyncadd %s3107, %s3116
          %s3118 = smul.addr %s23, 32
          %s3119 = sadd.s32 %s3114, %s3118
          %s3120 = smul.addr %s3119, 128
          %s3121 = scalar_lea.hbm %s5, %s3120
          %s3122 = sshll.u32 %s3110, 4
          %s3123 = int_to_ptr.vmem [resolvable:$true] %s3122
          %3128 = dma.vmem_to_hbm [thread:$0]  %s3123, 2048, %s3121, %s3107, 128, 128, 8
        $region44: #{tpu_custom_call.1} parent=39 // pred_fallthru
          _
      $region40: #{tpu_custom_call.1} parent=5 // pred_fallthru
        _
      %p3129 = scmp.le.s32.totalorder 2, %s14
      // Predicated region
      $region45: #{tpu_custom_call.1} parent=5 // pred_check
        %p3130 = pneg %p3129
      $region46: #{tpu_custom_call.1} parent=5 // pred_check_branch
        %3132 = sbr.rel (%p3130) target = $region48
      $region47: #{tpu_custom_call.1} parent=5 // pred_region
        %s3133 = ssub.s32 %s14, 2
        // Predicated region
        $region49: #{tpu_custom_call.1} parent=47 // pred_check
          %p3134 = pneg %p183
        $region50: #{tpu_custom_call.1} parent=47 // pred_check_branch
          %3136 = sbr.rel (%p3134) target = $region52
        $region51: #{tpu_custom_call.1} parent=47 // pred_region
          %s3137 = sand.u32 %s168, 1
          %s3138 = scalar_lea.sflag [#allocation4], %s3137
          %s3139 = sand.u32 %s168, 1
          %s3140 = smul.addr %s3139, 128
          %s3141 = scalar_lea.vmem [#allocation3], %s3140
          %3142 = dma.done %s3138, 2048
        $region52: #{tpu_custom_call.1} parent=47 // pred_fallthru
          _
      $region48: #{tpu_custom_call.1} parent=5 // pred_fallthru
        _
    $region6: #{tpu_custom_call.1} parent=1 // loop_footer
      %s18 = sadd.s32 1, %s14
    $region7: #{tpu_custom_call.1} parent=1 // loop_footer_branch
      %13 = sbr.rel target = $region3
    $region8: #{tpu_custom_call.1} parent=1 // loop_exit
      _
    %3143 = vsyncpa [#allocation4], 1
    %s3144 = scalar_lea.sflag [#allocation4], 1
    %3145 = vsyncpa %s3144, 1

</llo_original>
